<compile_context>
chip_gen: v7x
topology: tpu7x:2x2x1
jax: 0.10.0
libtpu: 0.0.40
codegen_flags: <defaults>
</compile_context>

<pallas_src>
import functools

import jax
import jax.numpy as jnp
from jax.experimental import pallas as pl
from jax.experimental.pallas import tpu as pltpu


def _round_up(x, m):
    return (x + m - 1) // m * m


def _pick_row_chunk(H, W, target_rows=128):
    """Largest divisor of H such that the chunk has <= target_rows spatial rows."""
    best = 1
    for cr in range(1, H + 1):
        if H % cr == 0 and cr * W <= target_rows:
            best = cr
    return best


def _ffm_fused_kernel(x_ref, w9_ref, scale_ref, shift_ref, w2_ref, b2_ref,
                      w3_ref, b3_ref, out_ref, col_scr,
                      *, H, W, Cin, Cout_p, CR):
    """One batch element, fully fused:
       conv3x3(x) -> BN(eval, bias folded) -> ReLU -> global avg pool
       -> 1x1 conv -> 1x1 conv -> sigmoid -> y * (1 + gate).
    x_ref: (1, H+2, W+2, Cin) already zero-padded halo (wrapper).
    """
    f32 = jnp.float32

    # Hoist the dx (column) shifts out of the tap loop: build the 3
    # column-shifted slabs once; the dy shift below is a free leading-dim slice.
    for dx in range(3):
        col_scr[dx] = x_ref[0, :, pl.ds(dx, W), :]

    scale = scale_ref[...]          # (1, Cout_p)
    shift = shift_ref[...]          # (1, Cout_p), conv1 bias already folded in

    pool_sum = jnp.zeros((1, Cout_p), f32)
    num_chunks = H // CR

    for c in range(num_chunks):                       # static unrolled chunks
        r0 = c * CR
        acc = None                                    # accumulate in vregs
        for dy in range(3):
            for dx in range(3):
                win = col_scr[dx, pl.ds(r0 + dy, CR), :, :].reshape(CR * W, Cin)
                t = jnp.dot(win, w9_ref[dy * 3 + dx],
                            preferred_element_type=f32)
                acc = t if acc is None else acc + t
        y = jnp.maximum(acc * scale + shift, 0.0)     # BN(eval) + ReLU, f32
        pool_sum = pool_sum + jnp.sum(y, axis=0, keepdims=True)
        out_ref[0, pl.ds(r0, CR), :, :] = (
            y.reshape(CR, W, Cout_p).astype(out_ref.dtype))

    # Gate path: global average pool -> 1x1 conv -> 1x1 conv -> sigmoid.
    p = pool_sum * (1.0 / (H * W))                    # (1, Cout_p)
    s = jnp.dot(p, w2_ref[...], preferred_element_type=f32) + b2_ref[...]
    s = jnp.dot(s, w3_ref[...], preferred_element_type=f32) + b3_ref[...]
    gate = jax.nn.sigmoid(s)                          # (1, Cout_p)

    # out = conv1_out + gate * conv1_out == y * (1 + gate)
    y_all = out_ref[...].reshape(H * W, Cout_p)
    out_ref[...] = (y_all * (1.0 + gate)).reshape(1, H, W, Cout_p).astype(out_ref.dtype)


def feature_fusion_forward(x_big, x_small, params, eps=1e-5,
                           compute_dtype=jnp.float32):
    """x_big: (N, Cb, H, W); x_small: (N, Cs, H/2, W/2) or (N, Cs, H, W). NCHW in/out."""
    N, Cb, H, W = x_big.shape
    Cs = x_small.shape[1]
    Cin = Cb + Cs

    # Nearest-neighbor 2x upsample of the small branch (wrapper glue).
    if H > x_small.shape[2]:
        x_small = jnp.repeat(jnp.repeat(x_small, 2, axis=2), 2, axis=3)

    # NCHW -> NHWC, channel concat, 3x3 halo zero-pad: all once in the wrapper
    # so the kernel never zero-fills or copies and each tap is one K=Cin matmul.
    xb = jnp.transpose(x_big, (0, 2, 3, 1))
    xs = jnp.transpose(x_small, (0, 2, 3, 1))
    x = jnp.concatenate([xb, xs], axis=-1).astype(compute_dtype)
    x = jnp.pad(x, ((0, 0), (1, 1), (1, 1), (0, 0)))

    w1 = params["conv1_w"]                            # (Cout, Cin, 3, 3)
    Cout = w1.shape[0]
    Cout_p = _round_up(Cout, 128)                     # lane-dense out channels

    # tap (ky, kx) -> (Cin, Cout_p) matrices.
    w9 = jnp.transpose(w1, (2, 3, 1, 0)).reshape(9, Cin, Cout)
    w9 = jnp.pad(w9, ((0, 0), (0, 0), (0, Cout_p - Cout))).astype(compute_dtype)

    def pad_c(v):                                     # (Cout,) -> (1, Cout_p)
        return jnp.pad(v, (0, Cout_p - Cout)).reshape(1, Cout_p)

    def pad_sq(m):                                    # (Cout, Cout) -> (Cout_p, Cout_p)
        return jnp.pad(m, ((0, Cout_p - Cout), (0, Cout_p - Cout)))

    inv_std = 1.0 / jnp.sqrt(params["bn_var"] + eps)
    scale_v = params["bn_gamma"] * inv_std
    shift_v = (params["bn_beta"] - params["bn_mean"] * scale_v
               + params["conv1_b"] * scale_v)         # conv1 bias folded into BN shift
    scale = pad_c(scale_v).astype(jnp.float32)
    shift = pad_c(shift_v).astype(jnp.float32)

    w2 = pad_sq(jnp.transpose(params["conv2_w"][:, :, 0, 0])).astype(compute_dtype)
    b2 = pad_c(params["conv2_b"]).astype(jnp.float32)
    w3 = pad_sq(jnp.transpose(params["conv3_w"][:, :, 0, 0])).astype(compute_dtype)
    b3 = pad_c(params["conv3_b"]).astype(jnp.float32)

    CR = _pick_row_chunk(H, W)                        # sublane-aligned row chunk

    kernel = functools.partial(_ffm_fused_kernel, H=H, W=W, Cin=Cin,
                               Cout_p=Cout_p, CR=CR)

    # Generation-dependent VMEM limit (v5e/v6e: 128 MiB physical, v7x: 64 MiB).
    try:
        cap = pltpu.get_tpu_info().vmem_capacity_bytes
        vmem_limit = min(96 * 1024 * 1024, int(cap) * 3 // 4)
    except Exception:
        vmem_limit = 48 * 1024 * 1024

    out = pl.pallas_call(
        kernel,
        out_shape=jax.ShapeDtypeStruct((N, H, W, Cout_p), jnp.float32),
        grid=(N,),
        in_specs=[
            pl.BlockSpec((1, H + 2, W + 2, Cin), lambda n: (n, 0, 0, 0)),
            pl.BlockSpec((9, Cin, Cout_p), lambda n: (0, 0, 0)),
            pl.BlockSpec((1, Cout_p), lambda n: (0, 0)),
            pl.BlockSpec((1, Cout_p), lambda n: (0, 0)),
            pl.BlockSpec((Cout_p, Cout_p), lambda n: (0, 0)),
            pl.BlockSpec((1, Cout_p), lambda n: (0, 0)),
            pl.BlockSpec((Cout_p, Cout_p), lambda n: (0, 0)),
            pl.BlockSpec((1, Cout_p), lambda n: (0, 0)),
        ],
        out_specs=pl.BlockSpec((1, H, W, Cout_p), lambda n: (n, 0, 0, 0)),
        scratch_shapes=[
            pltpu.VMEM((3, H + 2, W, Cin), compute_dtype),  # column-shifted slabs
        ],
        compiler_params=pltpu.CompilerParams(
            dimension_semantics=("parallel",),
            vmem_limit_bytes=vmem_limit),
    )(x, w9, scale, shift, w2, b2, w3, b3)

    out = out[..., :Cout]                             # drop lane padding
    return jnp.transpose(out, (0, 3, 1, 2))           # back to NCHW


def _reference(x_big, x_small, params, eps=1e-5):
    """Pure-JAX NCHW reference mirroring the PyTorch forward (eval-mode BN)."""
    if x_big.shape[2] > x_small.shape[2]:
        x_small = jnp.repeat(jnp.repeat(x_small, 2, axis=2), 2, axis=3)
    x = jnp.concatenate([x_big, x_small], axis=1)
    y = jax.lax.conv_general_dilated(
        x, params["conv1_w"], (1, 1), ((1, 1), (1, 1)),
        dimension_numbers=("NCHW", "OIHW", "NCHW"))
    y = y + params["conv1_b"][None, :, None, None]
    y = (y - params["bn_mean"][None, :, None, None]) \
        / jnp.sqrt(params["bn_var"][None, :, None, None] + eps)
    y = y * params["bn_gamma"][None, :, None, None] + params["bn_beta"][None, :, None, None]
    conv1_out = jnp.maximum(y, 0.0)
    p = jnp.mean(conv1_out, axis=(2, 3), keepdims=True)
    p = jnp.einsum("oc,nchw->nohw", params["conv2_w"][:, :, 0, 0], p) \
        + params["conv2_b"][None, :, None, None]
    p = jnp.einsum("oc,nchw->nohw", params["conv3_w"][:, :, 0, 0], p) \
        + params["conv3_b"][None, :, None, None]
    gate = jax.nn.sigmoid(p)
    return conv1_out + gate * conv1_out


def init_params(key, bg_channels, sm_channels, num_features):
    cin = bg_channels + sm_channels
    ks = jax.random.split(key, 10)
    return {
        "conv1_w": 0.1 * jax.random.normal(ks[0], (num_features, cin, 3, 3), jnp.float32),
        "conv1_b": 0.1 * jax.random.normal(ks[1], (num_features,), jnp.float32),
        "bn_gamma": 0.5 + jax.random.uniform(ks[2], (num_features,), jnp.float32),
        "bn_beta": 0.1 * jax.random.normal(ks[3], (num_features,), jnp.float32),
        "bn_mean": 0.1 * jax.random.normal(ks[4], (num_features,), jnp.float32),
        "bn_var": 0.5 + jax.random.uniform(ks[5], (num_features,), jnp.float32),
        "conv2_w": 0.1 * jax.random.normal(ks[6], (num_features, num_features, 1, 1), jnp.float32),
        "conv2_b": 0.1 * jax.random.normal(ks[7], (num_features,), jnp.float32),
        "conv3_w": 0.1 * jax.random.normal(ks[8], (num_features, num_features, 1, 1), jnp.float32),
        "conv3_b": 0.1 * jax.random.normal(ks[9], (num_features,), jnp.float32),
    }


if __name__ == "__main__":
    N, bg_channels, sm_channels, num_features = 2, 4, 4, 8
    H = W = 16

    key = jax.random.PRNGKey(0)
    k_big, k_small, k_params = jax.random.split(key, 3)
    x_big = jax.random.normal(k_big, (N, bg_channels, H, W), jnp.float32)
    x_small = jax.random.normal(k_small, (N, sm_channels, H // 2, W // 2), jnp.float32)
    params = init_params(k_params, bg_channels, sm_channels, num_features)

    out = feature_fusion_forward(x_big, x_small, params)
    out = jax.block_until_ready(out)

    ref = jax.block_until_ready(_reference(x_big, x_small, params))
    assert out.shape == (N, num_features, H, W), out.shape
    assert jnp.allclose(out, ref, atol=2e-4, rtol=1e-4), \
        f"max abs err {jnp.max(jnp.abs(out - ref))}"

    print("KERNEL_OK")
</pallas_src>

<mosaic_0001>
module attributes {stable_mosaic.version = 11 : i64} {
  func.func @_ffm_fused_kernel(%arg0: i32, %arg1: memref<1x18x18x8xf32, #tpu.memory_space<vmem>>, %arg2: memref<9x8x128xf32, #tpu.memory_space<vmem>>, %arg3: memref<1x128xf32, #tpu.memory_space<vmem>>, %arg4: memref<1x128xf32, #tpu.memory_space<vmem>>, %arg5: memref<128x128xf32, #tpu.memory_space<vmem>>, %arg6: memref<1x128xf32, #tpu.memory_space<vmem>>, %arg7: memref<128x128xf32, #tpu.memory_space<vmem>>, %arg8: memref<1x128xf32, #tpu.memory_space<vmem>>, %arg9: memref<1x16x16x128xf32, #tpu.memory_space<vmem>>, %arg10: memref<3x18x16x8xf32, #tpu.memory_space<vmem>>) attributes {dimension_semantics = [#tpu.dimension_semantics<parallel>], iteration_bounds = array<i64: 2>, scalar_prefetch = 0 : i64, scratch_operands = 1 : i64, tpu.core_type = #tpu.core_type<tc>, window_params = [{transform_indices = @transform_0, window_bounds = array<i64: 1, 18, 18, 8>}, {pipeline_mode = #tpu.pipeline_mode<synchronous>, transform_indices = @transform_1, window_bounds = array<i64: 9, 8, 128>}, {pipeline_mode = #tpu.pipeline_mode<synchronous>, transform_indices = @transform_2, window_bounds = array<i64: 1, 128>}, {pipeline_mode = #tpu.pipeline_mode<synchronous>, transform_indices = @transform_3, window_bounds = array<i64: 1, 128>}, {pipeline_mode = #tpu.pipeline_mode<synchronous>, transform_indices = @transform_4, window_bounds = array<i64: 128, 128>}, {pipeline_mode = #tpu.pipeline_mode<synchronous>, transform_indices = @transform_5, window_bounds = array<i64: 1, 128>}, {pipeline_mode = #tpu.pipeline_mode<synchronous>, transform_indices = @transform_6, window_bounds = array<i64: 128, 128>}, {pipeline_mode = #tpu.pipeline_mode<synchronous>, transform_indices = @transform_7, window_bounds = array<i64: 1, 128>}, {transform_indices = @transform_8, window_bounds = array<i64: 1, 16, 16, 128>}]} {
    %c0 = arith.constant 0 : index
    %c0_0 = arith.constant 0 : index
    %c0_1 = arith.constant 0 : index
    %c0_2 = arith.constant 0 : index
    %0 = vector.load %arg1[%c0, %c0_0, %c0_1, %c0_2] : memref<1x18x18x8xf32, #tpu.memory_space<vmem>>, vector<1x18x16x8xf32>
    %1 = vector.shape_cast %0 : vector<1x18x16x8xf32> to vector<18x16x8xf32>
    %c0_3 = arith.constant 0 : index
    %c0_4 = arith.constant 0 : index
    %c0_5 = arith.constant 0 : index
    %c0_6 = arith.constant 0 : index
    %2 = vector.load %arg10[%c0_3, %c0_4, %c0_5, %c0_6] : memref<3x18x16x8xf32, #tpu.memory_space<vmem>>, vector<1x18x16x8xf32>
    %3 = vector.shape_cast %2 : vector<1x18x16x8xf32> to vector<18x16x8xf32>
    %4 = vector.shape_cast %1 : vector<18x16x8xf32> to vector<1x18x16x8xf32>
    tpu.vector_store %arg10[%c0_3, %c0_4, %c0_5, %c0_6], %4 {strides = array<i32>} : memref<3x18x16x8xf32, #tpu.memory_space<vmem>>, vector<1x18x16x8xf32>,
    %c0_7 = arith.constant 0 : index
    %c0_8 = arith.constant 0 : index
    %c1 = arith.constant 1 : index
    %c0_9 = arith.constant 0 : index
    %5 = vector.load %arg1[%c0_7, %c0_8, %c1, %c0_9] : memref<1x18x18x8xf32, #tpu.memory_space<vmem>>, vector<1x18x16x8xf32>
    %6 = vector.shape_cast %5 : vector<1x18x16x8xf32> to vector<18x16x8xf32>
    %c1_10 = arith.constant 1 : index
    %c0_11 = arith.constant 0 : index
    %c0_12 = arith.constant 0 : index
    %c0_13 = arith.constant 0 : index
    %7 = vector.load %arg10[%c1_10, %c0_11, %c0_12, %c0_13] : memref<3x18x16x8xf32, #tpu.memory_space<vmem>>, vector<1x18x16x8xf32>
    %8 = vector.shape_cast %7 : vector<1x18x16x8xf32> to vector<18x16x8xf32>
    %9 = vector.shape_cast %6 : vector<18x16x8xf32> to vector<1x18x16x8xf32>
    tpu.vector_store %arg10[%c1_10, %c0_11, %c0_12, %c0_13], %9 {strides = array<i32>} : memref<3x18x16x8xf32, #tpu.memory_space<vmem>>, vector<1x18x16x8xf32>,
    %c0_14 = arith.constant 0 : index
    %c0_15 = arith.constant 0 : index
    %c2 = arith.constant 2 : index
    %c0_16 = arith.constant 0 : index
    %10 = vector.load %arg1[%c0_14, %c0_15, %c2, %c0_16] : memref<1x18x18x8xf32, #tpu.memory_space<vmem>>, vector<1x18x16x8xf32>
    %11 = vector.shape_cast %10 : vector<1x18x16x8xf32> to vector<18x16x8xf32>
    %c2_17 = arith.constant 2 : index
    %c0_18 = arith.constant 0 : index
    %c0_19 = arith.constant 0 : index
    %c0_20 = arith.constant 0 : index
    %12 = vector.load %arg10[%c2_17, %c0_18, %c0_19, %c0_20] : memref<3x18x16x8xf32, #tpu.memory_space<vmem>>, vector<1x18x16x8xf32>
    %13 = vector.shape_cast %12 : vector<1x18x16x8xf32> to vector<18x16x8xf32>
    %14 = vector.shape_cast %11 : vector<18x16x8xf32> to vector<1x18x16x8xf32>
    tpu.vector_store %arg10[%c2_17, %c0_18, %c0_19, %c0_20], %14 {strides = array<i32>} : memref<3x18x16x8xf32, #tpu.memory_space<vmem>>, vector<1x18x16x8xf32>,
    %c0_21 = arith.constant 0 : index
    %c0_22 = arith.constant 0 : index
    %15 = vector.load %arg3[%c0_21, %c0_22] : memref<1x128xf32, #tpu.memory_space<vmem>>, vector<1x128xf32>
    %c0_23 = arith.constant 0 : index
    %c0_24 = arith.constant 0 : index
    %16 = vector.load %arg4[%c0_23, %c0_24] : memref<1x128xf32, #tpu.memory_space<vmem>>, vector<1x128xf32>
    %cst = arith.constant 0.000000e+00 : f32
    %17 = vector.broadcast %cst : f32 to vector<1x128xf32>
    %c0_25 = arith.constant 0 : index
    %c0_26 = arith.constant 0 : index
    %c0_27 = arith.constant 0 : index
    %c0_28 = arith.constant 0 : index
    %18 = vector.load %arg10[%c0_25, %c0_26, %c0_27, %c0_28] : memref<3x18x16x8xf32, #tpu.memory_space<vmem>>, vector<1x8x16x8xf32>
    %19 = vector.shape_cast %18 : vector<1x8x16x8xf32> to vector<8x16x8xf32>
    %20 = vector.shape_cast %19 : vector<8x16x8xf32> to vector<128x8xf32>
    %c0_29 = arith.constant 0 : index
    %c0_30 = arith.constant 0 : index
    %c0_31 = arith.constant 0 : index
    %21 = vector.load %arg2[%c0_29, %c0_30, %c0_31] : memref<9x8x128xf32, #tpu.memory_space<vmem>>, vector<1x8x128xf32>
    %22 = vector.shape_cast %21 : vector<1x8x128xf32> to vector<8x128xf32>
    %cst_32 = arith.constant dense<0.000000e+00> : vector<128x128xf32>
    %23 = tpu.matmul %20, %22, %cst_32 {dimension_numbers = #tpu.dot_dimension_numbers<[1], [0], [0], [1], [0, 0, 1, 1], [], []>} : vector<128x8xf32>, vector<8x128xf32>, vector<128x128xf32> -> vector<128x128xf32>
    %c1_33 = arith.constant 1 : index
    %c0_34 = arith.constant 0 : index
    %c0_35 = arith.constant 0 : index
    %c0_36 = arith.constant 0 : index
    %24 = vector.load %arg10[%c1_33, %c0_34, %c0_35, %c0_36] : memref<3x18x16x8xf32, #tpu.memory_space<vmem>>, vector<1x8x16x8xf32>
    %25 = vector.shape_cast %24 : vector<1x8x16x8xf32> to vector<8x16x8xf32>
    %26 = vector.shape_cast %25 : vector<8x16x8xf32> to vector<128x8xf32>
    %c1_37 = arith.constant 1 : index
    %c0_38 = arith.constant 0 : index
    %c0_39 = arith.constant 0 : index
    %27 = vector.load %arg2[%c1_37, %c0_38, %c0_39] : memref<9x8x128xf32, #tpu.memory_space<vmem>>, vector<1x8x128xf32>
    %28 = vector.shape_cast %27 : vector<1x8x128xf32> to vector<8x128xf32>
    %cst_40 = arith.constant dense<0.000000e+00> : vector<128x128xf32>
    %29 = tpu.matmul %26, %28, %cst_40 {dimension_numbers = #tpu.dot_dimension_numbers<[1], [0], [0], [1], [0, 0, 1, 1], [], []>} : vector<128x8xf32>, vector<8x128xf32>, vector<128x128xf32> -> vector<128x128xf32>
    %30 = arith.addf %23, %29 : vector<128x128xf32>
    %c2_41 = arith.constant 2 : index
    %c0_42 = arith.constant 0 : index
    %c0_43 = arith.constant 0 : index
    %c0_44 = arith.constant 0 : index
    %31 = vector.load %arg10[%c2_41, %c0_42, %c0_43, %c0_44] : memref<3x18x16x8xf32, #tpu.memory_space<vmem>>, vector<1x8x16x8xf32>
    %32 = vector.shape_cast %31 : vector<1x8x16x8xf32> to vector<8x16x8xf32>
    %33 = vector.shape_cast %32 : vector<8x16x8xf32> to vector<128x8xf32>
    %c2_45 = arith.constant 2 : index
    %c0_46 = arith.constant 0 : index
    %c0_47 = arith.constant 0 : index
    %34 = vector.load %arg2[%c2_45, %c0_46, %c0_47] : memref<9x8x128xf32, #tpu.memory_space<vmem>>, vector<1x8x128xf32>
    %35 = vector.shape_cast %34 : vector<1x8x128xf32> to vector<8x128xf32>
    %cst_48 = arith.constant dense<0.000000e+00> : vector<128x128xf32>
    %36 = tpu.matmul %33, %35, %cst_48 {dimension_numbers = #tpu.dot_dimension_numbers<[1], [0], [0], [1], [0, 0, 1, 1], [], []>} : vector<128x8xf32>, vector<8x128xf32>, vector<128x128xf32> -> vector<128x128xf32>
    %37 = arith.addf %30, %36 : vector<128x128xf32>
    %c0_49 = arith.constant 0 : index
    %c1_50 = arith.constant 1 : index
    %c0_51 = arith.constant 0 : index
    %c0_52 = arith.constant 0 : index
    %38 = vector.load %arg10[%c0_49, %c1_50, %c0_51, %c0_52] : memref<3x18x16x8xf32, #tpu.memory_space<vmem>>, vector<1x8x16x8xf32>
    %39 = vector.shape_cast %38 : vector<1x8x16x8xf32> to vector<8x16x8xf32>
    %40 = vector.shape_cast %39 : vector<8x16x8xf32> to vector<128x8xf32>
    %c3 = arith.constant 3 : index
    %c0_53 = arith.constant 0 : index
    %c0_54 = arith.constant 0 : index
    %41 = vector.load %arg2[%c3, %c0_53, %c0_54] : memref<9x8x128xf32, #tpu.memory_space<vmem>>, vector<1x8x128xf32>
    %42 = vector.shape_cast %41 : vector<1x8x128xf32> to vector<8x128xf32>
    %cst_55 = arith.constant dense<0.000000e+00> : vector<128x128xf32>
    %43 = tpu.matmul %40, %42, %cst_55 {dimension_numbers = #tpu.dot_dimension_numbers<[1], [0], [0], [1], [0, 0, 1, 1], [], []>} : vector<128x8xf32>, vector<8x128xf32>, vector<128x128xf32> -> vector<128x128xf32>
    %44 = arith.addf %37, %43 : vector<128x128xf32>
    %c1_56 = arith.constant 1 : index
    %c1_57 = arith.constant 1 : index
    %c0_58 = arith.constant 0 : index
    %c0_59 = arith.constant 0 : index
    %45 = vector.load %arg10[%c1_56, %c1_57, %c0_58, %c0_59] : memref<3x18x16x8xf32, #tpu.memory_space<vmem>>, vector<1x8x16x8xf32>
    %46 = vector.shape_cast %45 : vector<1x8x16x8xf32> to vector<8x16x8xf32>
    %47 = vector.shape_cast %46 : vector<8x16x8xf32> to vector<128x8xf32>
    %c4 = arith.constant 4 : index
    %c0_60 = arith.constant 0 : index
    %c0_61 = arith.constant 0 : index
    %48 = vector.load %arg2[%c4, %c0_60, %c0_61] : memref<9x8x128xf32, #tpu.memory_space<vmem>>, vector<1x8x128xf32>
    %49 = vector.shape_cast %48 : vector<1x8x128xf32> to vector<8x128xf32>
    %cst_62 = arith.constant dense<0.000000e+00> : vector<128x128xf32>
    %50 = tpu.matmul %47, %49, %cst_62 {dimension_numbers = #tpu.dot_dimension_numbers<[1], [0], [0], [1], [0, 0, 1, 1], [], []>} : vector<128x8xf32>, vector<8x128xf32>, vector<128x128xf32> -> vector<128x128xf32>
    %51 = arith.addf %44, %50 : vector<128x128xf32>
    %c2_63 = arith.constant 2 : index
    %c1_64 = arith.constant 1 : index
    %c0_65 = arith.constant 0 : index
    %c0_66 = arith.constant 0 : index
    %52 = vector.load %arg10[%c2_63, %c1_64, %c0_65, %c0_66] : memref<3x18x16x8xf32, #tpu.memory_space<vmem>>, vector<1x8x16x8xf32>
    %53 = vector.shape_cast %52 : vector<1x8x16x8xf32> to vector<8x16x8xf32>
    %54 = vector.shape_cast %53 : vector<8x16x8xf32> to vector<128x8xf32>
    %c5 = arith.constant 5 : index
    %c0_67 = arith.constant 0 : index
    %c0_68 = arith.constant 0 : index
    %55 = vector.load %arg2[%c5, %c0_67, %c0_68] : memref<9x8x128xf32, #tpu.memory_space<vmem>>, vector<1x8x128xf32>
    %56 = vector.shape_cast %55 : vector<1x8x128xf32> to vector<8x128xf32>
    %cst_69 = arith.constant dense<0.000000e+00> : vector<128x128xf32>
    %57 = tpu.matmul %54, %56, %cst_69 {dimension_numbers = #tpu.dot_dimension_numbers<[1], [0], [0], [1], [0, 0, 1, 1], [], []>} : vector<128x8xf32>, vector<8x128xf32>, vector<128x128xf32> -> vector<128x128xf32>
    %58 = arith.addf %51, %57 : vector<128x128xf32>
    %c0_70 = arith.constant 0 : index
    %c2_71 = arith.constant 2 : index
    %c0_72 = arith.constant 0 : index
    %c0_73 = arith.constant 0 : index
    %59 = vector.load %arg10[%c0_70, %c2_71, %c0_72, %c0_73] : memref<3x18x16x8xf32, #tpu.memory_space<vmem>>, vector<1x8x16x8xf32>
    %60 = vector.shape_cast %59 : vector<1x8x16x8xf32> to vector<8x16x8xf32>
    %61 = vector.shape_cast %60 : vector<8x16x8xf32> to vector<128x8xf32>
    %c6 = arith.constant 6 : index
    %c0_74 = arith.constant 0 : index
    %c0_75 = arith.constant 0 : index
    %62 = vector.load %arg2[%c6, %c0_74, %c0_75] : memref<9x8x128xf32, #tpu.memory_space<vmem>>, vector<1x8x128xf32>
    %63 = vector.shape_cast %62 : vector<1x8x128xf32> to vector<8x128xf32>
    %cst_76 = arith.constant dense<0.000000e+00> : vector<128x128xf32>
    %64 = tpu.matmul %61, %63, %cst_76 {dimension_numbers = #tpu.dot_dimension_numbers<[1], [0], [0], [1], [0, 0, 1, 1], [], []>} : vector<128x8xf32>, vector<8x128xf32>, vector<128x128xf32> -> vector<128x128xf32>
    %65 = arith.addf %58, %64 : vector<128x128xf32>
    %c1_77 = arith.constant 1 : index
    %c2_78 = arith.constant 2 : index
    %c0_79 = arith.constant 0 : index
    %c0_80 = arith.constant 0 : index
    %66 = vector.load %arg10[%c1_77, %c2_78, %c0_79, %c0_80] : memref<3x18x16x8xf32, #tpu.memory_space<vmem>>, vector<1x8x16x8xf32>
    %67 = vector.shape_cast %66 : vector<1x8x16x8xf32> to vector<8x16x8xf32>
    %68 = vector.shape_cast %67 : vector<8x16x8xf32> to vector<128x8xf32>
    %c7 = arith.constant 7 : index
    %c0_81 = arith.constant 0 : index
    %c0_82 = arith.constant 0 : index
    %69 = vector.load %arg2[%c7, %c0_81, %c0_82] : memref<9x8x128xf32, #tpu.memory_space<vmem>>, vector<1x8x128xf32>
    %70 = vector.shape_cast %69 : vector<1x8x128xf32> to vector<8x128xf32>
    %cst_83 = arith.constant dense<0.000000e+00> : vector<128x128xf32>
    %71 = tpu.matmul %68, %70, %cst_83 {dimension_numbers = #tpu.dot_dimension_numbers<[1], [0], [0], [1], [0, 0, 1, 1], [], []>} : vector<128x8xf32>, vector<8x128xf32>, vector<128x128xf32> -> vector<128x128xf32>
    %72 = arith.addf %65, %71 : vector<128x128xf32>
    %c2_84 = arith.constant 2 : index
    %c2_85 = arith.constant 2 : index
    %c0_86 = arith.constant 0 : index
    %c0_87 = arith.constant 0 : index
    %73 = vector.load %arg10[%c2_84, %c2_85, %c0_86, %c0_87] : memref<3x18x16x8xf32, #tpu.memory_space<vmem>>, vector<1x8x16x8xf32>
    %74 = vector.shape_cast %73 : vector<1x8x16x8xf32> to vector<8x16x8xf32>
    %75 = vector.shape_cast %74 : vector<8x16x8xf32> to vector<128x8xf32>
    %c8 = arith.constant 8 : index
    %c0_88 = arith.constant 0 : index
    %c0_89 = arith.constant 0 : index
    %76 = vector.load %arg2[%c8, %c0_88, %c0_89] : memref<9x8x128xf32, #tpu.memory_space<vmem>>, vector<1x8x128xf32>
    %77 = vector.shape_cast %76 : vector<1x8x128xf32> to vector<8x128xf32>
    %cst_90 = arith.constant dense<0.000000e+00> : vector<128x128xf32>
    %78 = tpu.matmul %75, %77, %cst_90 {dimension_numbers = #tpu.dot_dimension_numbers<[1], [0], [0], [1], [0, 0, 1, 1], [], []>} : vector<128x8xf32>, vector<8x128xf32>, vector<128x128xf32> -> vector<128x128xf32>
    %79 = arith.addf %72, %78 : vector<128x128xf32>
    %80 = vector.broadcast %15 : vector<1x128xf32> to vector<128x128xf32>
    %81 = arith.mulf %79, %80 : vector<128x128xf32>
    %82 = vector.broadcast %16 : vector<1x128xf32> to vector<128x128xf32>
    %83 = arith.addf %81, %82 : vector<128x128xf32>
    %cst_91 = arith.constant 0.000000e+00 : f32
    %84 = vector.broadcast %cst_91 : f32 to vector<128x128xf32>
    %85 = arith.maximumf %83, %84 : vector<128x128xf32>
    %cst_92 = arith.constant dense<0.000000e+00> : vector<128xf32>
    %86 = vector.multi_reduction <add>, %85, %cst_92 [0] : vector<128x128xf32> to vector<128xf32>
    %87 = vector.shape_cast %86 : vector<128xf32> to vector<1x128xf32>
    %88 = arith.addf %17, %87 : vector<1x128xf32>
    %89 = vector.shape_cast %85 : vector<128x128xf32> to vector<8x16x128xf32>
    %c0_93 = arith.constant 0 : index
    %c0_94 = arith.constant 0 : index
    %c0_95 = arith.constant 0 : index
    %c0_96 = arith.constant 0 : index
    %90 = vector.load %arg9[%c0_93, %c0_94, %c0_95, %c0_96] : memref<1x16x16x128xf32, #tpu.memory_space<vmem>>, vector<1x8x16x128xf32>
    %91 = vector.shape_cast %90 : vector<1x8x16x128xf32> to vector<8x16x128xf32>
    %92 = vector.shape_cast %89 : vector<8x16x128xf32> to vector<1x8x16x128xf32>
    tpu.vector_store %arg9[%c0_93, %c0_94, %c0_95, %c0_96], %92 {strides = array<i32>} : memref<1x16x16x128xf32, #tpu.memory_space<vmem>>, vector<1x8x16x128xf32>,
    %c0_97 = arith.constant 0 : index
    %c8_98 = arith.constant 8 : index
    %c0_99 = arith.constant 0 : index
    %c0_100 = arith.constant 0 : index
    %93 = vector.load %arg10[%c0_97, %c8_98, %c0_99, %c0_100] : memref<3x18x16x8xf32, #tpu.memory_space<vmem>>, vector<1x8x16x8xf32>
    %94 = vector.shape_cast %93 : vector<1x8x16x8xf32> to vector<8x16x8xf32>
    %95 = vector.shape_cast %94 : vector<8x16x8xf32> to vector<128x8xf32>
    %c0_101 = arith.constant 0 : index
    %c0_102 = arith.constant 0 : index
    %c0_103 = arith.constant 0 : index
    %96 = vector.load %arg2[%c0_101, %c0_102, %c0_103] : memref<9x8x128xf32, #tpu.memory_space<vmem>>, vector<1x8x128xf32>
    %97 = vector.shape_cast %96 : vector<1x8x128xf32> to vector<8x128xf32>
    %cst_104 = arith.constant dense<0.000000e+00> : vector<128x128xf32>
    %98 = tpu.matmul %95, %97, %cst_104 {dimension_numbers = #tpu.dot_dimension_numbers<[1], [0], [0], [1], [0, 0, 1, 1], [], []>} : vector<128x8xf32>, vector<8x128xf32>, vector<128x128xf32> -> vector<128x128xf32>
    %c1_105 = arith.constant 1 : index
    %c8_106 = arith.constant 8 : index
    %c0_107 = arith.constant 0 : index
    %c0_108 = arith.constant 0 : index
    %99 = vector.load %arg10[%c1_105, %c8_106, %c0_107, %c0_108] : memref<3x18x16x8xf32, #tpu.memory_space<vmem>>, vector<1x8x16x8xf32>
    %100 = vector.shape_cast %99 : vector<1x8x16x8xf32> to vector<8x16x8xf32>
    %101 = vector.shape_cast %100 : vector<8x16x8xf32> to vector<128x8xf32>
    %c1_109 = arith.constant 1 : index
    %c0_110 = arith.constant 0 : index
    %c0_111 = arith.constant 0 : index
    %102 = vector.load %arg2[%c1_109, %c0_110, %c0_111] : memref<9x8x128xf32, #tpu.memory_space<vmem>>, vector<1x8x128xf32>
    %103 = vector.shape_cast %102 : vector<1x8x128xf32> to vector<8x128xf32>
    %cst_112 = arith.constant dense<0.000000e+00> : vector<128x128xf32>
    %104 = tpu.matmul %101, %103, %cst_112 {dimension_numbers = #tpu.dot_dimension_numbers<[1], [0], [0], [1], [0, 0, 1, 1], [], []>} : vector<128x8xf32>, vector<8x128xf32>, vector<128x128xf32> -> vector<128x128xf32>
    %105 = arith.addf %98, %104 : vector<128x128xf32>
    %c2_113 = arith.constant 2 : index
    %c8_114 = arith.constant 8 : index
    %c0_115 = arith.constant 0 : index
    %c0_116 = arith.constant 0 : index
    %106 = vector.load %arg10[%c2_113, %c8_114, %c0_115, %c0_116] : memref<3x18x16x8xf32, #tpu.memory_space<vmem>>, vector<1x8x16x8xf32>
    %107 = vector.shape_cast %106 : vector<1x8x16x8xf32> to vector<8x16x8xf32>
    %108 = vector.shape_cast %107 : vector<8x16x8xf32> to vector<128x8xf32>
    %c2_117 = arith.constant 2 : index
    %c0_118 = arith.constant 0 : index
    %c0_119 = arith.constant 0 : index
    %109 = vector.load %arg2[%c2_117, %c0_118, %c0_119] : memref<9x8x128xf32, #tpu.memory_space<vmem>>, vector<1x8x128xf32>
    %110 = vector.shape_cast %109 : vector<1x8x128xf32> to vector<8x128xf32>
    %cst_120 = arith.constant dense<0.000000e+00> : vector<128x128xf32>
    %111 = tpu.matmul %108, %110, %cst_120 {dimension_numbers = #tpu.dot_dimension_numbers<[1], [0], [0], [1], [0, 0, 1, 1], [], []>} : vector<128x8xf32>, vector<8x128xf32>, vector<128x128xf32> -> vector<128x128xf32>
    %112 = arith.addf %105, %111 : vector<128x128xf32>
    %c0_121 = arith.constant 0 : index
    %c9 = arith.constant 9 : index
    %c0_122 = arith.constant 0 : index
    %c0_123 = arith.constant 0 : index
    %113 = vector.load %arg10[%c0_121, %c9, %c0_122, %c0_123] : memref<3x18x16x8xf32, #tpu.memory_space<vmem>>, vector<1x8x16x8xf32>
    %114 = vector.shape_cast %113 : vector<1x8x16x8xf32> to vector<8x16x8xf32>
    %115 = vector.shape_cast %114 : vector<8x16x8xf32> to vector<128x8xf32>
    %c3_124 = arith.constant 3 : index
    %c0_125 = arith.constant 0 : index
    %c0_126 = arith.constant 0 : index
    %116 = vector.load %arg2[%c3_124, %c0_125, %c0_126] : memref<9x8x128xf32, #tpu.memory_space<vmem>>, vector<1x8x128xf32>
    %117 = vector.shape_cast %116 : vector<1x8x128xf32> to vector<8x128xf32>
    %cst_127 = arith.constant dense<0.000000e+00> : vector<128x128xf32>
    %118 = tpu.matmul %115, %117, %cst_127 {dimension_numbers = #tpu.dot_dimension_numbers<[1], [0], [0], [1], [0, 0, 1, 1], [], []>} : vector<128x8xf32>, vector<8x128xf32>, vector<128x128xf32> -> vector<128x128xf32>
    %119 = arith.addf %112, %118 : vector<128x128xf32>
    %c1_128 = arith.constant 1 : index
    %c9_129 = arith.constant 9 : index
    %c0_130 = arith.constant 0 : index
    %c0_131 = arith.constant 0 : index
    %120 = vector.load %arg10[%c1_128, %c9_129, %c0_130, %c0_131] : memref<3x18x16x8xf32, #tpu.memory_space<vmem>>, vector<1x8x16x8xf32>
    %121 = vector.shape_cast %120 : vector<1x8x16x8xf32> to vector<8x16x8xf32>
    %122 = vector.shape_cast %121 : vector<8x16x8xf32> to vector<128x8xf32>
    %c4_132 = arith.constant 4 : index
    %c0_133 = arith.constant 0 : index
    %c0_134 = arith.constant 0 : index
    %123 = vector.load %arg2[%c4_132, %c0_133, %c0_134] : memref<9x8x128xf32, #tpu.memory_space<vmem>>, vector<1x8x128xf32>
    %124 = vector.shape_cast %123 : vector<1x8x128xf32> to vector<8x128xf32>
    %cst_135 = arith.constant dense<0.000000e+00> : vector<128x128xf32>
    %125 = tpu.matmul %122, %124, %cst_135 {dimension_numbers = #tpu.dot_dimension_numbers<[1], [0], [0], [1], [0, 0, 1, 1], [], []>} : vector<128x8xf32>, vector<8x128xf32>, vector<128x128xf32> -> vector<128x128xf32>
    %126 = arith.addf %119, %125 : vector<128x128xf32>
    %c2_136 = arith.constant 2 : index
    %c9_137 = arith.constant 9 : index
    %c0_138 = arith.constant 0 : index
    %c0_139 = arith.constant 0 : index
    %127 = vector.load %arg10[%c2_136, %c9_137, %c0_138, %c0_139] : memref<3x18x16x8xf32, #tpu.memory_space<vmem>>, vector<1x8x16x8xf32>
    %128 = vector.shape_cast %127 : vector<1x8x16x8xf32> to vector<8x16x8xf32>
    %129 = vector.shape_cast %128 : vector<8x16x8xf32> to vector<128x8xf32>
    %c5_140 = arith.constant 5 : index
    %c0_141 = arith.constant 0 : index
    %c0_142 = arith.constant 0 : index
    %130 = vector.load %arg2[%c5_140, %c0_141, %c0_142] : memref<9x8x128xf32, #tpu.memory_space<vmem>>, vector<1x8x128xf32>
    %131 = vector.shape_cast %130 : vector<1x8x128xf32> to vector<8x128xf32>
    %cst_143 = arith.constant dense<0.000000e+00> : vector<128x128xf32>
    %132 = tpu.matmul %129, %131, %cst_143 {dimension_numbers = #tpu.dot_dimension_numbers<[1], [0], [0], [1], [0, 0, 1, 1], [], []>} : vector<128x8xf32>, vector<8x128xf32>, vector<128x128xf32> -> vector<128x128xf32>
    %133 = arith.addf %126, %132 : vector<128x128xf32>
    %c0_144 = arith.constant 0 : index
    %c10 = arith.constant 10 : index
    %c0_145 = arith.constant 0 : index
    %c0_146 = arith.constant 0 : index
    %134 = vector.load %arg10[%c0_144, %c10, %c0_145, %c0_146] : memref<3x18x16x8xf32, #tpu.memory_space<vmem>>, vector<1x8x16x8xf32>
    %135 = vector.shape_cast %134 : vector<1x8x16x8xf32> to vector<8x16x8xf32>
    %136 = vector.shape_cast %135 : vector<8x16x8xf32> to vector<128x8xf32>
    %c6_147 = arith.constant 6 : index
    %c0_148 = arith.constant 0 : index
    %c0_149 = arith.constant 0 : index
    %137 = vector.load %arg2[%c6_147, %c0_148, %c0_149] : memref<9x8x128xf32, #tpu.memory_space<vmem>>, vector<1x8x128xf32>
    %138 = vector.shape_cast %137 : vector<1x8x128xf32> to vector<8x128xf32>
    %cst_150 = arith.constant dense<0.000000e+00> : vector<128x128xf32>
    %139 = tpu.matmul %136, %138, %cst_150 {dimension_numbers = #tpu.dot_dimension_numbers<[1], [0], [0], [1], [0, 0, 1, 1], [], []>} : vector<128x8xf32>, vector<8x128xf32>, vector<128x128xf32> -> vector<128x128xf32>
    %140 = arith.addf %133, %139 : vector<128x128xf32>
    %c1_151 = arith.constant 1 : index
    %c10_152 = arith.constant 10 : index
    %c0_153 = arith.constant 0 : index
    %c0_154 = arith.constant 0 : index
    %141 = vector.load %arg10[%c1_151, %c10_152, %c0_153, %c0_154] : memref<3x18x16x8xf32, #tpu.memory_space<vmem>>, vector<1x8x16x8xf32>
    %142 = vector.shape_cast %141 : vector<1x8x16x8xf32> to vector<8x16x8xf32>
    %143 = vector.shape_cast %142 : vector<8x16x8xf32> to vector<128x8xf32>
    %c7_155 = arith.constant 7 : index
    %c0_156 = arith.constant 0 : index
    %c0_157 = arith.constant 0 : index
    %144 = vector.load %arg2[%c7_155, %c0_156, %c0_157] : memref<9x8x128xf32, #tpu.memory_space<vmem>>, vector<1x8x128xf32>
    %145 = vector.shape_cast %144 : vector<1x8x128xf32> to vector<8x128xf32>
    %cst_158 = arith.constant dense<0.000000e+00> : vector<128x128xf32>
    %146 = tpu.matmul %143, %145, %cst_158 {dimension_numbers = #tpu.dot_dimension_numbers<[1], [0], [0], [1], [0, 0, 1, 1], [], []>} : vector<128x8xf32>, vector<8x128xf32>, vector<128x128xf32> -> vector<128x128xf32>
    %147 = arith.addf %140, %146 : vector<128x128xf32>
    %c2_159 = arith.constant 2 : index
    %c10_160 = arith.constant 10 : index
    %c0_161 = arith.constant 0 : index
    %c0_162 = arith.constant 0 : index
    %148 = vector.load %arg10[%c2_159, %c10_160, %c0_161, %c0_162] : memref<3x18x16x8xf32, #tpu.memory_space<vmem>>, vector<1x8x16x8xf32>
    %149 = vector.shape_cast %148 : vector<1x8x16x8xf32> to vector<8x16x8xf32>
    %150 = vector.shape_cast %149 : vector<8x16x8xf32> to vector<128x8xf32>
    %c8_163 = arith.constant 8 : index
    %c0_164 = arith.constant 0 : index
    %c0_165 = arith.constant 0 : index
    %151 = vector.load %arg2[%c8_163, %c0_164, %c0_165] : memref<9x8x128xf32, #tpu.memory_space<vmem>>, vector<1x8x128xf32>
    %152 = vector.shape_cast %151 : vector<1x8x128xf32> to vector<8x128xf32>
    %cst_166 = arith.constant dense<0.000000e+00> : vector<128x128xf32>
    %153 = tpu.matmul %150, %152, %cst_166 {dimension_numbers = #tpu.dot_dimension_numbers<[1], [0], [0], [1], [0, 0, 1, 1], [], []>} : vector<128x8xf32>, vector<8x128xf32>, vector<128x128xf32> -> vector<128x128xf32>
    %154 = arith.addf %147, %153 : vector<128x128xf32>
    %155 = vector.broadcast %15 : vector<1x128xf32> to vector<128x128xf32>
    %156 = arith.mulf %154, %155 : vector<128x128xf32>
    %157 = vector.broadcast %16 : vector<1x128xf32> to vector<128x128xf32>
    %158 = arith.addf %156, %157 : vector<128x128xf32>
    %cst_167 = arith.constant 0.000000e+00 : f32
    %159 = vector.broadcast %cst_167 : f32 to vector<128x128xf32>
    %160 = arith.maximumf %158, %159 : vector<128x128xf32>
    %cst_168 = arith.constant dense<0.000000e+00> : vector<128xf32>
    %161 = vector.multi_reduction <add>, %160, %cst_168 [0] : vector<128x128xf32> to vector<128xf32>
    %162 = vector.shape_cast %161 : vector<128xf32> to vector<1x128xf32>
    %163 = arith.addf %88, %162 : vector<1x128xf32>
    %164 = vector.shape_cast %160 : vector<128x128xf32> to vector<8x16x128xf32>
    %c0_169 = arith.constant 0 : index
    %c8_170 = arith.constant 8 : index
    %c0_171 = arith.constant 0 : index
    %c0_172 = arith.constant 0 : index
    %165 = vector.load %arg9[%c0_169, %c8_170, %c0_171, %c0_172] : memref<1x16x16x128xf32, #tpu.memory_space<vmem>>, vector<1x8x16x128xf32>
    %166 = vector.shape_cast %165 : vector<1x8x16x128xf32> to vector<8x16x128xf32>
    %167 = vector.shape_cast %164 : vector<8x16x128xf32> to vector<1x8x16x128xf32>
    tpu.vector_store %arg9[%c0_169, %c8_170, %c0_171, %c0_172], %167 {strides = array<i32>} : memref<1x16x16x128xf32, #tpu.memory_space<vmem>>, vector<1x8x16x128xf32>,
    %cst_173 = arith.constant 3.906250e-03 : f32
    %168 = vector.broadcast %cst_173 : f32 to vector<1x128xf32>
    %169 = arith.mulf %163, %168 : vector<1x128xf32>
    %c0_174 = arith.constant 0 : index
    %c0_175 = arith.constant 0 : index
    %170 = vector.load %arg5[%c0_174, %c0_175] : memref<128x128xf32, #tpu.memory_space<vmem>>, vector<128x128xf32>
    %cst_176 = arith.constant dense<0.000000e+00> : vector<1x128xf32>
    %171 = tpu.matmul %169, %170, %cst_176 {dimension_numbers = #tpu.dot_dimension_numbers<[1], [0], [0], [1], [0, 0, 1, 1], [], []>} : vector<1x128xf32>, vector<128x128xf32>, vector<1x128xf32> -> vector<1x128xf32>
    %c0_177 = arith.constant 0 : index
    %c0_178 = arith.constant 0 : index
    %172 = vector.load %arg6[%c0_177, %c0_178] : memref<1x128xf32, #tpu.memory_space<vmem>>, vector<1x128xf32>
    %173 = arith.addf %171, %172 : vector<1x128xf32>
    %c0_179 = arith.constant 0 : index
    %c0_180 = arith.constant 0 : index
    %174 = vector.load %arg7[%c0_179, %c0_180] : memref<128x128xf32, #tpu.memory_space<vmem>>, vector<128x128xf32>
    %cst_181 = arith.constant dense<0.000000e+00> : vector<1x128xf32>
    %175 = tpu.matmul %173, %174, %cst_181 {dimension_numbers = #tpu.dot_dimension_numbers<[1], [0], [0], [1], [0, 0, 1, 1], [], []>} : vector<1x128xf32>, vector<128x128xf32>, vector<1x128xf32> -> vector<1x128xf32>
    %c0_182 = arith.constant 0 : index
    %c0_183 = arith.constant 0 : index
    %176 = vector.load %arg8[%c0_182, %c0_183] : memref<1x128xf32, #tpu.memory_space<vmem>>, vector<1x128xf32>
    %177 = arith.addf %175, %176 : vector<1x128xf32>
    %178 = arith.negf %177 : vector<1x128xf32>
    %179 = math.exp %178 : vector<1x128xf32>
    %cst_184 = arith.constant 1.000000e+00 : f32
    %180 = vector.broadcast %cst_184 : f32 to vector<1x128xf32>
    %181 = arith.addf %180, %179 : vector<1x128xf32>
    %182 = arith.divf %180, %181 : vector<1x128xf32>
    %c0_185 = arith.constant 0 : index
    %c0_186 = arith.constant 0 : index
    %c0_187 = arith.constant 0 : index
    %c0_188 = arith.constant 0 : index
    %183 = vector.load %arg9[%c0_185, %c0_186, %c0_187, %c0_188] : memref<1x16x16x128xf32, #tpu.memory_space<vmem>>, vector<1x16x16x128xf32>
    %184 = vector.shape_cast %183 : vector<1x16x16x128xf32> to vector<256x128xf32>
    %cst_189 = arith.constant 1.000000e+00 : f32
    %185 = vector.broadcast %cst_189 : f32 to vector<1x128xf32>
    %186 = arith.addf %185, %182 : vector<1x128xf32>
    %187 = vector.broadcast %186 : vector<1x128xf32> to vector<256x128xf32>
    %188 = arith.mulf %184, %187 : vector<256x128xf32>
    %189 = vector.shape_cast %188 : vector<256x128xf32> to vector<1x16x16x128xf32>
    %c0_190 = arith.constant 0 : index
    %c0_191 = arith.constant 0 : index
    %c0_192 = arith.constant 0 : index
    %c0_193 = arith.constant 0 : index
    %190 = vector.load %arg9[%c0_190, %c0_191, %c0_192, %c0_193] : memref<1x16x16x128xf32, #tpu.memory_space<vmem>>, vector<1x16x16x128xf32>
    tpu.vector_store %arg9[%c0_190, %c0_191, %c0_192, %c0_193], %189 {strides = array<i32>} : memref<1x16x16x128xf32, #tpu.memory_space<vmem>>, vector<1x16x16x128xf32>,
    return
  }
  func.func @transform_0(%arg0: i32) -> (i32, i32, i32, i32) {
    %c0_i32 = arith.constant 0 : i32
    %c0_i32_0 = arith.constant 0 : i32
    %c0_i32_1 = arith.constant 0 : i32
    %c0_i32_2 = arith.constant 0 : i32
    return %arg0, %c0_i32, %c0_i32_0, %c0_i32_1 : i32, i32, i32, i32
  }
  func.func @transform_1(%arg0: i32) -> (i32, i32, i32) {
    %c0_i32 = arith.constant 0 : i32
    %c0_i32_0 = arith.constant 0 : i32
    %c0_i32_1 = arith.constant 0 : i32
    %c0_i32_2 = arith.constant 0 : i32
    return %c0_i32, %c0_i32_0, %c0_i32_1 : i32, i32, i32
  }
  func.func @transform_2(%arg0: i32) -> (i32, i32) {
    %c0_i32 = arith.constant 0 : i32
    %c0_i32_0 = arith.constant 0 : i32
    %c0_i32_1 = arith.constant 0 : i32
    return %c0_i32, %c0_i32_0 : i32, i32
  }
  func.func @transform_3(%arg0: i32) -> (i32, i32) {
    %c0_i32 = arith.constant 0 : i32
    %c0_i32_0 = arith.constant 0 : i32
    %c0_i32_1 = arith.constant 0 : i32
    return %c0_i32, %c0_i32_0 : i32, i32
  }
  func.func @transform_4(%arg0: i32) -> (i32, i32) {
    %c0_i32 = arith.constant 0 : i32
    %c0_i32_0 = arith.constant 0 : i32
    %c0_i32_1 = arith.constant 0 : i32
    return %c0_i32, %c0_i32_0 : i32, i32
  }
  func.func @transform_5(%arg0: i32) -> (i32, i32) {
    %c0_i32 = arith.constant 0 : i32
    %c0_i32_0 = arith.constant 0 : i32
    %c0_i32_1 = arith.constant 0 : i32
    return %c0_i32, %c0_i32_0 : i32, i32
  }
  func.func @transform_6(%arg0: i32) -> (i32, i32) {
    %c0_i32 = arith.constant 0 : i32
    %c0_i32_0 = arith.constant 0 : i32
    %c0_i32_1 = arith.constant 0 : i32
    return %c0_i32, %c0_i32_0 : i32, i32
  }
  func.func @transform_7(%arg0: i32) -> (i32, i32) {
    %c0_i32 = arith.constant 0 : i32
    %c0_i32_0 = arith.constant 0 : i32
    %c0_i32_1 = arith.constant 0 : i32
    return %c0_i32, %c0_i32_0 : i32, i32
  }
  func.func @transform_8(%arg0: i32) -> (i32, i32, i32, i32) {
    %c0_i32 = arith.constant 0 : i32
    %c0_i32_0 = arith.constant 0 : i32
    %c0_i32_1 = arith.constant 0 : i32
    %c0_i32_2 = arith.constant 0 : i32
    return %arg0, %c0_i32, %c0_i32_0, %c0_i32_1 : i32, i32, i32, i32
  }
}

</mosaic_0001>

<llo_original>
// kernel: tpu_custom_call.1
$region0: #{tpu_custom_call.1}
  #allocation0 [shape = 'u32[]', space=smem, size = 0x4, offset = 0x4, fixed_abs, tag = 'smem constant byte address 0x4 - core index']
  #allocation1 [shape = 'u32[144,128]{1,0:T(1,128)}', space=vmem, size = 0x12000, scoped, tag = 'internal scratch']
  #allocation2 [shape = 'f32[3,18,16,8]{3,2,1,0:T(8,128)}', space=vmem, size = 0x6c000, scoped, tag = 'scratch operand']
  %s0 = inlined_call_operand.vmem [shape: f32[2,18,18,8], index: 0, kind: input, shape index: {}]
  %s1 = inlined_call_operand.vmem [shape: f32[9,8,128], index: 1, kind: input, shape index: {}]
  %s2 = inlined_call_operand.vmem [shape: f32[1,128], index: 2, kind: input, shape index: {}]
  %s3 = inlined_call_operand.vmem [shape: f32[1,128], index: 3, kind: input, shape index: {}]
  %s4 = inlined_call_operand.vmem [shape: f32[128,128], index: 4, kind: input, shape index: {}]
  %s5 = inlined_call_operand.vmem [shape: f32[1,128], index: 5, kind: input, shape index: {}]
  %s6 = inlined_call_operand.vmem [shape: f32[128,128], index: 6, kind: input, shape index: {}]
  %s7 = inlined_call_operand.vmem [shape: f32[1,128], index: 7, kind: input, shape index: {}]
  %s8 = inlined_call_operand.hbm [shape: f32[2,16,16,128], index: 8, kind: output, shape index: {}]
  %s9 = sld [smem:[#allocation0]]
  $region65: #{tpu_custom_call.1} parent=0
    _
  %s11 = ssub.s32 1, %s9
  %s12 = scalar_select 0, %s11, %s9
  $region1: #{tpu_custom_call.1} parent=0
    #allocation3 [shape = 'u8[262144]{0}', space=vmem, size = 0x40000, scoped, tag = 'output window, operand 0']
    #allocation4 [shape = 's32[2]{0}', space=sflag, size = 0x8, scoped, tag = 'scoped memory for tpu_custom_call.1']
    %13 = vsyncpa [#allocation4], 0
    %s14 = scalar_lea.sflag [#allocation4], 1
    %15 = vsyncpa %s14, 0
    loop: start=0, step=1, limit=4
    $region2: #{tpu_custom_call.1} parent=1 // loop_pre_header
      _
    $region3: #{tpu_custom_call.1} parent=1 // loop_header
      %s17 = sphi 0, %s21
      %p18 = scmp.ge.s32.totalorder %s17, 4
      %s27 = sphi 0, %s29
      %s30 = sphi 0, %s27
      %s31 = sphi 0, %s30
      %s47 = sphi 0, %s31
      %s51 = sphi 0, %s51
      %s53 = sphi 0, %s51
      %s54 = sphi 0, %s53
      %s68 = sphi 0, %s54
      %s72 = sphi 0, %s72
      %s74 = sphi 0, %s72
      %s75 = sphi 0, %s74
      %s89 = sphi 0, %s75
      %s93 = sphi 0, %s93
      %s95 = sphi 0, %s93
      %s96 = sphi 0, %s95
      %s110 = sphi 0, %s96
      %s114 = sphi 0, %s114
      %s116 = sphi 0, %s114
      %s117 = sphi 0, %s116
      %s131 = sphi 0, %s117
      %s135 = sphi 0, %s135
      %s137 = sphi 0, %s135
      %s138 = sphi 0, %s137
      %s152 = sphi 0, %s138
      %s156 = sphi 0, %s156
      %s158 = sphi 0, %s156
      %s159 = sphi 0, %s158
      %s173 = sphi 0, %s159
      %s177 = sphi 0, %s177
      %s179 = sphi 0, %s177
      %s180 = sphi 0, %s179
      %s194 = sphi 0, %s180
      %s200 = sphi 0, %s202
      %s203 = sphi 0, %s200
      %s204 = sphi 0, %s203
      %s220 = sphi 0, %s204
    $region4: #{tpu_custom_call.1} parent=1 // loop_header_branch
      %20 = sbr.rel (%p18) target = $region8
    $region5: #{tpu_custom_call.1} parent=1 // loop_body
      %s22 = ssub.s32 %s17, 1
      %s23 = ssub.s32 %s17, 2
      %s24 = sadd.s32 %s17, 1
      %s25 = ssub.s32 %s17, %s24
      %p26 = scmp.eq.s32.totalorder %s25, 0
      %s28 = sadd.s32 %s27, 1
      %s29 = scalar_select %p26, %s27, %s28
      %p32 = pneg %p26
      %p33 = scmp.eq.s32.totalorder %s17, 1
      %p34 = por %p32, %p33
      %p35 = scmp.ne.s32.totalorder %s27, %s30
      %p36 = scmp.eq.s32.totalorder %s17, 0
      %p37 = por %p35, %p36
      %p38 = scmp.ne.s32.totalorder %s27, %s30
      %p39 = scmp.eq.s32.totalorder %s22, 1
      %p40 = por %p38, %p39
      %p41 = scmp.ne.s32.totalorder %s30, %s31
      %p42 = scmp.eq.s32.totalorder %s22, 0
      %p43 = por %p41, %p42
      %p44 = scmp.ne.s32.totalorder %s30, %s31
      %p45 = scmp.eq.s32.totalorder %s23, 1
      %p46 = por %p44, %p45
      %p48 = scmp.ne.s32.totalorder %s31, %s47
      %p49 = scmp.eq.s32.totalorder %s23, 0
      %p50 = por %p48, %p49
      %s52 = sadd.s32 %s51, 1
      %p55 = scmp.eq.s32.totalorder %s17, 1
      %p56 = scmp.ne.s32.totalorder %s51, %s53
      %p57 = scmp.eq.s32.totalorder %s17, 0
      %p58 = por %p56, %p57
      %p59 = scmp.ne.s32.totalorder %s51, %s53
      %p60 = scmp.eq.s32.totalorder %s22, 1
      %p61 = por %p59, %p60
      %p62 = scmp.ne.s32.totalorder %s53, %s54
      %p63 = scmp.eq.s32.totalorder %s22, 0
      %p64 = por %p62, %p63
      %p65 = scmp.ne.s32.totalorder %s53, %s54
      %p66 = scmp.eq.s32.totalorder %s23, 1
      %p67 = por %p65, %p66
      %p69 = scmp.ne.s32.totalorder %s54, %s68
      %p70 = scmp.eq.s32.totalorder %s23, 0
      %p71 = por %p69, %p70
      %s73 = sadd.s32 %s72, 1
      %p76 = scmp.eq.s32.totalorder %s17, 1
      %p77 = scmp.ne.s32.totalorder %s72, %s74
      %p78 = scmp.eq.s32.totalorder %s17, 0
      %p79 = por %p77, %p78
      %p80 = scmp.ne.s32.totalorder %s72, %s74
      %p81 = scmp.eq.s32.totalorder %s22, 1
      %p82 = por %p80, %p81
      %p83 = scmp.ne.s32.totalorder %s74, %s75
      %p84 = scmp.eq.s32.totalorder %s22, 0
      %p85 = por %p83, %p84
      %p86 = scmp.ne.s32.totalorder %s74, %s75
      %p87 = scmp.eq.s32.totalorder %s23, 1
      %p88 = por %p86, %p87
      %p90 = scmp.ne.s32.totalorder %s75, %s89
      %p91 = scmp.eq.s32.totalorder %s23, 0
      %p92 = por %p90, %p91
      %s94 = sadd.s32 %s93, 1
      %p97 = scmp.eq.s32.totalorder %s17, 1
      %p98 = scmp.ne.s32.totalorder %s93, %s95
      %p99 = scmp.eq.s32.totalorder %s17, 0
      %p100 = por %p98, %p99
      %p101 = scmp.ne.s32.totalorder %s93, %s95
      %p102 = scmp.eq.s32.totalorder %s22, 1
      %p103 = por %p101, %p102
      %p104 = scmp.ne.s32.totalorder %s95, %s96
      %p105 = scmp.eq.s32.totalorder %s22, 0
      %p106 = por %p104, %p105
      %p107 = scmp.ne.s32.totalorder %s95, %s96
      %p108 = scmp.eq.s32.totalorder %s23, 1
      %p109 = por %p107, %p108
      %p111 = scmp.ne.s32.totalorder %s96, %s110
      %p112 = scmp.eq.s32.totalorder %s23, 0
      %p113 = por %p111, %p112
      %s115 = sadd.s32 %s114, 1
      %p118 = scmp.eq.s32.totalorder %s17, 1
      %p119 = scmp.ne.s32.totalorder %s114, %s116
      %p120 = scmp.eq.s32.totalorder %s17, 0
      %p121 = por %p119, %p120
      %p122 = scmp.ne.s32.totalorder %s114, %s116
      %p123 = scmp.eq.s32.totalorder %s22, 1
      %p124 = por %p122, %p123
      %p125 = scmp.ne.s32.totalorder %s116, %s117
      %p126 = scmp.eq.s32.totalorder %s22, 0
      %p127 = por %p125, %p126
      %p128 = scmp.ne.s32.totalorder %s116, %s117
      %p129 = scmp.eq.s32.totalorder %s23, 1
      %p130 = por %p128, %p129
      %p132 = scmp.ne.s32.totalorder %s117, %s131
      %p133 = scmp.eq.s32.totalorder %s23, 0
      %p134 = por %p132, %p133
      %s136 = sadd.s32 %s135, 1
      %p139 = scmp.eq.s32.totalorder %s17, 1
      %p140 = scmp.ne.s32.totalorder %s135, %s137
      %p141 = scmp.eq.s32.totalorder %s17, 0
      %p142 = por %p140, %p141
      %p143 = scmp.ne.s32.totalorder %s135, %s137
      %p144 = scmp.eq.s32.totalorder %s22, 1
      %p145 = por %p143, %p144
      %p146 = scmp.ne.s32.totalorder %s137, %s138
      %p147 = scmp.eq.s32.totalorder %s22, 0
      %p148 = por %p146, %p147
      %p149 = scmp.ne.s32.totalorder %s137, %s138
      %p150 = scmp.eq.s32.totalorder %s23, 1
      %p151 = por %p149, %p150
      %p153 = scmp.ne.s32.totalorder %s138, %s152
      %p154 = scmp.eq.s32.totalorder %s23, 0
      %p155 = por %p153, %p154
      %s157 = sadd.s32 %s156, 1
      %p160 = scmp.eq.s32.totalorder %s17, 1
      %p161 = scmp.ne.s32.totalorder %s156, %s158
      %p162 = scmp.eq.s32.totalorder %s17, 0
      %p163 = por %p161, %p162
      %p164 = scmp.ne.s32.totalorder %s156, %s158
      %p165 = scmp.eq.s32.totalorder %s22, 1
      %p166 = por %p164, %p165
      %p167 = scmp.ne.s32.totalorder %s158, %s159
      %p168 = scmp.eq.s32.totalorder %s22, 0
      %p169 = por %p167, %p168
      %p170 = scmp.ne.s32.totalorder %s158, %s159
      %p171 = scmp.eq.s32.totalorder %s23, 1
      %p172 = por %p170, %p171
      %p174 = scmp.ne.s32.totalorder %s159, %s173
      %p175 = scmp.eq.s32.totalorder %s23, 0
      %p176 = por %p174, %p175
      %s178 = sadd.s32 %s177, 1
      %p181 = scmp.eq.s32.totalorder %s17, 1
      %p182 = scmp.ne.s32.totalorder %s177, %s179
      %p183 = scmp.eq.s32.totalorder %s17, 0
      %p184 = por %p182, %p183
      %p185 = scmp.ne.s32.totalorder %s177, %s179
      %p186 = scmp.eq.s32.totalorder %s22, 1
      %p187 = por %p185, %p186
      %p188 = scmp.ne.s32.totalorder %s179, %s180
      %p189 = scmp.eq.s32.totalorder %s22, 0
      %p190 = por %p188, %p189
      %p191 = scmp.ne.s32.totalorder %s179, %s180
      %p192 = scmp.eq.s32.totalorder %s23, 1
      %p193 = por %p191, %p192
      %p195 = scmp.ne.s32.totalorder %s180, %s194
      %p196 = scmp.eq.s32.totalorder %s23, 0
      %p197 = por %p195, %p196
      %s198 = ssub.s32 %s17, %s24
      %p199 = scmp.eq.s32.totalorder %s198, 0
      %s201 = sadd.s32 %s200, 1
      %s202 = scalar_select %p199, %s200, %s201
      %p205 = pneg %p199
      %p206 = scmp.eq.s32.totalorder %s17, 1
      %p207 = por %p205, %p206
      %p208 = scmp.ne.s32.totalorder %s200, %s203
      %p209 = scmp.eq.s32.totalorder %s17, 0
      %p210 = por %p208, %p209
      %p211 = scmp.ne.s32.totalorder %s200, %s203
      %p212 = scmp.eq.s32.totalorder %s22, 1
      %p213 = por %p211, %p212
      %p214 = scmp.ne.s32.totalorder %s203, %s204
      %p215 = scmp.eq.s32.totalorder %s22, 0
      %p216 = por %p214, %p215
      %p217 = scmp.ne.s32.totalorder %s203, %s204
      %p218 = scmp.eq.s32.totalorder %s23, 1
      %p219 = por %p217, %p218
      %p221 = scmp.ne.s32.totalorder %s204, %s220
      %p222 = scmp.eq.s32.totalorder %s23, 0
      %p223 = por %p221, %p222
      %p224 = scmp.le.s32.totalorder 1, %s17
      %p225 = scmp.lt.s32.totalorder %s17, 3
      %p226 = pnand %p224, %p225
      %p227 = pneg %p226
      // Predicated region
      $region9: #{tpu_custom_call.1} parent=5 // pred_check
        _
      $region10: #{tpu_custom_call.1} parent=5 // pred_check_branch
        %229 = sbr.rel (%p226) target = $region12
      $region11: #{tpu_custom_call.1} parent=5 // pred_region
        %s230 = ssub.s32 %s17, 1
        // Predicated region
        $region13: #{tpu_custom_call.1} parent=11 // pred_check
          %p231 = pneg %p64
        $region14: #{tpu_custom_call.1} parent=11 // pred_check_branch
          %233 = sbr.rel (%p231) target = $region16
        $region15: #{tpu_custom_call.1} parent=11 // pred_region
          _
        $region16: #{tpu_custom_call.1} parent=11 // pred_fallthru
          _
        // Predicated region
        $region17: #{tpu_custom_call.1} parent=11 // pred_check
          %p234 = pneg %p85
        $region18: #{tpu_custom_call.1} parent=11 // pred_check_branch
          %236 = sbr.rel (%p234) target = $region20
        $region19: #{tpu_custom_call.1} parent=11 // pred_region
          _
        $region20: #{tpu_custom_call.1} parent=11 // pred_fallthru
          _
        // Predicated region
        $region21: #{tpu_custom_call.1} parent=11 // pred_check
          %p237 = pneg %p106
        $region22: #{tpu_custom_call.1} parent=11 // pred_check_branch
          %239 = sbr.rel (%p237) target = $region24
        $region23: #{tpu_custom_call.1} parent=11 // pred_region
          _
        $region24: #{tpu_custom_call.1} parent=11 // pred_fallthru
          _
        // Predicated region
        $region25: #{tpu_custom_call.1} parent=11 // pred_check
          %p240 = pneg %p127
        $region26: #{tpu_custom_call.1} parent=11 // pred_check_branch
          %242 = sbr.rel (%p240) target = $region28
        $region27: #{tpu_custom_call.1} parent=11 // pred_region
          _
        $region28: #{tpu_custom_call.1} parent=11 // pred_fallthru
          _
        // Predicated region
        $region29: #{tpu_custom_call.1} parent=11 // pred_check
          %p243 = pneg %p148
        $region30: #{tpu_custom_call.1} parent=11 // pred_check_branch
          %245 = sbr.rel (%p243) target = $region32
        $region31: #{tpu_custom_call.1} parent=11 // pred_region
          _
        $region32: #{tpu_custom_call.1} parent=11 // pred_fallthru
          _
        // Predicated region
        $region33: #{tpu_custom_call.1} parent=11 // pred_check
          %p246 = pneg %p169
        $region34: #{tpu_custom_call.1} parent=11 // pred_check_branch
          %248 = sbr.rel (%p246) target = $region36
        $region35: #{tpu_custom_call.1} parent=11 // pred_region
          _
        $region36: #{tpu_custom_call.1} parent=11 // pred_fallthru
          _
        // Predicated region
        $region37: #{tpu_custom_call.1} parent=11 // pred_check
          %p249 = pneg %p190
        $region38: #{tpu_custom_call.1} parent=11 // pred_check_branch
          %251 = sbr.rel (%p249) target = $region40
        $region39: #{tpu_custom_call.1} parent=11 // pred_region
          _
        $region40: #{tpu_custom_call.1} parent=11 // pred_fallthru
          _
      $region12: #{tpu_custom_call.1} parent=5 // pred_fallthru
        _
      %p252 = scmp.lt.s32.totalorder %s17, 2
      // Predicated region
      $region41: #{tpu_custom_call.1} parent=5 // pred_check
        %p253 = pneg %p252
      $region42: #{tpu_custom_call.1} parent=5 // pred_check_branch
        %255 = sbr.rel (%p253) target = $region44
      $region43: #{tpu_custom_call.1} parent=5 // pred_region
        // Predicated region
        $region45: #{tpu_custom_call.1} parent=43 // pred_check
          %p256 = pneg %p37
        $region46: #{tpu_custom_call.1} parent=43 // pred_check_branch
          %258 = sbr.rel (%p256) target = $region48
        $region47: #{tpu_custom_call.1} parent=43 // pred_region
          %p259 = scmp.lt.s32.totalorder %s17, 1
          %s260 = scalar_select %p259, %s17, 1
          %s261 = smul.addr %s260, 54
          %s262 = smul.addr %s261, 8
          %s263 = scalar_lea.vmem %s0, %s262
        $region48: #{tpu_custom_call.1} parent=43 // pred_fallthru
          _
      $region44: #{tpu_custom_call.1} parent=5 // pred_fallthru
        _
      %p264 = scmp.le.s32.totalorder 1, %s17
      %p265 = scmp.lt.s32.totalorder %s17, 3
      %p266 = pnand %p264, %p265
      %p267 = pneg %p266
      // Predicated region
      $region49: #{tpu_custom_call.1} parent=5 // pred_check
        _
      $region50: #{tpu_custom_call.1} parent=5 // pred_check_branch
        %269 = sbr.rel (%p266) target = $region52
      $region51: #{tpu_custom_call.1} parent=5 // pred_region
        %s270 = ssub.s32 %s17, 1
        %p271 = scmp.lt.s32.totalorder %s22, 1
        %s272 = scalar_select %p271, %s22, 1
        %s273 = smul.addr %s272, 54
        %s274 = smul.addr %s273, 8
        %s275 = scalar_lea.vmem %s0, %s274
        %p276 = pneg %p43
        %p277 = pneg %p40
        %p278 = pneg %p64
        %p279 = pneg %p61
        %p280 = pneg %p85
        %p281 = pneg %p82
        %p282 = pneg %p106
        %p283 = pneg %p103
        %p284 = pneg %p127
        %p285 = pneg %p124
        %p286 = pneg %p148
        %p287 = pneg %p145
        %p288 = pneg %p169
        %p289 = pneg %p166
        %p290 = pneg %p190
        %p291 = pneg %p187
        %p292 = pneg %p216
        %p293 = pneg %p213
        %s294 = sand.u32 %s203, 1
        %s295 = scalar_lea.sflag [#allocation4], %s294
        %s296 = sand.u32 %s203, 1
        %s297 = smul.addr %s296, 256
        %s298 = scalar_lea.vmem [#allocation3], %s297
        %p299 = scmp.lt.s32.totalorder %s22, 1
        %s300 = scalar_select %p299, %s22, 1
        %s301 = smul.addr %s300, 54
        %s302 = smul.addr %s301, 8
        %s303 = scalar_lea.vmem %s0, %s302
        %v304 = vld [vmem:[%s303] sm:$0xff]
        %v305 = vld [vmem:[%s303 + $0x8] sm:$0xff]
        %v306 = vld [vmem:[%s303 + $0x18] sm:$0xff]
        %v307 = vld [vmem:[%s303 + $0x20] sm:$0xff]
        %v308 = vld [vmem:[%s303 + $0x30] sm:$0xff]
        %v309 = vld [vmem:[%s303 + $0x38] sm:$0xff]
        %v310 = vld [vmem:[%s303 + $0x48] sm:$0xff]
        %v311 = vld [vmem:[%s303 + $0x50] sm:$0xff]
        %v312 = vld [vmem:[%s303 + $0x60] sm:$0xff]
        %v313 = vld [vmem:[%s303 + $0x68] sm:$0xff]
        %v314 = vld [vmem:[%s303 + $0x78] sm:$0xff]
        %v315 = vld [vmem:[%s303 + $0x80] sm:$0xff]
        %v316 = vld [vmem:[%s303 + $0x90] sm:$0xff]
        %v317 = vld [vmem:[%s303 + $0x98] sm:$0xff]
        %v318 = vld [vmem:[%s303 + $0xa8] sm:$0xff]
        %v319 = vld [vmem:[%s303 + $0xb0] sm:$0xff]
        %v320 = vld [vmem:[%s303 + $0xc0] sm:$0xff]
        %v321 = vld [vmem:[%s303 + $0xc8] sm:$0xff]
        %v322 = vld [vmem:[%s303 + $0xd8] sm:$0xff]
        %v323 = vld [vmem:[%s303 + $0xe0] sm:$0xff]
        %v324 = vld [vmem:[%s303 + $0xf0] sm:$0xff]
        %v325 = vld [vmem:[%s303 + $0xf8] sm:$0xff]
        %v326 = vld [vmem:[%s303 + $0x108] sm:$0xff]
        %v327 = vld [vmem:[%s303 + $0x110] sm:$0xff]
        %v328 = vld [vmem:[%s303 + $0x120] sm:$0xff]
        %v329 = vld [vmem:[%s303 + $0x128] sm:$0xff]
        %v330 = vld [vmem:[%s303 + $0x138] sm:$0xff]
        %v331 = vld [vmem:[%s303 + $0x140] sm:$0xff]
        %v332 = vld [vmem:[%s303 + $0x150] sm:$0xff]
        %v333 = vld [vmem:[%s303 + $0x158] sm:$0xff]
        %v334 = vld [vmem:[%s303 + $0x168] sm:$0xff]
        %v335 = vld [vmem:[%s303 + $0x170] sm:$0xff]
        %v336 = vld [vmem:[%s303 + $0x180] sm:$0xff]
        %v337 = vld [vmem:[%s303 + $0x188] sm:$0xff]
        %v338 = vld [vmem:[%s303 + $0x198] sm:$0xff]
        %v339 = vld [vmem:[%s303 + $0x1a0] sm:$0xff]
        %vm340 = vcmask 64512
        %341 = vst.msk [vmem:[#allocation2] sm:$0xff] %vm340, %v304
        %342 = vst.msk [vmem:[#allocation2 + $0x8] sm:$0xff] %vm340, %v305
        %343 = vst.msk [vmem:[#allocation2 + $0x10] sm:$0xff] %vm340, %v306
        %344 = vst.msk [vmem:[#allocation2 + $0x18] sm:$0xff] %vm340, %v307
        %345 = vst.msk [vmem:[#allocation2 + $0x20] sm:$0xff] %vm340, %v308
        %346 = vst.msk [vmem:[#allocation2 + $0x28] sm:$0xff] %vm340, %v309
        %347 = vst.msk [vmem:[#allocation2 + $0x30] sm:$0xff] %vm340, %v310
        %348 = vst.msk [vmem:[#allocation2 + $0x38] sm:$0xff] %vm340, %v311
        %349 = vst.msk [vmem:[#allocation2 + $0x40] sm:$0xff] %vm340, %v312
        %350 = vst.msk [vmem:[#allocation2 + $0x48] sm:$0xff] %vm340, %v313
        %351 = vst.msk [vmem:[#allocation2 + $0x50] sm:$0xff] %vm340, %v314
        %352 = vst.msk [vmem:[#allocation2 + $0x58] sm:$0xff] %vm340, %v315
        %353 = vst.msk [vmem:[#allocation2 + $0x60] sm:$0xff] %vm340, %v316
        %354 = vst.msk [vmem:[#allocation2 + $0x68] sm:$0xff] %vm340, %v317
        %355 = vst.msk [vmem:[#allocation2 + $0x70] sm:$0xff] %vm340, %v318
        %356 = vst.msk [vmem:[#allocation2 + $0x78] sm:$0xff] %vm340, %v319
        %357 = vst.msk [vmem:[#allocation2 + $0x80] sm:$0xff] %vm340, %v320
        %358 = vst.msk [vmem:[#allocation2 + $0x88] sm:$0xff] %vm340, %v321
        %359 = vst.msk [vmem:[#allocation2 + $0x90] sm:$0xff] %vm340, %v322
        %360 = vst.msk [vmem:[#allocation2 + $0x98] sm:$0xff] %vm340, %v323
        %361 = vst.msk [vmem:[#allocation2 + $0xa0] sm:$0xff] %vm340, %v324
        %362 = vst.msk [vmem:[#allocation2 + $0xa8] sm:$0xff] %vm340, %v325
        %363 = vst.msk [vmem:[#allocation2 + $0xb0] sm:$0xff] %vm340, %v326
        %364 = vst.msk [vmem:[#allocation2 + $0xb8] sm:$0xff] %vm340, %v327
        %365 = vst.msk [vmem:[#allocation2 + $0xc0] sm:$0xff] %vm340, %v328
        %366 = vst.msk [vmem:[#allocation2 + $0xc8] sm:$0xff] %vm340, %v329
        %367 = vst.msk [vmem:[#allocation2 + $0xd0] sm:$0xff] %vm340, %v330
        %368 = vst.msk [vmem:[#allocation2 + $0xd8] sm:$0xff] %vm340, %v331
        %369 = vst.msk [vmem:[#allocation2 + $0xe0] sm:$0xff] %vm340, %v332
        %370 = vst.msk [vmem:[#allocation2 + $0xe8] sm:$0xff] %vm340, %v333
        %371 = vst.msk [vmem:[#allocation2 + $0xf0] sm:$0xff] %vm340, %v334
        %372 = vst.msk [vmem:[#allocation2 + $0xf8] sm:$0xff] %vm340, %v335
        %373 = vst.msk [vmem:[#allocation2 + $0x100] sm:$0xff] %vm340, %v336
        %374 = vst.msk [vmem:[#allocation2 + $0x108] sm:$0xff] %vm340, %v337
        %375 = vst.msk [vmem:[#allocation2 + $0x110] sm:$0xff] %vm340, %v338
        %376 = vst.msk [vmem:[#allocation2 + $0x118] sm:$0xff] %vm340, %v339
        %v377 = vld [vmem:[%s303 + $0x1] sm:$0xff]
        %v378 = vld [vmem:[%s303 + $0x9] sm:$0xff]
        %v379 = vld [vmem:[%s303 + $0x19] sm:$0xff]
        %v380 = vld [vmem:[%s303 + $0x21] sm:$0xff]
        %v381 = vld [vmem:[%s303 + $0x31] sm:$0xff]
        %v382 = vld [vmem:[%s303 + $0x39] sm:$0xff]
        %v383 = vld [vmem:[%s303 + $0x49] sm:$0xff]
        %v384 = vld [vmem:[%s303 + $0x51] sm:$0xff]
        %v385 = vld [vmem:[%s303 + $0x61] sm:$0xff]
        %v386 = vld [vmem:[%s303 + $0x69] sm:$0xff]
        %v387 = vld [vmem:[%s303 + $0x79] sm:$0xff]
        %v388 = vld [vmem:[%s303 + $0x81] sm:$0xff]
        %v389 = vld [vmem:[%s303 + $0x91] sm:$0xff]
        %v390 = vld [vmem:[%s303 + $0x99] sm:$0xff]
        %v391 = vld [vmem:[%s303 + $0xa9] sm:$0xff]
        %v392 = vld [vmem:[%s303 + $0xb1] sm:$0xff]
        %v393 = vld [vmem:[%s303 + $0xc1] sm:$0xff]
        %v394 = vld [vmem:[%s303 + $0xc9] sm:$0xff]
        %v395 = vld [vmem:[%s303 + $0xd9] sm:$0xff]
        %v396 = vld [vmem:[%s303 + $0xe1] sm:$0xff]
        %v397 = vld [vmem:[%s303 + $0xf1] sm:$0xff]
        %v398 = vld [vmem:[%s303 + $0xf9] sm:$0xff]
        %v399 = vld [vmem:[%s303 + $0x109] sm:$0xff]
        %v400 = vld [vmem:[%s303 + $0x111] sm:$0xff]
        %v401 = vld [vmem:[%s303 + $0x121] sm:$0xff]
        %v402 = vld [vmem:[%s303 + $0x129] sm:$0xff]
        %v403 = vld [vmem:[%s303 + $0x139] sm:$0xff]
        %v404 = vld [vmem:[%s303 + $0x141] sm:$0xff]
        %v405 = vld [vmem:[%s303 + $0x151] sm:$0xff]
        %v406 = vld [vmem:[%s303 + $0x159] sm:$0xff]
        %v407 = vld [vmem:[%s303 + $0x169] sm:$0xff]
        %v408 = vld [vmem:[%s303 + $0x171] sm:$0xff]
        %v409 = vld [vmem:[%s303 + $0x181] sm:$0xff]
        %v410 = vld [vmem:[%s303 + $0x189] sm:$0xff]
        %v411 = vld [vmem:[%s303 + $0x199] sm:$0xff]
        %v412 = vld [vmem:[%s303 + $0x1a1] sm:$0xff]
        %s413 = scalar_lea.vmem [#allocation2], 288
        %414 = vst.msk [vmem:[%s413] sm:$0xff] %vm340, %v377
        %415 = vst.msk [vmem:[%s413 + $0x8] sm:$0xff] %vm340, %v378
        %416 = vst.msk [vmem:[%s413 + $0x10] sm:$0xff] %vm340, %v379
        %417 = vst.msk [vmem:[%s413 + $0x18] sm:$0xff] %vm340, %v380
        %418 = vst.msk [vmem:[%s413 + $0x20] sm:$0xff] %vm340, %v381
        %419 = vst.msk [vmem:[%s413 + $0x28] sm:$0xff] %vm340, %v382
        %420 = vst.msk [vmem:[%s413 + $0x30] sm:$0xff] %vm340, %v383
        %421 = vst.msk [vmem:[%s413 + $0x38] sm:$0xff] %vm340, %v384
        %422 = vst.msk [vmem:[%s413 + $0x40] sm:$0xff] %vm340, %v385
        %423 = vst.msk [vmem:[%s413 + $0x48] sm:$0xff] %vm340, %v386
        %424 = vst.msk [vmem:[%s413 + $0x50] sm:$0xff] %vm340, %v387
        %425 = vst.msk [vmem:[%s413 + $0x58] sm:$0xff] %vm340, %v388
        %426 = vst.msk [vmem:[%s413 + $0x60] sm:$0xff] %vm340, %v389
        %427 = vst.msk [vmem:[%s413 + $0x68] sm:$0xff] %vm340, %v390
        %428 = vst.msk [vmem:[%s413 + $0x70] sm:$0xff] %vm340, %v391
        %429 = vst.msk [vmem:[%s413 + $0x78] sm:$0xff] %vm340, %v392
        %430 = vst.msk [vmem:[%s413 + $0x80] sm:$0xff] %vm340, %v393
        %431 = vst.msk [vmem:[%s413 + $0x88] sm:$0xff] %vm340, %v394
        %432 = vst.msk [vmem:[%s413 + $0x90] sm:$0xff] %vm340, %v395
        %433 = vst.msk [vmem:[%s413 + $0x98] sm:$0xff] %vm340, %v396
        %434 = vst.msk [vmem:[%s413 + $0xa0] sm:$0xff] %vm340, %v397
        %435 = vst.msk [vmem:[%s413 + $0xa8] sm:$0xff] %vm340, %v398
        %436 = vst.msk [vmem:[%s413 + $0xb0] sm:$0xff] %vm340, %v399
        %437 = vst.msk [vmem:[%s413 + $0xb8] sm:$0xff] %vm340, %v400
        %438 = vst.msk [vmem:[%s413 + $0xc0] sm:$0xff] %vm340, %v401
        %439 = vst.msk [vmem:[%s413 + $0xc8] sm:$0xff] %vm340, %v402
        %440 = vst.msk [vmem:[%s413 + $0xd0] sm:$0xff] %vm340, %v403
        %441 = vst.msk [vmem:[%s413 + $0xd8] sm:$0xff] %vm340, %v404
        %442 = vst.msk [vmem:[%s413 + $0xe0] sm:$0xff] %vm340, %v405
        %443 = vst.msk [vmem:[%s413 + $0xe8] sm:$0xff] %vm340, %v406
        %444 = vst.msk [vmem:[%s413 + $0xf0] sm:$0xff] %vm340, %v407
        %445 = vst.msk [vmem:[%s413 + $0xf8] sm:$0xff] %vm340, %v408
        %446 = vst.msk [vmem:[%s413 + $0x100] sm:$0xff] %vm340, %v409
        %447 = vst.msk [vmem:[%s413 + $0x108] sm:$0xff] %vm340, %v410
        %448 = vst.msk [vmem:[%s413 + $0x110] sm:$0xff] %vm340, %v411
        %449 = vst.msk [vmem:[%s413 + $0x118] sm:$0xff] %vm340, %v412
        %v450 = vld [vmem:[%s303 + $0x2] sm:$0xff]
        %v451 = vld [vmem:[%s303 + $0xa] sm:$0xff]
        %v452 = vld [vmem:[%s303 + $0x1a] sm:$0xff]
        %v453 = vld [vmem:[%s303 + $0x22] sm:$0xff]
        %v454 = vld [vmem:[%s303 + $0x32] sm:$0xff]
        %v455 = vld [vmem:[%s303 + $0x3a] sm:$0xff]
        %v456 = vld [vmem:[%s303 + $0x4a] sm:$0xff]
        %v457 = vld [vmem:[%s303 + $0x52] sm:$0xff]
        %v458 = vld [vmem:[%s303 + $0x62] sm:$0xff]
        %v459 = vld [vmem:[%s303 + $0x6a] sm:$0xff]
        %v460 = vld [vmem:[%s303 + $0x7a] sm:$0xff]
        %v461 = vld [vmem:[%s303 + $0x82] sm:$0xff]
        %v462 = vld [vmem:[%s303 + $0x92] sm:$0xff]
        %v463 = vld [vmem:[%s303 + $0x9a] sm:$0xff]
        %v464 = vld [vmem:[%s303 + $0xaa] sm:$0xff]
        %v465 = vld [vmem:[%s303 + $0xb2] sm:$0xff]
        %v466 = vld [vmem:[%s303 + $0xc2] sm:$0xff]
        %v467 = vld [vmem:[%s303 + $0xca] sm:$0xff]
        %v468 = vld [vmem:[%s303 + $0xda] sm:$0xff]
        %v469 = vld [vmem:[%s303 + $0xe2] sm:$0xff]
        %v470 = vld [vmem:[%s303 + $0xf2] sm:$0xff]
        %v471 = vld [vmem:[%s303 + $0xfa] sm:$0xff]
        %v472 = vld [vmem:[%s303 + $0x10a] sm:$0xff]
        %v473 = vld [vmem:[%s303 + $0x112] sm:$0xff]
        %v474 = vld [vmem:[%s303 + $0x122] sm:$0xff]
        %v475 = vld [vmem:[%s303 + $0x12a] sm:$0xff]
        %v476 = vld [vmem:[%s303 + $0x13a] sm:$0xff]
        %v477 = vld [vmem:[%s303 + $0x142] sm:$0xff]
        %v478 = vld [vmem:[%s303 + $0x152] sm:$0xff]
        %v479 = vld [vmem:[%s303 + $0x15a] sm:$0xff]
        %v480 = vld [vmem:[%s303 + $0x16a] sm:$0xff]
        %v481 = vld [vmem:[%s303 + $0x172] sm:$0xff]
        %v482 = vld [vmem:[%s303 + $0x182] sm:$0xff]
        %v483 = vld [vmem:[%s303 + $0x18a] sm:$0xff]
        %v484 = vld [vmem:[%s303 + $0x19a] sm:$0xff]
        %v485 = vld [vmem:[%s303 + $0x1a2] sm:$0xff]
        %s486 = scalar_lea.vmem [#allocation2], 576
        %487 = vst.msk [vmem:[%s486] sm:$0xff] %vm340, %v450
        %488 = vst.msk [vmem:[%s486 + $0x8] sm:$0xff] %vm340, %v451
        %489 = vst.msk [vmem:[%s486 + $0x10] sm:$0xff] %vm340, %v452
        %490 = vst.msk [vmem:[%s486 + $0x18] sm:$0xff] %vm340, %v453
        %491 = vst.msk [vmem:[%s486 + $0x20] sm:$0xff] %vm340, %v454
        %492 = vst.msk [vmem:[%s486 + $0x28] sm:$0xff] %vm340, %v455
        %493 = vst.msk [vmem:[%s486 + $0x30] sm:$0xff] %vm340, %v456
        %494 = vst.msk [vmem:[%s486 + $0x38] sm:$0xff] %vm340, %v457
        %495 = vst.msk [vmem:[%s486 + $0x40] sm:$0xff] %vm340, %v458
        %496 = vst.msk [vmem:[%s486 + $0x48] sm:$0xff] %vm340, %v459
        %497 = vst.msk [vmem:[%s486 + $0x50] sm:$0xff] %vm340, %v460
        %498 = vst.msk [vmem:[%s486 + $0x58] sm:$0xff] %vm340, %v461
        %499 = vst.msk [vmem:[%s486 + $0x60] sm:$0xff] %vm340, %v462
        %500 = vst.msk [vmem:[%s486 + $0x68] sm:$0xff] %vm340, %v463
        %501 = vst.msk [vmem:[%s486 + $0x70] sm:$0xff] %vm340, %v464
        %502 = vst.msk [vmem:[%s486 + $0x78] sm:$0xff] %vm340, %v465
        %503 = vst.msk [vmem:[%s486 + $0x80] sm:$0xff] %vm340, %v466
        %504 = vst.msk [vmem:[%s486 + $0x88] sm:$0xff] %vm340, %v467
        %505 = vst.msk [vmem:[%s486 + $0x90] sm:$0xff] %vm340, %v468
        %506 = vst.msk [vmem:[%s486 + $0x98] sm:$0xff] %vm340, %v469
        %507 = vst.msk [vmem:[%s486 + $0xa0] sm:$0xff] %vm340, %v470
        %508 = vst.msk [vmem:[%s486 + $0xa8] sm:$0xff] %vm340, %v471
        %509 = vst.msk [vmem:[%s486 + $0xb0] sm:$0xff] %vm340, %v472
        %510 = vst.msk [vmem:[%s486 + $0xb8] sm:$0xff] %vm340, %v473
        %511 = vst.msk [vmem:[%s486 + $0xc0] sm:$0xff] %vm340, %v474
        %512 = vst.msk [vmem:[%s486 + $0xc8] sm:$0xff] %vm340, %v475
        %513 = vst.msk [vmem:[%s486 + $0xd0] sm:$0xff] %vm340, %v476
        %514 = vst.msk [vmem:[%s486 + $0xd8] sm:$0xff] %vm340, %v477
        %515 = vst.msk [vmem:[%s486 + $0xe0] sm:$0xff] %vm340, %v478
        %516 = vst.msk [vmem:[%s486 + $0xe8] sm:$0xff] %vm340, %v479
        %517 = vst.msk [vmem:[%s486 + $0xf0] sm:$0xff] %vm340, %v480
        %518 = vst.msk [vmem:[%s486 + $0xf8] sm:$0xff] %vm340, %v481
        %519 = vst.msk [vmem:[%s486 + $0x100] sm:$0xff] %vm340, %v482
        %520 = vst.msk [vmem:[%s486 + $0x108] sm:$0xff] %vm340, %v483
        %521 = vst.msk [vmem:[%s486 + $0x110] sm:$0xff] %vm340, %v484
        %522 = vst.msk [vmem:[%s486 + $0x118] sm:$0xff] %vm340, %v485
        %v523 = vld [vmem:[%s2] sm:$0x1]
        %v524 = vld [vmem:[%s3] sm:$0x1]
        %v525 = vld [vmem:[#allocation2] sm:$0xff]
        %v526 = vld [vmem:[#allocation2 + $0x8] sm:$0xff]
        %v527 = vld [vmem:[#allocation2 + $0x10] sm:$0xff]
        %v528 = vld [vmem:[#allocation2 + $0x18] sm:$0xff]
        %v529 = vld [vmem:[#allocation2 + $0x20] sm:$0xff]
        %v530 = vld [vmem:[#allocation2 + $0x28] sm:$0xff]
        %v531 = vld [vmem:[#allocation2 + $0x30] sm:$0xff]
        %v532 = vld [vmem:[#allocation2 + $0x38] sm:$0xff]
        %v533 = vld [vmem:[#allocation2 + $0x40] sm:$0xff]
        %v534 = vld [vmem:[#allocation2 + $0x48] sm:$0xff]
        %v535 = vld [vmem:[#allocation2 + $0x50] sm:$0xff]
        %v536 = vld [vmem:[#allocation2 + $0x58] sm:$0xff]
        %v537 = vld [vmem:[#allocation2 + $0x60] sm:$0xff]
        %v538 = vld [vmem:[#allocation2 + $0x68] sm:$0xff]
        %v539 = vld [vmem:[#allocation2 + $0x70] sm:$0xff]
        %v540 = vld [vmem:[#allocation2 + $0x78] sm:$0xff]
        %v541 = vld [vmem:[%s1] sm:$0xff]
        %v542 = vld [vmem:[%s413] sm:$0xff]
        %v543 = vld [vmem:[%s413 + $0x8] sm:$0xff]
        %v544 = vld [vmem:[%s413 + $0x10] sm:$0xff]
        %v545 = vld [vmem:[%s413 + $0x18] sm:$0xff]
        %v546 = vld [vmem:[%s413 + $0x20] sm:$0xff]
        %v547 = vld [vmem:[%s413 + $0x28] sm:$0xff]
        %v548 = vld [vmem:[%s413 + $0x30] sm:$0xff]
        %v549 = vld [vmem:[%s413 + $0x38] sm:$0xff]
        %v550 = vld [vmem:[%s413 + $0x40] sm:$0xff]
        %v551 = vld [vmem:[%s413 + $0x48] sm:$0xff]
        %v552 = vld [vmem:[%s413 + $0x50] sm:$0xff]
        %v553 = vld [vmem:[%s413 + $0x58] sm:$0xff]
        %v554 = vld [vmem:[%s413 + $0x60] sm:$0xff]
        %v555 = vld [vmem:[%s413 + $0x68] sm:$0xff]
        %v556 = vld [vmem:[%s413 + $0x70] sm:$0xff]
        %v557 = vld [vmem:[%s413 + $0x78] sm:$0xff]
        %s558 = scalar_lea.vmem %s1, 8
        %v559 = vld [vmem:[%s558] sm:$0xff]
        %v561 = vsel %vm340, %v542, 0
        %v564 = vsel %vm340, %v543, 0
        %v567 = vsel %vm340, %v544, 0
        %v570 = vsel %vm340, %v545, 0
        %v573 = vsel %vm340, %v546, 0
        %v576 = vsel %vm340, %v547, 0
        %v579 = vsel %vm340, %v548, 0
        %v582 = vsel %vm340, %v549, 0
        %v585 = vsel %vm340, %v550, 0
        %v588 = vsel %vm340, %v551, 0
        %v591 = vsel %vm340, %v552, 0
        %v594 = vsel %vm340, %v553, 0
        %v597 = vsel %vm340, %v554, 0
        %v600 = vsel %vm340, %v555, 0
        %v603 = vsel %vm340, %v556, 0
        %v606 = vsel %vm340, %v557, 0
        %608 = vmatprep.subr.mxu0 0.0
        %609 = vmatpush1.msra.mxu0 %v559
        %610 = vmatprep.subr.mxu0 0.0
        %611 = vmatpush1.msra.mxu0 0.0
        %612 = vmatprep.subr.mxu0 0.0
        %613 = vmatpush1.msra.mxu0 0.0
        %614 = vmatprep.subr.mxu0 0.0
        %615 = vmatpush1.msra.mxu0 0.0
        %616 = vmatprep.subr.mxu0 0.0
        %617 = vmatpush1.msra.mxu0 0.0
        %618 = vmatprep.subr.mxu0 0.0
        %619 = vmatpush1.msra.mxu0 0.0
        %620 = vmatprep.subr.mxu0 0.0
        %621 = vmatpush1.msra.mxu0 0.0
        %622 = vmatprep.subr.mxu0 0.0
        %623 = vmatpush1.msra.mxu0 0.0
        %624 = vmatprep.subr.mxu0 0.0
        %625 = vmatpush1.msra.mxu0 0.0
        %626 = vmatprep.subr.mxu0 0.0
        %627 = vmatpush1.msra.mxu0 0.0
        %628 = vmatprep.subr.mxu0 0.0
        %629 = vmatpush1.msra.mxu0 0.0
        %630 = vmatprep.subr.mxu0 0.0
        %631 = vmatpush1.msra.mxu0 0.0
        %632 = vmatprep.subr.mxu0 0.0
        %633 = vmatpush1.msra.mxu0 0.0
        %634 = vmatprep.subr.mxu0 0.0
        %635 = vmatpush1.msra.mxu0 0.0
        %636 = vmatprep.subr.mxu0 0.0
        %637 = vmatpush1.msra.mxu0 0.0
        %638 = vmatprep.subr.mxu0 0.0
        %639 = vmatpush1.msra.mxu0 0.0
        %640 = vmatprep.subr.mxu0 0.0
        %641 = vmatpush1.msra.mxu0 0.0
        %642 = vmatprep.subr.mxu0 0.0
        %643 = vmatpush1.msra.mxu0 0.0
        %644 = vmatprep.subr.mxu0 0.0
        %645 = vmatpush1.msra.mxu0 0.0
        %646 = vmatprep.subr.mxu0 0.0
        %647 = vmatpush1.msra.mxu0 0.0
        %648 = vmatprep.subr.mxu0 0.0
        %649 = vmatpush1.msra.mxu0 0.0
        %650 = vmatprep.subr.mxu0 0.0
        %651 = vmatpush1.msra.mxu0 0.0
        %652 = vmatprep.subr.mxu0 0.0
        %653 = vmatpush1.msra.mxu0 0.0
        %654 = vmatprep.subr.mxu0 0.0
        %655 = vmatpush1.msra.mxu0 0.0
        %656 = vmatprep.subr.mxu0 0.0
        %657 = vmatpush1.msra.mxu0 0.0
        %658 = vmatprep.subr.mxu0 0.0
        %659 = vmatpush1.msra.mxu0 0.0
        %660 = vmatprep.subr.mxu0 0.0
        %661 = vmatpush1.msra.mxu0 0.0
        %662 = vmatprep.subr.mxu0 0.0
        %663 = vmatpush1.msra.mxu0 0.0
        %664 = vmatprep.subr.mxu0 0.0
        %665 = vmatpush1.msra.mxu0 0.0
        %666 = vmatprep.subr.mxu0 0.0
        %667 = vmatpush1.msra.mxu0 0.0
        %668 = vmatprep.subr.mxu0 0.0
        %669 = vmatpush1.msra.mxu0 0.0
        %670 = vmatprep.subr.mxu0 0.0
        %671 = vmatpush1.msra.mxu0 0.0
        %672 = vmatprep.mubr.f32.mxu0 0.0
        %673 = vmatmul.mubr.f32.gmra.mrb[0].mxu0 %v561
        %v674 = vpop.f32.mrb[0].mxu0
        %v675 = vadd.f32 0.0, %v674
        %v676 = vpop.f32.mrb[0].mxu0
        %677 = vmatprep.mubr.f32.mxu0 0.0
        %678 = vmatmul.mubr.f32.gmra.mrb[0].mxu0 %v564
        %v679 = vpop.f32.mrb[0].mxu0
        %v680 = vadd.f32 0.0, %v679
        %v681 = vpop.f32.mrb[0].mxu0
        %682 = vmatprep.mubr.f32.mxu0 0.0
        %683 = vmatmul.mubr.f32.gmra.mrb[0].mxu0 %v567
        %v684 = vpop.f32.mrb[0].mxu0
        %v685 = vadd.f32 0.0, %v684
        %v686 = vpop.f32.mrb[0].mxu0
        %687 = vmatprep.mubr.f32.mxu0 0.0
        %688 = vmatmul.mubr.f32.gmra.mrb[0].mxu0 %v570
        %v689 = vpop.f32.mrb[0].mxu0
        %v690 = vadd.f32 0.0, %v689
        %v691 = vpop.f32.mrb[0].mxu0
        %692 = vmatprep.mubr.f32.mxu0 0.0
        %693 = vmatmul.mubr.f32.gmra.mrb[0].mxu0 %v573
        %v694 = vpop.f32.mrb[0].mxu0
        %v695 = vadd.f32 0.0, %v694
        %v696 = vpop.f32.mrb[0].mxu0
        %697 = vmatprep.mubr.f32.mxu0 0.0
        %698 = vmatmul.mubr.f32.gmra.mrb[0].mxu0 %v576
        %v699 = vpop.f32.mrb[0].mxu0
        %v700 = vadd.f32 0.0, %v699
        %v701 = vpop.f32.mrb[0].mxu0
        %702 = vmatprep.mubr.f32.mxu0 0.0
        %703 = vmatmul.mubr.f32.gmra.mrb[0].mxu0 %v579
        %v704 = vpop.f32.mrb[0].mxu0
        %v705 = vadd.f32 0.0, %v704
        %v706 = vpop.f32.mrb[0].mxu0
        %707 = vmatprep.mubr.f32.mxu0 0.0
        %708 = vmatmul.mubr.f32.gmra.mrb[0].mxu0 %v582
        %v709 = vpop.f32.mrb[0].mxu0
        %v710 = vadd.f32 0.0, %v709
        %v711 = vpop.f32.mrb[0].mxu0
        %712 = vmatprep.mubr.f32.mxu0 0.0
        %713 = vmatmul.mubr.f32.gmra.mrb[0].mxu0 %v585
        %v714 = vpop.f32.mrb[0].mxu0
        %v715 = vadd.f32 0.0, %v714
        %v716 = vpop.f32.mrb[0].mxu0
        %717 = vmatprep.mubr.f32.mxu0 0.0
        %718 = vmatmul.mubr.f32.gmra.mrb[0].mxu0 %v588
        %v719 = vpop.f32.mrb[0].mxu0
        %v720 = vadd.f32 0.0, %v719
        %v721 = vpop.f32.mrb[0].mxu0
        %722 = vmatprep.mubr.f32.mxu0 0.0
        %723 = vmatmul.mubr.f32.gmra.mrb[0].mxu0 %v591
        %v724 = vpop.f32.mrb[0].mxu0
        %v725 = vadd.f32 0.0, %v724
        %v726 = vpop.f32.mrb[0].mxu0
        %727 = vmatprep.mubr.f32.mxu0 0.0
        %728 = vmatmul.mubr.f32.gmra.mrb[0].mxu0 %v594
        %v729 = vpop.f32.mrb[0].mxu0
        %v730 = vadd.f32 0.0, %v729
        %v731 = vpop.f32.mrb[0].mxu0
        %732 = vmatprep.mubr.f32.mxu0 0.0
        %733 = vmatmul.mubr.f32.gmra.mrb[0].mxu0 %v597
        %v734 = vpop.f32.mrb[0].mxu0
        %v735 = vadd.f32 0.0, %v734
        %v736 = vpop.f32.mrb[0].mxu0
        %737 = vmatprep.mubr.f32.mxu0 0.0
        %738 = vmatmul.mubr.f32.gmra.mrb[0].mxu0 %v600
        %v739 = vpop.f32.mrb[0].mxu0
        %v740 = vadd.f32 0.0, %v739
        %v741 = vpop.f32.mrb[0].mxu0
        %742 = vmatprep.mubr.f32.mxu0 0.0
        %743 = vmatmul.mubr.f32.gmra.mrb[0].mxu0 %v603
        %v744 = vpop.f32.mrb[0].mxu0
        %v745 = vadd.f32 0.0, %v744
        %v746 = vpop.f32.mrb[0].mxu0
        %747 = vmatprep.mubr.f32.mxu0 0.0
        %748 = vmatmul.mubr.f32.gmra.mrb[0].mxu0 %v606
        %v749 = vpop.f32.mrb[0].mxu0
        %v750 = vadd.f32 0.0, %v749
        %v751 = vpop.f32.mrb[0].mxu0
        %752 = vdwg.mxu0
        %v754 = vsel %vm340, %v525, 0
        %v757 = vsel %vm340, %v526, 0
        %v760 = vsel %vm340, %v527, 0
        %v763 = vsel %vm340, %v528, 0
        %v766 = vsel %vm340, %v529, 0
        %v769 = vsel %vm340, %v530, 0
        %v772 = vsel %vm340, %v531, 0
        %v775 = vsel %vm340, %v532, 0
        %v778 = vsel %vm340, %v533, 0
        %v781 = vsel %vm340, %v534, 0
        %v784 = vsel %vm340, %v535, 0
        %v787 = vsel %vm340, %v536, 0
        %v790 = vsel %vm340, %v537, 0
        %v793 = vsel %vm340, %v538, 0
        %v796 = vsel %vm340, %v539, 0
        %v799 = vsel %vm340, %v540, 0
        %801 = vmatprep.subr.mxu0 0.0
        %802 = vmatpush1.msra.mxu0 %v541
        %803 = vmatprep.subr.mxu0 0.0
        %804 = vmatpush1.msra.mxu0 0.0
        %805 = vmatprep.subr.mxu0 0.0
        %806 = vmatpush1.msra.mxu0 0.0
        %807 = vmatprep.subr.mxu0 0.0
        %808 = vmatpush1.msra.mxu0 0.0
        %809 = vmatprep.subr.mxu0 0.0
        %810 = vmatpush1.msra.mxu0 0.0
        %811 = vmatprep.subr.mxu0 0.0
        %812 = vmatpush1.msra.mxu0 0.0
        %813 = vmatprep.subr.mxu0 0.0
        %814 = vmatpush1.msra.mxu0 0.0
        %815 = vmatprep.subr.mxu0 0.0
        %816 = vmatpush1.msra.mxu0 0.0
        %817 = vmatprep.subr.mxu0 0.0
        %818 = vmatpush1.msra.mxu0 0.0
        %819 = vmatprep.subr.mxu0 0.0
        %820 = vmatpush1.msra.mxu0 0.0
        %821 = vmatprep.subr.mxu0 0.0
        %822 = vmatpush1.msra.mxu0 0.0
        %823 = vmatprep.subr.mxu0 0.0
        %824 = vmatpush1.msra.mxu0 0.0
        %825 = vmatprep.subr.mxu0 0.0
        %826 = vmatpush1.msra.mxu0 0.0
        %827 = vmatprep.subr.mxu0 0.0
        %828 = vmatpush1.msra.mxu0 0.0
        %829 = vmatprep.subr.mxu0 0.0
        %830 = vmatpush1.msra.mxu0 0.0
        %831 = vmatprep.subr.mxu0 0.0
        %832 = vmatpush1.msra.mxu0 0.0
        %833 = vmatprep.subr.mxu0 0.0
        %834 = vmatpush1.msra.mxu0 0.0
        %835 = vmatprep.subr.mxu0 0.0
        %836 = vmatpush1.msra.mxu0 0.0
        %837 = vmatprep.subr.mxu0 0.0
        %838 = vmatpush1.msra.mxu0 0.0
        %839 = vmatprep.subr.mxu0 0.0
        %840 = vmatpush1.msra.mxu0 0.0
        %841 = vmatprep.subr.mxu0 0.0
        %842 = vmatpush1.msra.mxu0 0.0
        %843 = vmatprep.subr.mxu0 0.0
        %844 = vmatpush1.msra.mxu0 0.0
        %845 = vmatprep.subr.mxu0 0.0
        %846 = vmatpush1.msra.mxu0 0.0
        %847 = vmatprep.subr.mxu0 0.0
        %848 = vmatpush1.msra.mxu0 0.0
        %849 = vmatprep.subr.mxu0 0.0
        %850 = vmatpush1.msra.mxu0 0.0
        %851 = vmatprep.subr.mxu0 0.0
        %852 = vmatpush1.msra.mxu0 0.0
        %853 = vmatprep.subr.mxu0 0.0
        %854 = vmatpush1.msra.mxu0 0.0
        %855 = vmatprep.subr.mxu0 0.0
        %856 = vmatpush1.msra.mxu0 0.0
        %857 = vmatprep.subr.mxu0 0.0
        %858 = vmatpush1.msra.mxu0 0.0
        %859 = vmatprep.subr.mxu0 0.0
        %860 = vmatpush1.msra.mxu0 0.0
        %861 = vmatprep.subr.mxu0 0.0
        %862 = vmatpush1.msra.mxu0 0.0
        %863 = vmatprep.subr.mxu0 0.0
        %864 = vmatpush1.msra.mxu0 0.0
        %865 = vmatprep.mubr.f32.mxu0 0.0
        %866 = vmatmul.mubr.f32.gmra.mrb[0].mxu0 %v754
        %v867 = vpop.f32.mrb[0].mxu0
        %v868 = vadd.f32 %v675, %v867
        %v869 = vpop.f32.mrb[0].mxu0
        %870 = vmatprep.mubr.f32.mxu0 0.0
        %871 = vmatmul.mubr.f32.gmra.mrb[0].mxu0 %v757
        %v872 = vpop.f32.mrb[0].mxu0
        %v873 = vadd.f32 %v680, %v872
        %v874 = vpop.f32.mrb[0].mxu0
        %875 = vmatprep.mubr.f32.mxu0 0.0
        %876 = vmatmul.mubr.f32.gmra.mrb[0].mxu0 %v760
        %v877 = vpop.f32.mrb[0].mxu0
        %v878 = vadd.f32 %v685, %v877
        %v879 = vpop.f32.mrb[0].mxu0
        %880 = vmatprep.mubr.f32.mxu0 0.0
        %881 = vmatmul.mubr.f32.gmra.mrb[0].mxu0 %v763
        %v882 = vpop.f32.mrb[0].mxu0
        %v883 = vadd.f32 %v690, %v882
        %v884 = vpop.f32.mrb[0].mxu0
        %885 = vmatprep.mubr.f32.mxu0 0.0
        %886 = vmatmul.mubr.f32.gmra.mrb[0].mxu0 %v766
        %v887 = vpop.f32.mrb[0].mxu0
        %v888 = vadd.f32 %v695, %v887
        %v889 = vpop.f32.mrb[0].mxu0
        %890 = vmatprep.mubr.f32.mxu0 0.0
        %891 = vmatmul.mubr.f32.gmra.mrb[0].mxu0 %v769
        %v892 = vpop.f32.mrb[0].mxu0
        %v893 = vadd.f32 %v700, %v892
        %v894 = vpop.f32.mrb[0].mxu0
        %895 = vmatprep.mubr.f32.mxu0 0.0
        %896 = vmatmul.mubr.f32.gmra.mrb[0].mxu0 %v772
        %v897 = vpop.f32.mrb[0].mxu0
        %v898 = vadd.f32 %v705, %v897
        %v899 = vpop.f32.mrb[0].mxu0
        %900 = vmatprep.mubr.f32.mxu0 0.0
        %901 = vmatmul.mubr.f32.gmra.mrb[0].mxu0 %v775
        %v902 = vpop.f32.mrb[0].mxu0
        %v903 = vadd.f32 %v710, %v902
        %v904 = vpop.f32.mrb[0].mxu0
        %905 = vmatprep.mubr.f32.mxu0 0.0
        %906 = vmatmul.mubr.f32.gmra.mrb[0].mxu0 %v778
        %v907 = vpop.f32.mrb[0].mxu0
        %v908 = vadd.f32 %v715, %v907
        %v909 = vpop.f32.mrb[0].mxu0
        %910 = vmatprep.mubr.f32.mxu0 0.0
        %911 = vmatmul.mubr.f32.gmra.mrb[0].mxu0 %v781
        %v912 = vpop.f32.mrb[0].mxu0
        %v913 = vadd.f32 %v720, %v912
        %v914 = vpop.f32.mrb[0].mxu0
        %915 = vmatprep.mubr.f32.mxu0 0.0
        %916 = vmatmul.mubr.f32.gmra.mrb[0].mxu0 %v784
        %v917 = vpop.f32.mrb[0].mxu0
        %v918 = vadd.f32 %v725, %v917
        %v919 = vpop.f32.mrb[0].mxu0
        %920 = vmatprep.mubr.f32.mxu0 0.0
        %921 = vmatmul.mubr.f32.gmra.mrb[0].mxu0 %v787
        %v922 = vpop.f32.mrb[0].mxu0
        %v923 = vadd.f32 %v730, %v922
        %v924 = vpop.f32.mrb[0].mxu0
        %925 = vmatprep.mubr.f32.mxu0 0.0
        %926 = vmatmul.mubr.f32.gmra.mrb[0].mxu0 %v790
        %v927 = vpop.f32.mrb[0].mxu0
        %v928 = vadd.f32 %v735, %v927
        %v929 = vpop.f32.mrb[0].mxu0
        %930 = vmatprep.mubr.f32.mxu0 0.0
        %931 = vmatmul.mubr.f32.gmra.mrb[0].mxu0 %v793
        %v932 = vpop.f32.mrb[0].mxu0
        %v933 = vadd.f32 %v740, %v932
        %v934 = vpop.f32.mrb[0].mxu0
        %935 = vmatprep.mubr.f32.mxu0 0.0
        %936 = vmatmul.mubr.f32.gmra.mrb[0].mxu0 %v796
        %v937 = vpop.f32.mrb[0].mxu0
        %v938 = vadd.f32 %v745, %v937
        %v939 = vpop.f32.mrb[0].mxu0
        %940 = vmatprep.mubr.f32.mxu0 0.0
        %941 = vmatmul.mubr.f32.gmra.mrb[0].mxu0 %v799
        %v942 = vpop.f32.mrb[0].mxu0
        %v943 = vadd.f32 %v750, %v942
        %v944 = vpop.f32.mrb[0].mxu0
        %945 = vdwg.mxu0
        %v946 = vld [vmem:[%s486] sm:$0xff]
        %v947 = vld [vmem:[%s486 + $0x8] sm:$0xff]
        %v948 = vld [vmem:[%s486 + $0x10] sm:$0xff]
        %v949 = vld [vmem:[%s486 + $0x18] sm:$0xff]
        %v950 = vld [vmem:[%s486 + $0x20] sm:$0xff]
        %v951 = vld [vmem:[%s486 + $0x28] sm:$0xff]
        %v952 = vld [vmem:[%s486 + $0x30] sm:$0xff]
        %v953 = vld [vmem:[%s486 + $0x38] sm:$0xff]
        %v954 = vld [vmem:[%s486 + $0x40] sm:$0xff]
        %v955 = vld [vmem:[%s486 + $0x48] sm:$0xff]
        %v956 = vld [vmem:[%s486 + $0x50] sm:$0xff]
        %v957 = vld [vmem:[%s486 + $0x58] sm:$0xff]
        %v958 = vld [vmem:[%s486 + $0x60] sm:$0xff]
        %v959 = vld [vmem:[%s486 + $0x68] sm:$0xff]
        %v960 = vld [vmem:[%s486 + $0x70] sm:$0xff]
        %v961 = vld [vmem:[%s486 + $0x78] sm:$0xff]
        %s962 = scalar_lea.vmem %s1, 16
        %v963 = vld [vmem:[%s962] sm:$0xff]
        %v965 = vsel %vm340, %v946, 0
        %v968 = vsel %vm340, %v947, 0
        %v971 = vsel %vm340, %v948, 0
        %v974 = vsel %vm340, %v949, 0
        %v977 = vsel %vm340, %v950, 0
        %v980 = vsel %vm340, %v951, 0
        %v983 = vsel %vm340, %v952, 0
        %v986 = vsel %vm340, %v953, 0
        %v989 = vsel %vm340, %v954, 0
        %v992 = vsel %vm340, %v955, 0
        %v995 = vsel %vm340, %v956, 0
        %v998 = vsel %vm340, %v957, 0
        %v1001 = vsel %vm340, %v958, 0
        %v1004 = vsel %vm340, %v959, 0
        %v1007 = vsel %vm340, %v960, 0
        %v1010 = vsel %vm340, %v961, 0
        %1012 = vmatprep.subr.mxu0 0.0
        %1013 = vmatpush1.msra.mxu0 %v963
        %1014 = vmatprep.subr.mxu0 0.0
        %1015 = vmatpush1.msra.mxu0 0.0
        %1016 = vmatprep.subr.mxu0 0.0
        %1017 = vmatpush1.msra.mxu0 0.0
        %1018 = vmatprep.subr.mxu0 0.0
        %1019 = vmatpush1.msra.mxu0 0.0
        %1020 = vmatprep.subr.mxu0 0.0
        %1021 = vmatpush1.msra.mxu0 0.0
        %1022 = vmatprep.subr.mxu0 0.0
        %1023 = vmatpush1.msra.mxu0 0.0
        %1024 = vmatprep.subr.mxu0 0.0
        %1025 = vmatpush1.msra.mxu0 0.0
        %1026 = vmatprep.subr.mxu0 0.0
        %1027 = vmatpush1.msra.mxu0 0.0
        %1028 = vmatprep.subr.mxu0 0.0
        %1029 = vmatpush1.msra.mxu0 0.0
        %1030 = vmatprep.subr.mxu0 0.0
        %1031 = vmatpush1.msra.mxu0 0.0
        %1032 = vmatprep.subr.mxu0 0.0
        %1033 = vmatpush1.msra.mxu0 0.0
        %1034 = vmatprep.subr.mxu0 0.0
        %1035 = vmatpush1.msra.mxu0 0.0
        %1036 = vmatprep.subr.mxu0 0.0
        %1037 = vmatpush1.msra.mxu0 0.0
        %1038 = vmatprep.subr.mxu0 0.0
        %1039 = vmatpush1.msra.mxu0 0.0
        %1040 = vmatprep.subr.mxu0 0.0
        %1041 = vmatpush1.msra.mxu0 0.0
        %1042 = vmatprep.subr.mxu0 0.0
        %1043 = vmatpush1.msra.mxu0 0.0
        %1044 = vmatprep.subr.mxu0 0.0
        %1045 = vmatpush1.msra.mxu0 0.0
        %1046 = vmatprep.subr.mxu0 0.0
        %1047 = vmatpush1.msra.mxu0 0.0
        %1048 = vmatprep.subr.mxu0 0.0
        %1049 = vmatpush1.msra.mxu0 0.0
        %1050 = vmatprep.subr.mxu0 0.0
        %1051 = vmatpush1.msra.mxu0 0.0
        %1052 = vmatprep.subr.mxu0 0.0
        %1053 = vmatpush1.msra.mxu0 0.0
        %1054 = vmatprep.subr.mxu0 0.0
        %1055 = vmatpush1.msra.mxu0 0.0
        %1056 = vmatprep.subr.mxu0 0.0
        %1057 = vmatpush1.msra.mxu0 0.0
        %1058 = vmatprep.subr.mxu0 0.0
        %1059 = vmatpush1.msra.mxu0 0.0
        %1060 = vmatprep.subr.mxu0 0.0
        %1061 = vmatpush1.msra.mxu0 0.0
        %1062 = vmatprep.subr.mxu0 0.0
        %1063 = vmatpush1.msra.mxu0 0.0
        %1064 = vmatprep.subr.mxu0 0.0
        %1065 = vmatpush1.msra.mxu0 0.0
        %1066 = vmatprep.subr.mxu0 0.0
        %1067 = vmatpush1.msra.mxu0 0.0
        %1068 = vmatprep.subr.mxu0 0.0
        %1069 = vmatpush1.msra.mxu0 0.0
        %1070 = vmatprep.subr.mxu0 0.0
        %1071 = vmatpush1.msra.mxu0 0.0
        %1072 = vmatprep.subr.mxu0 0.0
        %1073 = vmatpush1.msra.mxu0 0.0
        %1074 = vmatprep.subr.mxu0 0.0
        %1075 = vmatpush1.msra.mxu0 0.0
        %1076 = vmatprep.mubr.f32.mxu0 0.0
        %1077 = vmatmul.mubr.f32.gmra.mrb[0].mxu0 %v965
        %v1078 = vpop.f32.mrb[0].mxu0
        %v1079 = vadd.f32 0.0, %v1078
        %v1080 = vpop.f32.mrb[0].mxu0
        %1081 = vmatprep.mubr.f32.mxu0 0.0
        %1082 = vmatmul.mubr.f32.gmra.mrb[0].mxu0 %v968
        %v1083 = vpop.f32.mrb[0].mxu0
        %v1084 = vadd.f32 0.0, %v1083
        %v1085 = vpop.f32.mrb[0].mxu0
        %1086 = vmatprep.mubr.f32.mxu0 0.0
        %1087 = vmatmul.mubr.f32.gmra.mrb[0].mxu0 %v971
        %v1088 = vpop.f32.mrb[0].mxu0
        %v1089 = vadd.f32 0.0, %v1088
        %v1090 = vpop.f32.mrb[0].mxu0
        %1091 = vmatprep.mubr.f32.mxu0 0.0
        %1092 = vmatmul.mubr.f32.gmra.mrb[0].mxu0 %v974
        %v1093 = vpop.f32.mrb[0].mxu0
        %v1094 = vadd.f32 0.0, %v1093
        %v1095 = vpop.f32.mrb[0].mxu0
        %1096 = vmatprep.mubr.f32.mxu0 0.0
        %1097 = vmatmul.mubr.f32.gmra.mrb[0].mxu0 %v977
        %v1098 = vpop.f32.mrb[0].mxu0
        %v1099 = vadd.f32 0.0, %v1098
        %v1100 = vpop.f32.mrb[0].mxu0
        %1101 = vmatprep.mubr.f32.mxu0 0.0
        %1102 = vmatmul.mubr.f32.gmra.mrb[0].mxu0 %v980
        %v1103 = vpop.f32.mrb[0].mxu0
        %v1104 = vadd.f32 0.0, %v1103
        %v1105 = vpop.f32.mrb[0].mxu0
        %1106 = vmatprep.mubr.f32.mxu0 0.0
        %1107 = vmatmul.mubr.f32.gmra.mrb[0].mxu0 %v983
        %v1108 = vpop.f32.mrb[0].mxu0
        %v1109 = vadd.f32 0.0, %v1108
        %v1110 = vpop.f32.mrb[0].mxu0
        %1111 = vmatprep.mubr.f32.mxu0 0.0
        %1112 = vmatmul.mubr.f32.gmra.mrb[0].mxu0 %v986
        %v1113 = vpop.f32.mrb[0].mxu0
        %v1114 = vadd.f32 0.0, %v1113
        %v1115 = vpop.f32.mrb[0].mxu0
        %1116 = vmatprep.mubr.f32.mxu0 0.0
        %1117 = vmatmul.mubr.f32.gmra.mrb[0].mxu0 %v989
        %v1118 = vpop.f32.mrb[0].mxu0
        %v1119 = vadd.f32 0.0, %v1118
        %v1120 = vpop.f32.mrb[0].mxu0
        %1121 = vmatprep.mubr.f32.mxu0 0.0
        %1122 = vmatmul.mubr.f32.gmra.mrb[0].mxu0 %v992
        %v1123 = vpop.f32.mrb[0].mxu0
        %v1124 = vadd.f32 0.0, %v1123
        %v1125 = vpop.f32.mrb[0].mxu0
        %1126 = vmatprep.mubr.f32.mxu0 0.0
        %1127 = vmatmul.mubr.f32.gmra.mrb[0].mxu0 %v995
        %v1128 = vpop.f32.mrb[0].mxu0
        %v1129 = vadd.f32 0.0, %v1128
        %v1130 = vpop.f32.mrb[0].mxu0
        %1131 = vmatprep.mubr.f32.mxu0 0.0
        %1132 = vmatmul.mubr.f32.gmra.mrb[0].mxu0 %v998
        %v1133 = vpop.f32.mrb[0].mxu0
        %v1134 = vadd.f32 0.0, %v1133
        %v1135 = vpop.f32.mrb[0].mxu0
        %1136 = vmatprep.mubr.f32.mxu0 0.0
        %1137 = vmatmul.mubr.f32.gmra.mrb[0].mxu0 %v1001
        %v1138 = vpop.f32.mrb[0].mxu0
        %v1139 = vadd.f32 0.0, %v1138
        %v1140 = vpop.f32.mrb[0].mxu0
        %1141 = vmatprep.mubr.f32.mxu0 0.0
        %1142 = vmatmul.mubr.f32.gmra.mrb[0].mxu0 %v1004
        %v1143 = vpop.f32.mrb[0].mxu0
        %v1144 = vadd.f32 0.0, %v1143
        %v1145 = vpop.f32.mrb[0].mxu0
        %1146 = vmatprep.mubr.f32.mxu0 0.0
        %1147 = vmatmul.mubr.f32.gmra.mrb[0].mxu0 %v1007
        %v1148 = vpop.f32.mrb[0].mxu0
        %v1149 = vadd.f32 0.0, %v1148
        %v1150 = vpop.f32.mrb[0].mxu0
        %1151 = vmatprep.mubr.f32.mxu0 0.0
        %1152 = vmatmul.mubr.f32.gmra.mrb[0].mxu0 %v1010
        %v1153 = vpop.f32.mrb[0].mxu0
        %v1154 = vadd.f32 0.0, %v1153
        %v1155 = vpop.f32.mrb[0].mxu0
        %1156 = vdwg.mxu0
        %v1157 = vadd.f32 %v868, %v1079
        %v1158 = vadd.f32 %v873, %v1084
        %v1159 = vadd.f32 %v878, %v1089
        %v1160 = vadd.f32 %v883, %v1094
        %v1161 = vadd.f32 %v888, %v1099
        %v1162 = vadd.f32 %v893, %v1104
        %v1163 = vadd.f32 %v898, %v1109
        %v1164 = vadd.f32 %v903, %v1114
        %v1165 = vadd.f32 %v908, %v1119
        %v1166 = vadd.f32 %v913, %v1124
        %v1167 = vadd.f32 %v918, %v1129
        %v1168 = vadd.f32 %v923, %v1134
        %v1169 = vadd.f32 %v928, %v1139
        %v1170 = vadd.f32 %v933, %v1144
        %v1171 = vadd.f32 %v938, %v1149
        %v1172 = vadd.f32 %v943, %v1154
        %s1173 = scalar_lea.vmem [#allocation2], 16
        %v1174 = vld [vmem:[%s1173] sm:$0xff]
        %v1175 = vld [vmem:[%s1173 + $0x8] sm:$0xff]
        %v1176 = vld [vmem:[%s1173 + $0x10] sm:$0xff]
        %v1177 = vld [vmem:[%s1173 + $0x18] sm:$0xff]
        %v1178 = vld [vmem:[%s1173 + $0x20] sm:$0xff]
        %v1179 = vld [vmem:[%s1173 + $0x28] sm:$0xff]
        %v1180 = vld [vmem:[%s1173 + $0x30] sm:$0xff]
        %v1181 = vld [vmem:[%s1173 + $0x38] sm:$0xff]
        %v1182 = vld [vmem:[%s1173 + $0x40] sm:$0xff]
        %v1183 = vld [vmem:[%s1173 + $0x48] sm:$0xff]
        %v1184 = vld [vmem:[%s1173 + $0x50] sm:$0xff]
        %v1185 = vld [vmem:[%s1173 + $0x58] sm:$0xff]
        %v1186 = vld [vmem:[%s1173 + $0x60] sm:$0xff]
        %v1187 = vld [vmem:[%s1173 + $0x68] sm:$0xff]
        %v1188 = vld [vmem:[%s1173 + $0x70] sm:$0xff]
        %v1189 = vld [vmem:[%s1173 + $0x78] sm:$0xff]
        %s1190 = scalar_lea.vmem %s1, 24
        %v1191 = vld [vmem:[%s1190] sm:$0xff]
        %v1193 = vsel %vm340, %v1174, 0
        %v1196 = vsel %vm340, %v1175, 0
        %v1199 = vsel %vm340, %v1176, 0
        %v1202 = vsel %vm340, %v1177, 0
        %v1205 = vsel %vm340, %v1178, 0
        %v1208 = vsel %vm340, %v1179, 0
        %v1211 = vsel %vm340, %v1180, 0
        %v1214 = vsel %vm340, %v1181, 0
        %v1217 = vsel %vm340, %v1182, 0
        %v1220 = vsel %vm340, %v1183, 0
        %v1223 = vsel %vm340, %v1184, 0
        %v1226 = vsel %vm340, %v1185, 0
        %v1229 = vsel %vm340, %v1186, 0
        %v1232 = vsel %vm340, %v1187, 0
        %v1235 = vsel %vm340, %v1188, 0
        %v1238 = vsel %vm340, %v1189, 0
        %1240 = vmatprep.subr.mxu0 0.0
        %1241 = vmatpush1.msra.mxu0 %v1191
        %1242 = vmatprep.subr.mxu0 0.0
        %1243 = vmatpush1.msra.mxu0 0.0
        %1244 = vmatprep.subr.mxu0 0.0
        %1245 = vmatpush1.msra.mxu0 0.0
        %1246 = vmatprep.subr.mxu0 0.0
        %1247 = vmatpush1.msra.mxu0 0.0
        %1248 = vmatprep.subr.mxu0 0.0
        %1249 = vmatpush1.msra.mxu0 0.0
        %1250 = vmatprep.subr.mxu0 0.0
        %1251 = vmatpush1.msra.mxu0 0.0
        %1252 = vmatprep.subr.mxu0 0.0
        %1253 = vmatpush1.msra.mxu0 0.0
        %1254 = vmatprep.subr.mxu0 0.0
        %1255 = vmatpush1.msra.mxu0 0.0
        %1256 = vmatprep.subr.mxu0 0.0
        %1257 = vmatpush1.msra.mxu0 0.0
        %1258 = vmatprep.subr.mxu0 0.0
        %1259 = vmatpush1.msra.mxu0 0.0
        %1260 = vmatprep.subr.mxu0 0.0
        %1261 = vmatpush1.msra.mxu0 0.0
        %1262 = vmatprep.subr.mxu0 0.0
        %1263 = vmatpush1.msra.mxu0 0.0
        %1264 = vmatprep.subr.mxu0 0.0
        %1265 = vmatpush1.msra.mxu0 0.0
        %1266 = vmatprep.subr.mxu0 0.0
        %1267 = vmatpush1.msra.mxu0 0.0
        %1268 = vmatprep.subr.mxu0 0.0
        %1269 = vmatpush1.msra.mxu0 0.0
        %1270 = vmatprep.subr.mxu0 0.0
        %1271 = vmatpush1.msra.mxu0 0.0
        %1272 = vmatprep.subr.mxu0 0.0
        %1273 = vmatpush1.msra.mxu0 0.0
        %1274 = vmatprep.subr.mxu0 0.0
        %1275 = vmatpush1.msra.mxu0 0.0
        %1276 = vmatprep.subr.mxu0 0.0
        %1277 = vmatpush1.msra.mxu0 0.0
        %1278 = vmatprep.subr.mxu0 0.0
        %1279 = vmatpush1.msra.mxu0 0.0
        %1280 = vmatprep.subr.mxu0 0.0
        %1281 = vmatpush1.msra.mxu0 0.0
        %1282 = vmatprep.subr.mxu0 0.0
        %1283 = vmatpush1.msra.mxu0 0.0
        %1284 = vmatprep.subr.mxu0 0.0
        %1285 = vmatpush1.msra.mxu0 0.0
        %1286 = vmatprep.subr.mxu0 0.0
        %1287 = vmatpush1.msra.mxu0 0.0
        %1288 = vmatprep.subr.mxu0 0.0
        %1289 = vmatpush1.msra.mxu0 0.0
        %1290 = vmatprep.subr.mxu0 0.0
        %1291 = vmatpush1.msra.mxu0 0.0
        %1292 = vmatprep.subr.mxu0 0.0
        %1293 = vmatpush1.msra.mxu0 0.0
        %1294 = vmatprep.subr.mxu0 0.0
        %1295 = vmatpush1.msra.mxu0 0.0
        %1296 = vmatprep.subr.mxu0 0.0
        %1297 = vmatpush1.msra.mxu0 0.0
        %1298 = vmatprep.subr.mxu0 0.0
        %1299 = vmatpush1.msra.mxu0 0.0
        %1300 = vmatprep.subr.mxu0 0.0
        %1301 = vmatpush1.msra.mxu0 0.0
        %1302 = vmatprep.subr.mxu0 0.0
        %1303 = vmatpush1.msra.mxu0 0.0
        %1304 = vmatprep.mubr.f32.mxu0 0.0
        %1305 = vmatmul.mubr.f32.gmra.mrb[0].mxu0 %v1193
        %v1306 = vpop.f32.mrb[0].mxu0
        %v1307 = vadd.f32 0.0, %v1306
        %v1308 = vpop.f32.mrb[0].mxu0
        %1309 = vmatprep.mubr.f32.mxu0 0.0
        %1310 = vmatmul.mubr.f32.gmra.mrb[0].mxu0 %v1196
        %v1311 = vpop.f32.mrb[0].mxu0
        %v1312 = vadd.f32 0.0, %v1311
        %v1313 = vpop.f32.mrb[0].mxu0
        %1314 = vmatprep.mubr.f32.mxu0 0.0
        %1315 = vmatmul.mubr.f32.gmra.mrb[0].mxu0 %v1199
        %v1316 = vpop.f32.mrb[0].mxu0
        %v1317 = vadd.f32 0.0, %v1316
        %v1318 = vpop.f32.mrb[0].mxu0
        %1319 = vmatprep.mubr.f32.mxu0 0.0
        %1320 = vmatmul.mubr.f32.gmra.mrb[0].mxu0 %v1202
        %v1321 = vpop.f32.mrb[0].mxu0
        %v1322 = vadd.f32 0.0, %v1321
        %v1323 = vpop.f32.mrb[0].mxu0
        %1324 = vmatprep.mubr.f32.mxu0 0.0
        %1325 = vmatmul.mubr.f32.gmra.mrb[0].mxu0 %v1205
        %v1326 = vpop.f32.mrb[0].mxu0
        %v1327 = vadd.f32 0.0, %v1326
        %v1328 = vpop.f32.mrb[0].mxu0
        %1329 = vmatprep.mubr.f32.mxu0 0.0
        %1330 = vmatmul.mubr.f32.gmra.mrb[0].mxu0 %v1208
        %v1331 = vpop.f32.mrb[0].mxu0
        %v1332 = vadd.f32 0.0, %v1331
        %v1333 = vpop.f32.mrb[0].mxu0
        %1334 = vmatprep.mubr.f32.mxu0 0.0
        %1335 = vmatmul.mubr.f32.gmra.mrb[0].mxu0 %v1211
        %v1336 = vpop.f32.mrb[0].mxu0
        %v1337 = vadd.f32 0.0, %v1336
        %v1338 = vpop.f32.mrb[0].mxu0
        %1339 = vmatprep.mubr.f32.mxu0 0.0
        %1340 = vmatmul.mubr.f32.gmra.mrb[0].mxu0 %v1214
        %v1341 = vpop.f32.mrb[0].mxu0
        %v1342 = vadd.f32 0.0, %v1341
        %v1343 = vpop.f32.mrb[0].mxu0
        %1344 = vmatprep.mubr.f32.mxu0 0.0
        %1345 = vmatmul.mubr.f32.gmra.mrb[0].mxu0 %v1217
        %v1346 = vpop.f32.mrb[0].mxu0
        %v1347 = vadd.f32 0.0, %v1346
        %v1348 = vpop.f32.mrb[0].mxu0
        %1349 = vmatprep.mubr.f32.mxu0 0.0
        %1350 = vmatmul.mubr.f32.gmra.mrb[0].mxu0 %v1220
        %v1351 = vpop.f32.mrb[0].mxu0
        %v1352 = vadd.f32 0.0, %v1351
        %v1353 = vpop.f32.mrb[0].mxu0
        %1354 = vmatprep.mubr.f32.mxu0 0.0
        %1355 = vmatmul.mubr.f32.gmra.mrb[0].mxu0 %v1223
        %v1356 = vpop.f32.mrb[0].mxu0
        %v1357 = vadd.f32 0.0, %v1356
        %v1358 = vpop.f32.mrb[0].mxu0
        %1359 = vmatprep.mubr.f32.mxu0 0.0
        %1360 = vmatmul.mubr.f32.gmra.mrb[0].mxu0 %v1226
        %v1361 = vpop.f32.mrb[0].mxu0
        %v1362 = vadd.f32 0.0, %v1361
        %v1363 = vpop.f32.mrb[0].mxu0
        %1364 = vmatprep.mubr.f32.mxu0 0.0
        %1365 = vmatmul.mubr.f32.gmra.mrb[0].mxu0 %v1229
        %v1366 = vpop.f32.mrb[0].mxu0
        %v1367 = vadd.f32 0.0, %v1366
        %v1368 = vpop.f32.mrb[0].mxu0
        %1369 = vmatprep.mubr.f32.mxu0 0.0
        %1370 = vmatmul.mubr.f32.gmra.mrb[0].mxu0 %v1232
        %v1371 = vpop.f32.mrb[0].mxu0
        %v1372 = vadd.f32 0.0, %v1371
        %v1373 = vpop.f32.mrb[0].mxu0
        %1374 = vmatprep.mubr.f32.mxu0 0.0
        %1375 = vmatmul.mubr.f32.gmra.mrb[0].mxu0 %v1235
        %v1376 = vpop.f32.mrb[0].mxu0
        %v1377 = vadd.f32 0.0, %v1376
        %v1378 = vpop.f32.mrb[0].mxu0
        %1379 = vmatprep.mubr.f32.mxu0 0.0
        %1380 = vmatmul.mubr.f32.gmra.mrb[0].mxu0 %v1238
        %v1381 = vpop.f32.mrb[0].mxu0
        %v1382 = vadd.f32 0.0, %v1381
        %v1383 = vpop.f32.mrb[0].mxu0
        %1384 = vdwg.mxu0
        %v1385 = vadd.f32 %v1157, %v1307
        %v1386 = vadd.f32 %v1158, %v1312
        %v1387 = vadd.f32 %v1159, %v1317
        %v1388 = vadd.f32 %v1160, %v1322
        %v1389 = vadd.f32 %v1161, %v1327
        %v1390 = vadd.f32 %v1162, %v1332
        %v1391 = vadd.f32 %v1163, %v1337
        %v1392 = vadd.f32 %v1164, %v1342
        %v1393 = vadd.f32 %v1165, %v1347
        %v1394 = vadd.f32 %v1166, %v1352
        %v1395 = vadd.f32 %v1167, %v1357
        %v1396 = vadd.f32 %v1168, %v1362
        %v1397 = vadd.f32 %v1169, %v1367
        %v1398 = vadd.f32 %v1170, %v1372
        %v1399 = vadd.f32 %v1171, %v1377
        %v1400 = vadd.f32 %v1172, %v1382
        %s1401 = scalar_lea.vmem [#allocation2], 304
        %v1402 = vld [vmem:[%s1401] sm:$0xff]
        %v1403 = vld [vmem:[%s1401 + $0x8] sm:$0xff]
        %v1404 = vld [vmem:[%s1401 + $0x10] sm:$0xff]
        %v1405 = vld [vmem:[%s1401 + $0x18] sm:$0xff]
        %v1406 = vld [vmem:[%s1401 + $0x20] sm:$0xff]
        %v1407 = vld [vmem:[%s1401 + $0x28] sm:$0xff]
        %v1408 = vld [vmem:[%s1401 + $0x30] sm:$0xff]
        %v1409 = vld [vmem:[%s1401 + $0x38] sm:$0xff]
        %v1410 = vld [vmem:[%s1401 + $0x40] sm:$0xff]
        %v1411 = vld [vmem:[%s1401 + $0x48] sm:$0xff]
        %v1412 = vld [vmem:[%s1401 + $0x50] sm:$0xff]
        %v1413 = vld [vmem:[%s1401 + $0x58] sm:$0xff]
        %v1414 = vld [vmem:[%s1401 + $0x60] sm:$0xff]
        %v1415 = vld [vmem:[%s1401 + $0x68] sm:$0xff]
        %v1416 = vld [vmem:[%s1401 + $0x70] sm:$0xff]
        %v1417 = vld [vmem:[%s1401 + $0x78] sm:$0xff]
        %s1418 = scalar_lea.vmem %s1, 32
        %v1419 = vld [vmem:[%s1418] sm:$0xff]
        %v1421 = vsel %vm340, %v1402, 0
        %v1424 = vsel %vm340, %v1403, 0
        %v1427 = vsel %vm340, %v1404, 0
        %v1430 = vsel %vm340, %v1405, 0
        %v1433 = vsel %vm340, %v1406, 0
        %v1436 = vsel %vm340, %v1407, 0
        %v1439 = vsel %vm340, %v1408, 0
        %v1442 = vsel %vm340, %v1409, 0
        %v1445 = vsel %vm340, %v1410, 0
        %v1448 = vsel %vm340, %v1411, 0
        %v1451 = vsel %vm340, %v1412, 0
        %v1454 = vsel %vm340, %v1413, 0
        %v1457 = vsel %vm340, %v1414, 0
        %v1460 = vsel %vm340, %v1415, 0
        %v1463 = vsel %vm340, %v1416, 0
        %v1466 = vsel %vm340, %v1417, 0
        %1468 = vmatprep.subr.mxu0 0.0
        %1469 = vmatpush1.msra.mxu0 %v1419
        %1470 = vmatprep.subr.mxu0 0.0
        %1471 = vmatpush1.msra.mxu0 0.0
        %1472 = vmatprep.subr.mxu0 0.0
        %1473 = vmatpush1.msra.mxu0 0.0
        %1474 = vmatprep.subr.mxu0 0.0
        %1475 = vmatpush1.msra.mxu0 0.0
        %1476 = vmatprep.subr.mxu0 0.0
        %1477 = vmatpush1.msra.mxu0 0.0
        %1478 = vmatprep.subr.mxu0 0.0
        %1479 = vmatpush1.msra.mxu0 0.0
        %1480 = vmatprep.subr.mxu0 0.0
        %1481 = vmatpush1.msra.mxu0 0.0
        %1482 = vmatprep.subr.mxu0 0.0
        %1483 = vmatpush1.msra.mxu0 0.0
        %1484 = vmatprep.subr.mxu0 0.0
        %1485 = vmatpush1.msra.mxu0 0.0
        %1486 = vmatprep.subr.mxu0 0.0
        %1487 = vmatpush1.msra.mxu0 0.0
        %1488 = vmatprep.subr.mxu0 0.0
        %1489 = vmatpush1.msra.mxu0 0.0
        %1490 = vmatprep.subr.mxu0 0.0
        %1491 = vmatpush1.msra.mxu0 0.0
        %1492 = vmatprep.subr.mxu0 0.0
        %1493 = vmatpush1.msra.mxu0 0.0
        %1494 = vmatprep.subr.mxu0 0.0
        %1495 = vmatpush1.msra.mxu0 0.0
        %1496 = vmatprep.subr.mxu0 0.0
        %1497 = vmatpush1.msra.mxu0 0.0
        %1498 = vmatprep.subr.mxu0 0.0
        %1499 = vmatpush1.msra.mxu0 0.0
        %1500 = vmatprep.subr.mxu0 0.0
        %1501 = vmatpush1.msra.mxu0 0.0
        %1502 = vmatprep.subr.mxu0 0.0
        %1503 = vmatpush1.msra.mxu0 0.0
        %1504 = vmatprep.subr.mxu0 0.0
        %1505 = vmatpush1.msra.mxu0 0.0
        %1506 = vmatprep.subr.mxu0 0.0
        %1507 = vmatpush1.msra.mxu0 0.0
        %1508 = vmatprep.subr.mxu0 0.0
        %1509 = vmatpush1.msra.mxu0 0.0
        %1510 = vmatprep.subr.mxu0 0.0
        %1511 = vmatpush1.msra.mxu0 0.0
        %1512 = vmatprep.subr.mxu0 0.0
        %1513 = vmatpush1.msra.mxu0 0.0
        %1514 = vmatprep.subr.mxu0 0.0
        %1515 = vmatpush1.msra.mxu0 0.0
        %1516 = vmatprep.subr.mxu0 0.0
        %1517 = vmatpush1.msra.mxu0 0.0
        %1518 = vmatprep.subr.mxu0 0.0
        %1519 = vmatpush1.msra.mxu0 0.0
        %1520 = vmatprep.subr.mxu0 0.0
        %1521 = vmatpush1.msra.mxu0 0.0
        %1522 = vmatprep.subr.mxu0 0.0
        %1523 = vmatpush1.msra.mxu0 0.0
        %1524 = vmatprep.subr.mxu0 0.0
        %1525 = vmatpush1.msra.mxu0 0.0
        %1526 = vmatprep.subr.mxu0 0.0
        %1527 = vmatpush1.msra.mxu0 0.0
        %1528 = vmatprep.subr.mxu0 0.0
        %1529 = vmatpush1.msra.mxu0 0.0
        %1530 = vmatprep.subr.mxu0 0.0
        %1531 = vmatpush1.msra.mxu0 0.0
        %1532 = vmatprep.mubr.f32.mxu0 0.0
        %1533 = vmatmul.mubr.f32.gmra.mrb[0].mxu0 %v1421
        %v1534 = vpop.f32.mrb[0].mxu0
        %v1535 = vadd.f32 0.0, %v1534
        %v1536 = vpop.f32.mrb[0].mxu0
        %1537 = vmatprep.mubr.f32.mxu0 0.0
        %1538 = vmatmul.mubr.f32.gmra.mrb[0].mxu0 %v1424
        %v1539 = vpop.f32.mrb[0].mxu0
        %v1540 = vadd.f32 0.0, %v1539
        %v1541 = vpop.f32.mrb[0].mxu0
        %1542 = vmatprep.mubr.f32.mxu0 0.0
        %1543 = vmatmul.mubr.f32.gmra.mrb[0].mxu0 %v1427
        %v1544 = vpop.f32.mrb[0].mxu0
        %v1545 = vadd.f32 0.0, %v1544
        %v1546 = vpop.f32.mrb[0].mxu0
        %1547 = vmatprep.mubr.f32.mxu0 0.0
        %1548 = vmatmul.mubr.f32.gmra.mrb[0].mxu0 %v1430
        %v1549 = vpop.f32.mrb[0].mxu0
        %v1550 = vadd.f32 0.0, %v1549
        %v1551 = vpop.f32.mrb[0].mxu0
        %1552 = vmatprep.mubr.f32.mxu0 0.0
        %1553 = vmatmul.mubr.f32.gmra.mrb[0].mxu0 %v1433
        %v1554 = vpop.f32.mrb[0].mxu0
        %v1555 = vadd.f32 0.0, %v1554
        %v1556 = vpop.f32.mrb[0].mxu0
        %1557 = vmatprep.mubr.f32.mxu0 0.0
        %1558 = vmatmul.mubr.f32.gmra.mrb[0].mxu0 %v1436
        %v1559 = vpop.f32.mrb[0].mxu0
        %v1560 = vadd.f32 0.0, %v1559
        %v1561 = vpop.f32.mrb[0].mxu0
        %1562 = vmatprep.mubr.f32.mxu0 0.0
        %1563 = vmatmul.mubr.f32.gmra.mrb[0].mxu0 %v1439
        %v1564 = vpop.f32.mrb[0].mxu0
        %v1565 = vadd.f32 0.0, %v1564
        %v1566 = vpop.f32.mrb[0].mxu0
        %1567 = vmatprep.mubr.f32.mxu0 0.0
        %1568 = vmatmul.mubr.f32.gmra.mrb[0].mxu0 %v1442
        %v1569 = vpop.f32.mrb[0].mxu0
        %v1570 = vadd.f32 0.0, %v1569
        %v1571 = vpop.f32.mrb[0].mxu0
        %1572 = vmatprep.mubr.f32.mxu0 0.0
        %1573 = vmatmul.mubr.f32.gmra.mrb[0].mxu0 %v1445
        %v1574 = vpop.f32.mrb[0].mxu0
        %v1575 = vadd.f32 0.0, %v1574
        %v1576 = vpop.f32.mrb[0].mxu0
        %1577 = vmatprep.mubr.f32.mxu0 0.0
        %1578 = vmatmul.mubr.f32.gmra.mrb[0].mxu0 %v1448
        %v1579 = vpop.f32.mrb[0].mxu0
        %v1580 = vadd.f32 0.0, %v1579
        %v1581 = vpop.f32.mrb[0].mxu0
        %1582 = vmatprep.mubr.f32.mxu0 0.0
        %1583 = vmatmul.mubr.f32.gmra.mrb[0].mxu0 %v1451
        %v1584 = vpop.f32.mrb[0].mxu0
        %v1585 = vadd.f32 0.0, %v1584
        %v1586 = vpop.f32.mrb[0].mxu0
        %1587 = vmatprep.mubr.f32.mxu0 0.0
        %1588 = vmatmul.mubr.f32.gmra.mrb[0].mxu0 %v1454
        %v1589 = vpop.f32.mrb[0].mxu0
        %v1590 = vadd.f32 0.0, %v1589
        %v1591 = vpop.f32.mrb[0].mxu0
        %1592 = vmatprep.mubr.f32.mxu0 0.0
        %1593 = vmatmul.mubr.f32.gmra.mrb[0].mxu0 %v1457
        %v1594 = vpop.f32.mrb[0].mxu0
        %v1595 = vadd.f32 0.0, %v1594
        %v1596 = vpop.f32.mrb[0].mxu0
        %1597 = vmatprep.mubr.f32.mxu0 0.0
        %1598 = vmatmul.mubr.f32.gmra.mrb[0].mxu0 %v1460
        %v1599 = vpop.f32.mrb[0].mxu0
        %v1600 = vadd.f32 0.0, %v1599
        %v1601 = vpop.f32.mrb[0].mxu0
        %1602 = vmatprep.mubr.f32.mxu0 0.0
        %1603 = vmatmul.mubr.f32.gmra.mrb[0].mxu0 %v1463
        %v1604 = vpop.f32.mrb[0].mxu0
        %v1605 = vadd.f32 0.0, %v1604
        %v1606 = vpop.f32.mrb[0].mxu0
        %1607 = vmatprep.mubr.f32.mxu0 0.0
        %1608 = vmatmul.mubr.f32.gmra.mrb[0].mxu0 %v1466
        %v1609 = vpop.f32.mrb[0].mxu0
        %v1610 = vadd.f32 0.0, %v1609
        %v1611 = vpop.f32.mrb[0].mxu0
        %1612 = vdwg.mxu0
        %v1613 = vadd.f32 %v1385, %v1535
        %v1614 = vadd.f32 %v1386, %v1540
        %v1615 = vadd.f32 %v1387, %v1545
        %v1616 = vadd.f32 %v1388, %v1550
        %v1617 = vadd.f32 %v1389, %v1555
        %v1618 = vadd.f32 %v1390, %v1560
        %v1619 = vadd.f32 %v1391, %v1565
        %v1620 = vadd.f32 %v1392, %v1570
        %v1621 = vadd.f32 %v1393, %v1575
        %v1622 = vadd.f32 %v1394, %v1580
        %v1623 = vadd.f32 %v1395, %v1585
        %v1624 = vadd.f32 %v1396, %v1590
        %v1625 = vadd.f32 %v1397, %v1595
        %v1626 = vadd.f32 %v1398, %v1600
        %v1627 = vadd.f32 %v1399, %v1605
        %v1628 = vadd.f32 %v1400, %v1610
        %s1629 = scalar_lea.vmem [#allocation2], 592
        %v1630 = vld [vmem:[%s1629] sm:$0xff]
        %v1631 = vld [vmem:[%s1629 + $0x8] sm:$0xff]
        %v1632 = vld [vmem:[%s1629 + $0x10] sm:$0xff]
        %v1633 = vld [vmem:[%s1629 + $0x18] sm:$0xff]
        %v1634 = vld [vmem:[%s1629 + $0x20] sm:$0xff]
        %v1635 = vld [vmem:[%s1629 + $0x28] sm:$0xff]
        %v1636 = vld [vmem:[%s1629 + $0x30] sm:$0xff]
        %v1637 = vld [vmem:[%s1629 + $0x38] sm:$0xff]
        %v1638 = vld [vmem:[%s1629 + $0x40] sm:$0xff]
        %v1639 = vld [vmem:[%s1629 + $0x48] sm:$0xff]
        %v1640 = vld [vmem:[%s1629 + $0x50] sm:$0xff]
        %v1641 = vld [vmem:[%s1629 + $0x58] sm:$0xff]
        %v1642 = vld [vmem:[%s1629 + $0x60] sm:$0xff]
        %v1643 = vld [vmem:[%s1629 + $0x68] sm:$0xff]
        %v1644 = vld [vmem:[%s1629 + $0x70] sm:$0xff]
        %v1645 = vld [vmem:[%s1629 + $0x78] sm:$0xff]
        %s1646 = scalar_lea.vmem %s1, 40
        %v1647 = vld [vmem:[%s1646] sm:$0xff]
        %v1649 = vsel %vm340, %v1630, 0
        %v1652 = vsel %vm340, %v1631, 0
        %v1655 = vsel %vm340, %v1632, 0
        %v1658 = vsel %vm340, %v1633, 0
        %v1661 = vsel %vm340, %v1634, 0
        %v1664 = vsel %vm340, %v1635, 0
        %v1667 = vsel %vm340, %v1636, 0
        %v1670 = vsel %vm340, %v1637, 0
        %v1673 = vsel %vm340, %v1638, 0
        %v1676 = vsel %vm340, %v1639, 0
        %v1679 = vsel %vm340, %v1640, 0
        %v1682 = vsel %vm340, %v1641, 0
        %v1685 = vsel %vm340, %v1642, 0
        %v1688 = vsel %vm340, %v1643, 0
        %v1691 = vsel %vm340, %v1644, 0
        %v1694 = vsel %vm340, %v1645, 0
        %1696 = vmatprep.subr.mxu0 0.0
        %1697 = vmatpush1.msra.mxu0 %v1647
        %1698 = vmatprep.subr.mxu0 0.0
        %1699 = vmatpush1.msra.mxu0 0.0
        %1700 = vmatprep.subr.mxu0 0.0
        %1701 = vmatpush1.msra.mxu0 0.0
        %1702 = vmatprep.subr.mxu0 0.0
        %1703 = vmatpush1.msra.mxu0 0.0
        %1704 = vmatprep.subr.mxu0 0.0
        %1705 = vmatpush1.msra.mxu0 0.0
        %1706 = vmatprep.subr.mxu0 0.0
        %1707 = vmatpush1.msra.mxu0 0.0
        %1708 = vmatprep.subr.mxu0 0.0
        %1709 = vmatpush1.msra.mxu0 0.0
        %1710 = vmatprep.subr.mxu0 0.0
        %1711 = vmatpush1.msra.mxu0 0.0
        %1712 = vmatprep.subr.mxu0 0.0
        %1713 = vmatpush1.msra.mxu0 0.0
        %1714 = vmatprep.subr.mxu0 0.0
        %1715 = vmatpush1.msra.mxu0 0.0
        %1716 = vmatprep.subr.mxu0 0.0
        %1717 = vmatpush1.msra.mxu0 0.0
        %1718 = vmatprep.subr.mxu0 0.0
        %1719 = vmatpush1.msra.mxu0 0.0
        %1720 = vmatprep.subr.mxu0 0.0
        %1721 = vmatpush1.msra.mxu0 0.0
        %1722 = vmatprep.subr.mxu0 0.0
        %1723 = vmatpush1.msra.mxu0 0.0
        %1724 = vmatprep.subr.mxu0 0.0
        %1725 = vmatpush1.msra.mxu0 0.0
        %1726 = vmatprep.subr.mxu0 0.0
        %1727 = vmatpush1.msra.mxu0 0.0
        %1728 = vmatprep.subr.mxu0 0.0
        %1729 = vmatpush1.msra.mxu0 0.0
        %1730 = vmatprep.subr.mxu0 0.0
        %1731 = vmatpush1.msra.mxu0 0.0
        %1732 = vmatprep.subr.mxu0 0.0
        %1733 = vmatpush1.msra.mxu0 0.0
        %1734 = vmatprep.subr.mxu0 0.0
        %1735 = vmatpush1.msra.mxu0 0.0
        %1736 = vmatprep.subr.mxu0 0.0
        %1737 = vmatpush1.msra.mxu0 0.0
        %1738 = vmatprep.subr.mxu0 0.0
        %1739 = vmatpush1.msra.mxu0 0.0
        %1740 = vmatprep.subr.mxu0 0.0
        %1741 = vmatpush1.msra.mxu0 0.0
        %1742 = vmatprep.subr.mxu0 0.0
        %1743 = vmatpush1.msra.mxu0 0.0
        %1744 = vmatprep.subr.mxu0 0.0
        %1745 = vmatpush1.msra.mxu0 0.0
        %1746 = vmatprep.subr.mxu0 0.0
        %1747 = vmatpush1.msra.mxu0 0.0
        %1748 = vmatprep.subr.mxu0 0.0
        %1749 = vmatpush1.msra.mxu0 0.0
        %1750 = vmatprep.subr.mxu0 0.0
        %1751 = vmatpush1.msra.mxu0 0.0
        %1752 = vmatprep.subr.mxu0 0.0
        %1753 = vmatpush1.msra.mxu0 0.0
        %1754 = vmatprep.subr.mxu0 0.0
        %1755 = vmatpush1.msra.mxu0 0.0
        %1756 = vmatprep.subr.mxu0 0.0
        %1757 = vmatpush1.msra.mxu0 0.0
        %1758 = vmatprep.subr.mxu0 0.0
        %1759 = vmatpush1.msra.mxu0 0.0
        %1760 = vmatprep.mubr.f32.mxu0 0.0
        %1761 = vmatmul.mubr.f32.gmra.mrb[0].mxu0 %v1649
        %v1762 = vpop.f32.mrb[0].mxu0
        %v1763 = vadd.f32 0.0, %v1762
        %v1764 = vpop.f32.mrb[0].mxu0
        %1765 = vmatprep.mubr.f32.mxu0 0.0
        %1766 = vmatmul.mubr.f32.gmra.mrb[0].mxu0 %v1652
        %v1767 = vpop.f32.mrb[0].mxu0
        %v1768 = vadd.f32 0.0, %v1767
        %v1769 = vpop.f32.mrb[0].mxu0
        %1770 = vmatprep.mubr.f32.mxu0 0.0
        %1771 = vmatmul.mubr.f32.gmra.mrb[0].mxu0 %v1655
        %v1772 = vpop.f32.mrb[0].mxu0
        %v1773 = vadd.f32 0.0, %v1772
        %v1774 = vpop.f32.mrb[0].mxu0
        %1775 = vmatprep.mubr.f32.mxu0 0.0
        %1776 = vmatmul.mubr.f32.gmra.mrb[0].mxu0 %v1658
        %v1777 = vpop.f32.mrb[0].mxu0
        %v1778 = vadd.f32 0.0, %v1777
        %v1779 = vpop.f32.mrb[0].mxu0
        %1780 = vmatprep.mubr.f32.mxu0 0.0
        %1781 = vmatmul.mubr.f32.gmra.mrb[0].mxu0 %v1661
        %v1782 = vpop.f32.mrb[0].mxu0
        %v1783 = vadd.f32 0.0, %v1782
        %v1784 = vpop.f32.mrb[0].mxu0
        %1785 = vmatprep.mubr.f32.mxu0 0.0
        %1786 = vmatmul.mubr.f32.gmra.mrb[0].mxu0 %v1664
        %v1787 = vpop.f32.mrb[0].mxu0
        %v1788 = vadd.f32 0.0, %v1787
        %v1789 = vpop.f32.mrb[0].mxu0
        %1790 = vmatprep.mubr.f32.mxu0 0.0
        %1791 = vmatmul.mubr.f32.gmra.mrb[0].mxu0 %v1667
        %v1792 = vpop.f32.mrb[0].mxu0
        %v1793 = vadd.f32 0.0, %v1792
        %v1794 = vpop.f32.mrb[0].mxu0
        %1795 = vmatprep.mubr.f32.mxu0 0.0
        %1796 = vmatmul.mubr.f32.gmra.mrb[0].mxu0 %v1670
        %v1797 = vpop.f32.mrb[0].mxu0
        %v1798 = vadd.f32 0.0, %v1797
        %v1799 = vpop.f32.mrb[0].mxu0
        %1800 = vmatprep.mubr.f32.mxu0 0.0
        %1801 = vmatmul.mubr.f32.gmra.mrb[0].mxu0 %v1673
        %v1802 = vpop.f32.mrb[0].mxu0
        %v1803 = vadd.f32 0.0, %v1802
        %v1804 = vpop.f32.mrb[0].mxu0
        %1805 = vmatprep.mubr.f32.mxu0 0.0
        %1806 = vmatmul.mubr.f32.gmra.mrb[0].mxu0 %v1676
        %v1807 = vpop.f32.mrb[0].mxu0
        %v1808 = vadd.f32 0.0, %v1807
        %v1809 = vpop.f32.mrb[0].mxu0
        %1810 = vmatprep.mubr.f32.mxu0 0.0
        %1811 = vmatmul.mubr.f32.gmra.mrb[0].mxu0 %v1679
        %v1812 = vpop.f32.mrb[0].mxu0
        %v1813 = vadd.f32 0.0, %v1812
        %v1814 = vpop.f32.mrb[0].mxu0
        %1815 = vmatprep.mubr.f32.mxu0 0.0
        %1816 = vmatmul.mubr.f32.gmra.mrb[0].mxu0 %v1682
        %v1817 = vpop.f32.mrb[0].mxu0
        %v1818 = vadd.f32 0.0, %v1817
        %v1819 = vpop.f32.mrb[0].mxu0
        %1820 = vmatprep.mubr.f32.mxu0 0.0
        %1821 = vmatmul.mubr.f32.gmra.mrb[0].mxu0 %v1685
        %v1822 = vpop.f32.mrb[0].mxu0
        %v1823 = vadd.f32 0.0, %v1822
        %v1824 = vpop.f32.mrb[0].mxu0
        %1825 = vmatprep.mubr.f32.mxu0 0.0
        %1826 = vmatmul.mubr.f32.gmra.mrb[0].mxu0 %v1688
        %v1827 = vpop.f32.mrb[0].mxu0
        %v1828 = vadd.f32 0.0, %v1827
        %v1829 = vpop.f32.mrb[0].mxu0
        %1830 = vmatprep.mubr.f32.mxu0 0.0
        %1831 = vmatmul.mubr.f32.gmra.mrb[0].mxu0 %v1691
        %v1832 = vpop.f32.mrb[0].mxu0
        %v1833 = vadd.f32 0.0, %v1832
        %v1834 = vpop.f32.mrb[0].mxu0
        %1835 = vmatprep.mubr.f32.mxu0 0.0
        %1836 = vmatmul.mubr.f32.gmra.mrb[0].mxu0 %v1694
        %v1837 = vpop.f32.mrb[0].mxu0
        %v1838 = vadd.f32 0.0, %v1837
        %v1839 = vpop.f32.mrb[0].mxu0
        %1840 = vdwg.mxu0
        %v1841 = vadd.f32 %v1613, %v1763
        %v1842 = vadd.f32 %v1614, %v1768
        %v1843 = vadd.f32 %v1615, %v1773
        %v1844 = vadd.f32 %v1616, %v1778
        %v1845 = vadd.f32 %v1617, %v1783
        %v1846 = vadd.f32 %v1618, %v1788
        %v1847 = vadd.f32 %v1619, %v1793
        %v1848 = vadd.f32 %v1620, %v1798
        %v1849 = vadd.f32 %v1621, %v1803
        %v1850 = vadd.f32 %v1622, %v1808
        %v1851 = vadd.f32 %v1623, %v1813
        %v1852 = vadd.f32 %v1624, %v1818
        %v1853 = vadd.f32 %v1625, %v1823
        %v1854 = vadd.f32 %v1626, %v1828
        %v1855 = vadd.f32 %v1627, %v1833
        %v1856 = vadd.f32 %v1628, %v1838
        %s1857 = scalar_lea.vmem [#allocation2], 32
        %v1858 = vld [vmem:[%s1857] sm:$0xff]
        %v1859 = vld [vmem:[%s1857 + $0x8] sm:$0xff]
        %v1860 = vld [vmem:[%s1857 + $0x10] sm:$0xff]
        %v1861 = vld [vmem:[%s1857 + $0x18] sm:$0xff]
        %v1862 = vld [vmem:[%s1857 + $0x20] sm:$0xff]
        %v1863 = vld [vmem:[%s1857 + $0x28] sm:$0xff]
        %v1864 = vld [vmem:[%s1857 + $0x30] sm:$0xff]
        %v1865 = vld [vmem:[%s1857 + $0x38] sm:$0xff]
        %v1866 = vld [vmem:[%s1857 + $0x40] sm:$0xff]
        %v1867 = vld [vmem:[%s1857 + $0x48] sm:$0xff]
        %v1868 = vld [vmem:[%s1857 + $0x50] sm:$0xff]
        %v1869 = vld [vmem:[%s1857 + $0x58] sm:$0xff]
        %v1870 = vld [vmem:[%s1857 + $0x60] sm:$0xff]
        %v1871 = vld [vmem:[%s1857 + $0x68] sm:$0xff]
        %v1872 = vld [vmem:[%s1857 + $0x70] sm:$0xff]
        %v1873 = vld [vmem:[%s1857 + $0x78] sm:$0xff]
        %s1874 = scalar_lea.vmem %s1, 48
        %v1875 = vld [vmem:[%s1874] sm:$0xff]
        %v1877 = vsel %vm340, %v1858, 0
        %v1880 = vsel %vm340, %v1859, 0
        %v1883 = vsel %vm340, %v1860, 0
        %v1886 = vsel %vm340, %v1861, 0
        %v1889 = vsel %vm340, %v1862, 0
        %v1892 = vsel %vm340, %v1863, 0
        %v1895 = vsel %vm340, %v1864, 0
        %v1898 = vsel %vm340, %v1865, 0
        %v1901 = vsel %vm340, %v1866, 0
        %v1904 = vsel %vm340, %v1867, 0
        %v1907 = vsel %vm340, %v1868, 0
        %v1910 = vsel %vm340, %v1869, 0
        %v1913 = vsel %vm340, %v1870, 0
        %v1916 = vsel %vm340, %v1871, 0
        %v1919 = vsel %vm340, %v1872, 0
        %v1922 = vsel %vm340, %v1873, 0
        %1924 = vmatprep.subr.mxu0 0.0
        %1925 = vmatpush1.msra.mxu0 %v1875
        %1926 = vmatprep.subr.mxu0 0.0
        %1927 = vmatpush1.msra.mxu0 0.0
        %1928 = vmatprep.subr.mxu0 0.0
        %1929 = vmatpush1.msra.mxu0 0.0
        %1930 = vmatprep.subr.mxu0 0.0
        %1931 = vmatpush1.msra.mxu0 0.0
        %1932 = vmatprep.subr.mxu0 0.0
        %1933 = vmatpush1.msra.mxu0 0.0
        %1934 = vmatprep.subr.mxu0 0.0
        %1935 = vmatpush1.msra.mxu0 0.0
        %1936 = vmatprep.subr.mxu0 0.0
        %1937 = vmatpush1.msra.mxu0 0.0
        %1938 = vmatprep.subr.mxu0 0.0
        %1939 = vmatpush1.msra.mxu0 0.0
        %1940 = vmatprep.subr.mxu0 0.0
        %1941 = vmatpush1.msra.mxu0 0.0
        %1942 = vmatprep.subr.mxu0 0.0
        %1943 = vmatpush1.msra.mxu0 0.0
        %1944 = vmatprep.subr.mxu0 0.0
        %1945 = vmatpush1.msra.mxu0 0.0
        %1946 = vmatprep.subr.mxu0 0.0
        %1947 = vmatpush1.msra.mxu0 0.0
        %1948 = vmatprep.subr.mxu0 0.0
        %1949 = vmatpush1.msra.mxu0 0.0
        %1950 = vmatprep.subr.mxu0 0.0
        %1951 = vmatpush1.msra.mxu0 0.0
        %1952 = vmatprep.subr.mxu0 0.0
        %1953 = vmatpush1.msra.mxu0 0.0
        %1954 = vmatprep.subr.mxu0 0.0
        %1955 = vmatpush1.msra.mxu0 0.0
        %1956 = vmatprep.subr.mxu0 0.0
        %1957 = vmatpush1.msra.mxu0 0.0
        %1958 = vmatprep.subr.mxu0 0.0
        %1959 = vmatpush1.msra.mxu0 0.0
        %1960 = vmatprep.subr.mxu0 0.0
        %1961 = vmatpush1.msra.mxu0 0.0
        %1962 = vmatprep.subr.mxu0 0.0
        %1963 = vmatpush1.msra.mxu0 0.0
        %1964 = vmatprep.subr.mxu0 0.0
        %1965 = vmatpush1.msra.mxu0 0.0
        %1966 = vmatprep.subr.mxu0 0.0
        %1967 = vmatpush1.msra.mxu0 0.0
        %1968 = vmatprep.subr.mxu0 0.0
        %1969 = vmatpush1.msra.mxu0 0.0
        %1970 = vmatprep.subr.mxu0 0.0
        %1971 = vmatpush1.msra.mxu0 0.0
        %1972 = vmatprep.subr.mxu0 0.0
        %1973 = vmatpush1.msra.mxu0 0.0
        %1974 = vmatprep.subr.mxu0 0.0
        %1975 = vmatpush1.msra.mxu0 0.0
        %1976 = vmatprep.subr.mxu0 0.0
        %1977 = vmatpush1.msra.mxu0 0.0
        %1978 = vmatprep.subr.mxu0 0.0
        %1979 = vmatpush1.msra.mxu0 0.0
        %1980 = vmatprep.subr.mxu0 0.0
        %1981 = vmatpush1.msra.mxu0 0.0
        %1982 = vmatprep.subr.mxu0 0.0
        %1983 = vmatpush1.msra.mxu0 0.0
        %1984 = vmatprep.subr.mxu0 0.0
        %1985 = vmatpush1.msra.mxu0 0.0
        %1986 = vmatprep.subr.mxu0 0.0
        %1987 = vmatpush1.msra.mxu0 0.0
        %1988 = vmatprep.mubr.f32.mxu0 0.0
        %1989 = vmatmul.mubr.f32.gmra.mrb[0].mxu0 %v1877
        %v1990 = vpop.f32.mrb[0].mxu0
        %v1991 = vadd.f32 0.0, %v1990
        %v1992 = vpop.f32.mrb[0].mxu0
        %1993 = vmatprep.mubr.f32.mxu0 0.0
        %1994 = vmatmul.mubr.f32.gmra.mrb[0].mxu0 %v1880
        %v1995 = vpop.f32.mrb[0].mxu0
        %v1996 = vadd.f32 0.0, %v1995
        %v1997 = vpop.f32.mrb[0].mxu0
        %1998 = vmatprep.mubr.f32.mxu0 0.0
        %1999 = vmatmul.mubr.f32.gmra.mrb[0].mxu0 %v1883
        %v2000 = vpop.f32.mrb[0].mxu0
        %v2001 = vadd.f32 0.0, %v2000
        %v2002 = vpop.f32.mrb[0].mxu0
        %2003 = vmatprep.mubr.f32.mxu0 0.0
        %2004 = vmatmul.mubr.f32.gmra.mrb[0].mxu0 %v1886
        %v2005 = vpop.f32.mrb[0].mxu0
        %v2006 = vadd.f32 0.0, %v2005
        %v2007 = vpop.f32.mrb[0].mxu0
        %2008 = vmatprep.mubr.f32.mxu0 0.0
        %2009 = vmatmul.mubr.f32.gmra.mrb[0].mxu0 %v1889
        %v2010 = vpop.f32.mrb[0].mxu0
        %v2011 = vadd.f32 0.0, %v2010
        %v2012 = vpop.f32.mrb[0].mxu0
        %2013 = vmatprep.mubr.f32.mxu0 0.0
        %2014 = vmatmul.mubr.f32.gmra.mrb[0].mxu0 %v1892
        %v2015 = vpop.f32.mrb[0].mxu0
        %v2016 = vadd.f32 0.0, %v2015
        %v2017 = vpop.f32.mrb[0].mxu0
        %2018 = vmatprep.mubr.f32.mxu0 0.0
        %2019 = vmatmul.mubr.f32.gmra.mrb[0].mxu0 %v1895
        %v2020 = vpop.f32.mrb[0].mxu0
        %v2021 = vadd.f32 0.0, %v2020
        %v2022 = vpop.f32.mrb[0].mxu0
        %2023 = vmatprep.mubr.f32.mxu0 0.0
        %2024 = vmatmul.mubr.f32.gmra.mrb[0].mxu0 %v1898
        %v2025 = vpop.f32.mrb[0].mxu0
        %v2026 = vadd.f32 0.0, %v2025
        %v2027 = vpop.f32.mrb[0].mxu0
        %2028 = vmatprep.mubr.f32.mxu0 0.0
        %2029 = vmatmul.mubr.f32.gmra.mrb[0].mxu0 %v1901
        %v2030 = vpop.f32.mrb[0].mxu0
        %v2031 = vadd.f32 0.0, %v2030
        %v2032 = vpop.f32.mrb[0].mxu0
        %2033 = vmatprep.mubr.f32.mxu0 0.0
        %2034 = vmatmul.mubr.f32.gmra.mrb[0].mxu0 %v1904
        %v2035 = vpop.f32.mrb[0].mxu0
        %v2036 = vadd.f32 0.0, %v2035
        %v2037 = vpop.f32.mrb[0].mxu0
        %2038 = vmatprep.mubr.f32.mxu0 0.0
        %2039 = vmatmul.mubr.f32.gmra.mrb[0].mxu0 %v1907
        %v2040 = vpop.f32.mrb[0].mxu0
        %v2041 = vadd.f32 0.0, %v2040
        %v2042 = vpop.f32.mrb[0].mxu0
        %2043 = vmatprep.mubr.f32.mxu0 0.0
        %2044 = vmatmul.mubr.f32.gmra.mrb[0].mxu0 %v1910
        %v2045 = vpop.f32.mrb[0].mxu0
        %v2046 = vadd.f32 0.0, %v2045
        %v2047 = vpop.f32.mrb[0].mxu0
        %2048 = vmatprep.mubr.f32.mxu0 0.0
        %2049 = vmatmul.mubr.f32.gmra.mrb[0].mxu0 %v1913
        %v2050 = vpop.f32.mrb[0].mxu0
        %v2051 = vadd.f32 0.0, %v2050
        %v2052 = vpop.f32.mrb[0].mxu0
        %2053 = vmatprep.mubr.f32.mxu0 0.0
        %2054 = vmatmul.mubr.f32.gmra.mrb[0].mxu0 %v1916
        %v2055 = vpop.f32.mrb[0].mxu0
        %v2056 = vadd.f32 0.0, %v2055
        %v2057 = vpop.f32.mrb[0].mxu0
        %2058 = vmatprep.mubr.f32.mxu0 0.0
        %2059 = vmatmul.mubr.f32.gmra.mrb[0].mxu0 %v1919
        %v2060 = vpop.f32.mrb[0].mxu0
        %v2061 = vadd.f32 0.0, %v2060
        %v2062 = vpop.f32.mrb[0].mxu0
        %2063 = vmatprep.mubr.f32.mxu0 0.0
        %2064 = vmatmul.mubr.f32.gmra.mrb[0].mxu0 %v1922
        %v2065 = vpop.f32.mrb[0].mxu0
        %v2066 = vadd.f32 0.0, %v2065
        %v2067 = vpop.f32.mrb[0].mxu0
        %2068 = vdwg.mxu0
        %v2069 = vadd.f32 %v1841, %v1991
        %v2070 = vadd.f32 %v1842, %v1996
        %v2071 = vadd.f32 %v1843, %v2001
        %v2072 = vadd.f32 %v1844, %v2006
        %v2073 = vadd.f32 %v1845, %v2011
        %v2074 = vadd.f32 %v1846, %v2016
        %v2075 = vadd.f32 %v1847, %v2021
        %v2076 = vadd.f32 %v1848, %v2026
        %v2077 = vadd.f32 %v1849, %v2031
        %v2078 = vadd.f32 %v1850, %v2036
        %v2079 = vadd.f32 %v1851, %v2041
        %v2080 = vadd.f32 %v1852, %v2046
        %v2081 = vadd.f32 %v1853, %v2051
        %v2082 = vadd.f32 %v1854, %v2056
        %v2083 = vadd.f32 %v1855, %v2061
        %v2084 = vadd.f32 %v1856, %v2066
        %s2085 = scalar_lea.vmem [#allocation2], 320
        %v2086 = vld [vmem:[%s2085] sm:$0xff]
        %v2087 = vld [vmem:[%s2085 + $0x8] sm:$0xff]
        %v2088 = vld [vmem:[%s2085 + $0x10] sm:$0xff]
        %v2089 = vld [vmem:[%s2085 + $0x18] sm:$0xff]
        %v2090 = vld [vmem:[%s2085 + $0x20] sm:$0xff]
        %v2091 = vld [vmem:[%s2085 + $0x28] sm:$0xff]
        %v2092 = vld [vmem:[%s2085 + $0x30] sm:$0xff]
        %v2093 = vld [vmem:[%s2085 + $0x38] sm:$0xff]
        %v2094 = vld [vmem:[%s2085 + $0x40] sm:$0xff]
        %v2095 = vld [vmem:[%s2085 + $0x48] sm:$0xff]
        %v2096 = vld [vmem:[%s2085 + $0x50] sm:$0xff]
        %v2097 = vld [vmem:[%s2085 + $0x58] sm:$0xff]
        %v2098 = vld [vmem:[%s2085 + $0x60] sm:$0xff]
        %v2099 = vld [vmem:[%s2085 + $0x68] sm:$0xff]
        %v2100 = vld [vmem:[%s2085 + $0x70] sm:$0xff]
        %v2101 = vld [vmem:[%s2085 + $0x78] sm:$0xff]
        %s2102 = scalar_lea.vmem %s1, 56
        %v2103 = vld [vmem:[%s2102] sm:$0xff]
        %v2105 = vsel %vm340, %v2086, 0
        %v2108 = vsel %vm340, %v2087, 0
        %v2111 = vsel %vm340, %v2088, 0
        %v2114 = vsel %vm340, %v2089, 0
        %v2117 = vsel %vm340, %v2090, 0
        %v2120 = vsel %vm340, %v2091, 0
        %v2123 = vsel %vm340, %v2092, 0
        %v2126 = vsel %vm340, %v2093, 0
        %v2129 = vsel %vm340, %v2094, 0
        %v2132 = vsel %vm340, %v2095, 0
        %v2135 = vsel %vm340, %v2096, 0
        %v2138 = vsel %vm340, %v2097, 0
        %v2141 = vsel %vm340, %v2098, 0
        %v2144 = vsel %vm340, %v2099, 0
        %v2147 = vsel %vm340, %v2100, 0
        %v2150 = vsel %vm340, %v2101, 0
        %2152 = vmatprep.subr.mxu0 0.0
        %2153 = vmatpush1.msra.mxu0 %v2103
        %2154 = vmatprep.subr.mxu0 0.0
        %2155 = vmatpush1.msra.mxu0 0.0
        %2156 = vmatprep.subr.mxu0 0.0
        %2157 = vmatpush1.msra.mxu0 0.0
        %2158 = vmatprep.subr.mxu0 0.0
        %2159 = vmatpush1.msra.mxu0 0.0
        %2160 = vmatprep.subr.mxu0 0.0
        %2161 = vmatpush1.msra.mxu0 0.0
        %2162 = vmatprep.subr.mxu0 0.0
        %2163 = vmatpush1.msra.mxu0 0.0
        %2164 = vmatprep.subr.mxu0 0.0
        %2165 = vmatpush1.msra.mxu0 0.0
        %2166 = vmatprep.subr.mxu0 0.0
        %2167 = vmatpush1.msra.mxu0 0.0
        %2168 = vmatprep.subr.mxu0 0.0
        %2169 = vmatpush1.msra.mxu0 0.0
        %2170 = vmatprep.subr.mxu0 0.0
        %2171 = vmatpush1.msra.mxu0 0.0
        %2172 = vmatprep.subr.mxu0 0.0
        %2173 = vmatpush1.msra.mxu0 0.0
        %2174 = vmatprep.subr.mxu0 0.0
        %2175 = vmatpush1.msra.mxu0 0.0
        %2176 = vmatprep.subr.mxu0 0.0
        %2177 = vmatpush1.msra.mxu0 0.0
        %2178 = vmatprep.subr.mxu0 0.0
        %2179 = vmatpush1.msra.mxu0 0.0
        %2180 = vmatprep.subr.mxu0 0.0
        %2181 = vmatpush1.msra.mxu0 0.0
        %2182 = vmatprep.subr.mxu0 0.0
        %2183 = vmatpush1.msra.mxu0 0.0
        %2184 = vmatprep.subr.mxu0 0.0
        %2185 = vmatpush1.msra.mxu0 0.0
        %2186 = vmatprep.subr.mxu0 0.0
        %2187 = vmatpush1.msra.mxu0 0.0
        %2188 = vmatprep.subr.mxu0 0.0
        %2189 = vmatpush1.msra.mxu0 0.0
        %2190 = vmatprep.subr.mxu0 0.0
        %2191 = vmatpush1.msra.mxu0 0.0
        %2192 = vmatprep.subr.mxu0 0.0
        %2193 = vmatpush1.msra.mxu0 0.0
        %2194 = vmatprep.subr.mxu0 0.0
        %2195 = vmatpush1.msra.mxu0 0.0
        %2196 = vmatprep.subr.mxu0 0.0
        %2197 = vmatpush1.msra.mxu0 0.0
        %2198 = vmatprep.subr.mxu0 0.0
        %2199 = vmatpush1.msra.mxu0 0.0
        %2200 = vmatprep.subr.mxu0 0.0
        %2201 = vmatpush1.msra.mxu0 0.0
        %2202 = vmatprep.subr.mxu0 0.0
        %2203 = vmatpush1.msra.mxu0 0.0
        %2204 = vmatprep.subr.mxu0 0.0
        %2205 = vmatpush1.msra.mxu0 0.0
        %2206 = vmatprep.subr.mxu0 0.0
        %2207 = vmatpush1.msra.mxu0 0.0
        %2208 = vmatprep.subr.mxu0 0.0
        %2209 = vmatpush1.msra.mxu0 0.0
        %2210 = vmatprep.subr.mxu0 0.0
        %2211 = vmatpush1.msra.mxu0 0.0
        %2212 = vmatprep.subr.mxu0 0.0
        %2213 = vmatpush1.msra.mxu0 0.0
        %2214 = vmatprep.subr.mxu0 0.0
        %2215 = vmatpush1.msra.mxu0 0.0
        %2216 = vmatprep.mubr.f32.mxu0 0.0
        %2217 = vmatmul.mubr.f32.gmra.mrb[0].mxu0 %v2105
        %v2218 = vpop.f32.mrb[0].mxu0
        %v2219 = vadd.f32 0.0, %v2218
        %v2220 = vpop.f32.mrb[0].mxu0
        %2221 = vmatprep.mubr.f32.mxu0 0.0
        %2222 = vmatmul.mubr.f32.gmra.mrb[0].mxu0 %v2108
        %v2223 = vpop.f32.mrb[0].mxu0
        %v2224 = vadd.f32 0.0, %v2223
        %v2225 = vpop.f32.mrb[0].mxu0
        %2226 = vmatprep.mubr.f32.mxu0 0.0
        %2227 = vmatmul.mubr.f32.gmra.mrb[0].mxu0 %v2111
        %v2228 = vpop.f32.mrb[0].mxu0
        %v2229 = vadd.f32 0.0, %v2228
        %v2230 = vpop.f32.mrb[0].mxu0
        %2231 = vmatprep.mubr.f32.mxu0 0.0
        %2232 = vmatmul.mubr.f32.gmra.mrb[0].mxu0 %v2114
        %v2233 = vpop.f32.mrb[0].mxu0
        %v2234 = vadd.f32 0.0, %v2233
        %v2235 = vpop.f32.mrb[0].mxu0
        %2236 = vmatprep.mubr.f32.mxu0 0.0
        %2237 = vmatmul.mubr.f32.gmra.mrb[0].mxu0 %v2117
        %v2238 = vpop.f32.mrb[0].mxu0
        %v2239 = vadd.f32 0.0, %v2238
        %v2240 = vpop.f32.mrb[0].mxu0
        %2241 = vmatprep.mubr.f32.mxu0 0.0
        %2242 = vmatmul.mubr.f32.gmra.mrb[0].mxu0 %v2120
        %v2243 = vpop.f32.mrb[0].mxu0
        %v2244 = vadd.f32 0.0, %v2243
        %v2245 = vpop.f32.mrb[0].mxu0
        %2246 = vmatprep.mubr.f32.mxu0 0.0
        %2247 = vmatmul.mubr.f32.gmra.mrb[0].mxu0 %v2123
        %v2248 = vpop.f32.mrb[0].mxu0
        %v2249 = vadd.f32 0.0, %v2248
        %v2250 = vpop.f32.mrb[0].mxu0
        %2251 = vmatprep.mubr.f32.mxu0 0.0
        %2252 = vmatmul.mubr.f32.gmra.mrb[0].mxu0 %v2126
        %v2253 = vpop.f32.mrb[0].mxu0
        %v2254 = vadd.f32 0.0, %v2253
        %v2255 = vpop.f32.mrb[0].mxu0
        %2256 = vmatprep.mubr.f32.mxu0 0.0
        %2257 = vmatmul.mubr.f32.gmra.mrb[0].mxu0 %v2129
        %v2258 = vpop.f32.mrb[0].mxu0
        %v2259 = vadd.f32 0.0, %v2258
        %v2260 = vpop.f32.mrb[0].mxu0
        %2261 = vmatprep.mubr.f32.mxu0 0.0
        %2262 = vmatmul.mubr.f32.gmra.mrb[0].mxu0 %v2132
        %v2263 = vpop.f32.mrb[0].mxu0
        %v2264 = vadd.f32 0.0, %v2263
        %v2265 = vpop.f32.mrb[0].mxu0
        %2266 = vmatprep.mubr.f32.mxu0 0.0
        %2267 = vmatmul.mubr.f32.gmra.mrb[0].mxu0 %v2135
        %v2268 = vpop.f32.mrb[0].mxu0
        %v2269 = vadd.f32 0.0, %v2268
        %v2270 = vpop.f32.mrb[0].mxu0
        %2271 = vmatprep.mubr.f32.mxu0 0.0
        %2272 = vmatmul.mubr.f32.gmra.mrb[0].mxu0 %v2138
        %v2273 = vpop.f32.mrb[0].mxu0
        %v2274 = vadd.f32 0.0, %v2273
        %v2275 = vpop.f32.mrb[0].mxu0
        %2276 = vmatprep.mubr.f32.mxu0 0.0
        %2277 = vmatmul.mubr.f32.gmra.mrb[0].mxu0 %v2141
        %v2278 = vpop.f32.mrb[0].mxu0
        %v2279 = vadd.f32 0.0, %v2278
        %v2280 = vpop.f32.mrb[0].mxu0
        %2281 = vmatprep.mubr.f32.mxu0 0.0
        %2282 = vmatmul.mubr.f32.gmra.mrb[0].mxu0 %v2144
        %v2283 = vpop.f32.mrb[0].mxu0
        %v2284 = vadd.f32 0.0, %v2283
        %v2285 = vpop.f32.mrb[0].mxu0
        %2286 = vmatprep.mubr.f32.mxu0 0.0
        %2287 = vmatmul.mubr.f32.gmra.mrb[0].mxu0 %v2147
        %v2288 = vpop.f32.mrb[0].mxu0
        %v2289 = vadd.f32 0.0, %v2288
        %v2290 = vpop.f32.mrb[0].mxu0
        %2291 = vmatprep.mubr.f32.mxu0 0.0
        %2292 = vmatmul.mubr.f32.gmra.mrb[0].mxu0 %v2150
        %v2293 = vpop.f32.mrb[0].mxu0
        %v2294 = vadd.f32 0.0, %v2293
        %v2295 = vpop.f32.mrb[0].mxu0
        %2296 = vdwg.mxu0
        %v2297 = vadd.f32 %v2069, %v2219
        %v2298 = vadd.f32 %v2070, %v2224
        %v2299 = vadd.f32 %v2071, %v2229
        %v2300 = vadd.f32 %v2072, %v2234
        %v2301 = vadd.f32 %v2073, %v2239
        %v2302 = vadd.f32 %v2074, %v2244
        %v2303 = vadd.f32 %v2075, %v2249
        %v2304 = vadd.f32 %v2076, %v2254
        %v2305 = vadd.f32 %v2077, %v2259
        %v2306 = vadd.f32 %v2078, %v2264
        %v2307 = vadd.f32 %v2079, %v2269
        %v2308 = vadd.f32 %v2080, %v2274
        %v2309 = vadd.f32 %v2081, %v2279
        %v2310 = vadd.f32 %v2082, %v2284
        %v2311 = vadd.f32 %v2083, %v2289
        %v2312 = vadd.f32 %v2084, %v2294
        %s2313 = scalar_lea.vmem [#allocation2], 608
        %v2314 = vld [vmem:[%s2313] sm:$0xff]
        %v2315 = vld [vmem:[%s2313 + $0x8] sm:$0xff]
        %v2316 = vld [vmem:[%s2313 + $0x10] sm:$0xff]
        %v2317 = vld [vmem:[%s2313 + $0x18] sm:$0xff]
        %v2318 = vld [vmem:[%s2313 + $0x20] sm:$0xff]
        %v2319 = vld [vmem:[%s2313 + $0x28] sm:$0xff]
        %v2320 = vld [vmem:[%s2313 + $0x30] sm:$0xff]
        %v2321 = vld [vmem:[%s2313 + $0x38] sm:$0xff]
        %v2322 = vld [vmem:[%s2313 + $0x40] sm:$0xff]
        %v2323 = vld [vmem:[%s2313 + $0x48] sm:$0xff]
        %v2324 = vld [vmem:[%s2313 + $0x50] sm:$0xff]
        %v2325 = vld [vmem:[%s2313 + $0x58] sm:$0xff]
        %v2326 = vld [vmem:[%s2313 + $0x60] sm:$0xff]
        %v2327 = vld [vmem:[%s2313 + $0x68] sm:$0xff]
        %v2328 = vld [vmem:[%s2313 + $0x70] sm:$0xff]
        %v2329 = vld [vmem:[%s2313 + $0x78] sm:$0xff]
        %s2330 = scalar_lea.vmem %s1, 64
        %v2331 = vld [vmem:[%s2330] sm:$0xff]
        %v2333 = vsel %vm340, %v2314, 0
        %v2336 = vsel %vm340, %v2315, 0
        %v2339 = vsel %vm340, %v2316, 0
        %v2342 = vsel %vm340, %v2317, 0
        %v2345 = vsel %vm340, %v2318, 0
        %v2348 = vsel %vm340, %v2319, 0
        %v2351 = vsel %vm340, %v2320, 0
        %v2354 = vsel %vm340, %v2321, 0
        %v2357 = vsel %vm340, %v2322, 0
        %v2360 = vsel %vm340, %v2323, 0
        %v2363 = vsel %vm340, %v2324, 0
        %v2366 = vsel %vm340, %v2325, 0
        %v2369 = vsel %vm340, %v2326, 0
        %v2372 = vsel %vm340, %v2327, 0
        %v2375 = vsel %vm340, %v2328, 0
        %v2378 = vsel %vm340, %v2329, 0
        %2380 = vmatprep.subr.mxu0 0.0
        %2381 = vmatpush1.msra.mxu0 %v2331
        %2382 = vmatprep.subr.mxu0 0.0
        %2383 = vmatpush1.msra.mxu0 0.0
        %2384 = vmatprep.subr.mxu0 0.0
        %2385 = vmatpush1.msra.mxu0 0.0
        %2386 = vmatprep.subr.mxu0 0.0
        %2387 = vmatpush1.msra.mxu0 0.0
        %2388 = vmatprep.subr.mxu0 0.0
        %2389 = vmatpush1.msra.mxu0 0.0
        %2390 = vmatprep.subr.mxu0 0.0
        %2391 = vmatpush1.msra.mxu0 0.0
        %2392 = vmatprep.subr.mxu0 0.0
        %2393 = vmatpush1.msra.mxu0 0.0
        %2394 = vmatprep.subr.mxu0 0.0
        %2395 = vmatpush1.msra.mxu0 0.0
        %2396 = vmatprep.subr.mxu0 0.0
        %2397 = vmatpush1.msra.mxu0 0.0
        %2398 = vmatprep.subr.mxu0 0.0
        %2399 = vmatpush1.msra.mxu0 0.0
        %2400 = vmatprep.subr.mxu0 0.0
        %2401 = vmatpush1.msra.mxu0 0.0
        %2402 = vmatprep.subr.mxu0 0.0
        %2403 = vmatpush1.msra.mxu0 0.0
        %2404 = vmatprep.subr.mxu0 0.0
        %2405 = vmatpush1.msra.mxu0 0.0
        %2406 = vmatprep.subr.mxu0 0.0
        %2407 = vmatpush1.msra.mxu0 0.0
        %2408 = vmatprep.subr.mxu0 0.0
        %2409 = vmatpush1.msra.mxu0 0.0
        %2410 = vmatprep.subr.mxu0 0.0
        %2411 = vmatpush1.msra.mxu0 0.0
        %2412 = vmatprep.subr.mxu0 0.0
        %2413 = vmatpush1.msra.mxu0 0.0
        %2414 = vmatprep.subr.mxu0 0.0
        %2415 = vmatpush1.msra.mxu0 0.0
        %2416 = vmatprep.subr.mxu0 0.0
        %2417 = vmatpush1.msra.mxu0 0.0
        %2418 = vmatprep.subr.mxu0 0.0
        %2419 = vmatpush1.msra.mxu0 0.0
        %2420 = vmatprep.subr.mxu0 0.0
        %2421 = vmatpush1.msra.mxu0 0.0
        %2422 = vmatprep.subr.mxu0 0.0
        %2423 = vmatpush1.msra.mxu0 0.0
        %2424 = vmatprep.subr.mxu0 0.0
        %2425 = vmatpush1.msra.mxu0 0.0
        %2426 = vmatprep.subr.mxu0 0.0
        %2427 = vmatpush1.msra.mxu0 0.0
        %2428 = vmatprep.subr.mxu0 0.0
        %2429 = vmatpush1.msra.mxu0 0.0
        %2430 = vmatprep.subr.mxu0 0.0
        %2431 = vmatpush1.msra.mxu0 0.0
        %2432 = vmatprep.subr.mxu0 0.0
        %2433 = vmatpush1.msra.mxu0 0.0
        %2434 = vmatprep.subr.mxu0 0.0
        %2435 = vmatpush1.msra.mxu0 0.0
        %2436 = vmatprep.subr.mxu0 0.0
        %2437 = vmatpush1.msra.mxu0 0.0
        %2438 = vmatprep.subr.mxu0 0.0
        %2439 = vmatpush1.msra.mxu0 0.0
        %2440 = vmatprep.subr.mxu0 0.0
        %2441 = vmatpush1.msra.mxu0 0.0
        %2442 = vmatprep.subr.mxu0 0.0
        %2443 = vmatpush1.msra.mxu0 0.0
        %2444 = vmatprep.mubr.f32.mxu0 0.0
        %2445 = vmatmul.mubr.f32.gmra.mrb[0].mxu0 %v2333
        %v2446 = vpop.f32.mrb[0].mxu0
        %v2447 = vadd.f32 0.0, %v2446
        %v2448 = vpop.f32.mrb[0].mxu0
        %2449 = vmatprep.mubr.f32.mxu0 0.0
        %2450 = vmatmul.mubr.f32.gmra.mrb[0].mxu0 %v2336
        %v2451 = vpop.f32.mrb[0].mxu0
        %v2452 = vadd.f32 0.0, %v2451
        %v2453 = vpop.f32.mrb[0].mxu0
        %2454 = vmatprep.mubr.f32.mxu0 0.0
        %2455 = vmatmul.mubr.f32.gmra.mrb[0].mxu0 %v2339
        %v2456 = vpop.f32.mrb[0].mxu0
        %v2457 = vadd.f32 0.0, %v2456
        %v2458 = vpop.f32.mrb[0].mxu0
        %2459 = vmatprep.mubr.f32.mxu0 0.0
        %2460 = vmatmul.mubr.f32.gmra.mrb[0].mxu0 %v2342
        %v2461 = vpop.f32.mrb[0].mxu0
        %v2462 = vadd.f32 0.0, %v2461
        %v2463 = vpop.f32.mrb[0].mxu0
        %2464 = vmatprep.mubr.f32.mxu0 0.0
        %2465 = vmatmul.mubr.f32.gmra.mrb[0].mxu0 %v2345
        %v2466 = vpop.f32.mrb[0].mxu0
        %v2467 = vadd.f32 0.0, %v2466
        %v2468 = vpop.f32.mrb[0].mxu0
        %2469 = vmatprep.mubr.f32.mxu0 0.0
        %2470 = vmatmul.mubr.f32.gmra.mrb[0].mxu0 %v2348
        %v2471 = vpop.f32.mrb[0].mxu0
        %v2472 = vadd.f32 0.0, %v2471
        %v2473 = vpop.f32.mrb[0].mxu0
        %2474 = vmatprep.mubr.f32.mxu0 0.0
        %2475 = vmatmul.mubr.f32.gmra.mrb[0].mxu0 %v2351
        %v2476 = vpop.f32.mrb[0].mxu0
        %v2477 = vadd.f32 0.0, %v2476
        %v2478 = vpop.f32.mrb[0].mxu0
        %2479 = vmatprep.mubr.f32.mxu0 0.0
        %2480 = vmatmul.mubr.f32.gmra.mrb[0].mxu0 %v2354
        %v2481 = vpop.f32.mrb[0].mxu0
        %v2482 = vadd.f32 0.0, %v2481
        %v2483 = vpop.f32.mrb[0].mxu0
        %2484 = vmatprep.mubr.f32.mxu0 0.0
        %2485 = vmatmul.mubr.f32.gmra.mrb[0].mxu0 %v2357
        %v2486 = vpop.f32.mrb[0].mxu0
        %v2487 = vadd.f32 0.0, %v2486
        %v2488 = vpop.f32.mrb[0].mxu0
        %2489 = vmatprep.mubr.f32.mxu0 0.0
        %2490 = vmatmul.mubr.f32.gmra.mrb[0].mxu0 %v2360
        %v2491 = vpop.f32.mrb[0].mxu0
        %v2492 = vadd.f32 0.0, %v2491
        %v2493 = vpop.f32.mrb[0].mxu0
        %2494 = vmatprep.mubr.f32.mxu0 0.0
        %2495 = vmatmul.mubr.f32.gmra.mrb[0].mxu0 %v2363
        %v2496 = vpop.f32.mrb[0].mxu0
        %v2497 = vadd.f32 0.0, %v2496
        %v2498 = vpop.f32.mrb[0].mxu0
        %2499 = vmatprep.mubr.f32.mxu0 0.0
        %2500 = vmatmul.mubr.f32.gmra.mrb[0].mxu0 %v2366
        %v2501 = vpop.f32.mrb[0].mxu0
        %v2502 = vadd.f32 0.0, %v2501
        %v2503 = vpop.f32.mrb[0].mxu0
        %2504 = vmatprep.mubr.f32.mxu0 0.0
        %2505 = vmatmul.mubr.f32.gmra.mrb[0].mxu0 %v2369
        %v2506 = vpop.f32.mrb[0].mxu0
        %v2507 = vadd.f32 0.0, %v2506
        %v2508 = vpop.f32.mrb[0].mxu0
        %2509 = vmatprep.mubr.f32.mxu0 0.0
        %2510 = vmatmul.mubr.f32.gmra.mrb[0].mxu0 %v2372
        %v2511 = vpop.f32.mrb[0].mxu0
        %v2512 = vadd.f32 0.0, %v2511
        %v2513 = vpop.f32.mrb[0].mxu0
        %2514 = vmatprep.mubr.f32.mxu0 0.0
        %2515 = vmatmul.mubr.f32.gmra.mrb[0].mxu0 %v2375
        %v2516 = vpop.f32.mrb[0].mxu0
        %v2517 = vadd.f32 0.0, %v2516
        %v2518 = vpop.f32.mrb[0].mxu0
        %2519 = vmatprep.mubr.f32.mxu0 0.0
        %2520 = vmatmul.mubr.f32.gmra.mrb[0].mxu0 %v2378
        %v2521 = vpop.f32.mrb[0].mxu0
        %v2522 = vadd.f32 0.0, %v2521
        %v2523 = vpop.f32.mrb[0].mxu0
        %2524 = vdwg.mxu0
        %v2525 = vadd.f32 %v2297, %v2447
        %v2526 = vadd.f32 %v2298, %v2452
        %v2527 = vadd.f32 %v2299, %v2457
        %v2528 = vadd.f32 %v2300, %v2462
        %v2529 = vadd.f32 %v2301, %v2467
        %v2530 = vadd.f32 %v2302, %v2472
        %v2531 = vadd.f32 %v2303, %v2477
        %v2532 = vadd.f32 %v2304, %v2482
        %v2533 = vadd.f32 %v2305, %v2487
        %v2534 = vadd.f32 %v2306, %v2492
        %v2535 = vadd.f32 %v2307, %v2497
        %v2536 = vadd.f32 %v2308, %v2502
        %v2537 = vadd.f32 %v2309, %v2507
        %v2538 = vadd.f32 %v2310, %v2512
        %v2539 = vadd.f32 %v2311, %v2517
        %v2540 = vadd.f32 %v2312, %v2522
        %v2542 = vlaneseq
        %v2543 = vshrl.u32 %v2542, 7
        %v2544 = vsub.s32 0, %v2543
        %v2545 = vrot.slane %v523, %v2544
        %v2547 = vmul.f32 %v2525, %v2545
        %v2548 = vmul.f32 %v2526, %v2545
        %v2549 = vmul.f32 %v2527, %v2545
        %v2550 = vmul.f32 %v2528, %v2545
        %v2551 = vmul.f32 %v2529, %v2545
        %v2552 = vmul.f32 %v2530, %v2545
        %v2553 = vmul.f32 %v2531, %v2545
        %v2554 = vmul.f32 %v2532, %v2545
        %v2555 = vmul.f32 %v2533, %v2545
        %v2556 = vmul.f32 %v2534, %v2545
        %v2557 = vmul.f32 %v2535, %v2545
        %v2558 = vmul.f32 %v2536, %v2545
        %v2559 = vmul.f32 %v2537, %v2545
        %v2560 = vmul.f32 %v2538, %v2545
        %v2561 = vmul.f32 %v2539, %v2545
        %v2562 = vmul.f32 %v2540, %v2545
        %v2564 = vlaneseq
        %v2565 = vshrl.u32 %v2564, 7
        %v2566 = vsub.s32 0, %v2565
        %v2567 = vrot.slane %v524, %v2566
        %v2569 = vadd.f32 %v2547, %v2567
        %v2570 = vadd.f32 %v2548, %v2567
        %v2571 = vadd.f32 %v2549, %v2567
        %v2572 = vadd.f32 %v2550, %v2567
        %v2573 = vadd.f32 %v2551, %v2567
        %v2574 = vadd.f32 %v2552, %v2567
        %v2575 = vadd.f32 %v2553, %v2567
        %v2576 = vadd.f32 %v2554, %v2567
        %v2577 = vadd.f32 %v2555, %v2567
        %v2578 = vadd.f32 %v2556, %v2567
        %v2579 = vadd.f32 %v2557, %v2567
        %v2580 = vadd.f32 %v2558, %v2567
        %v2581 = vadd.f32 %v2559, %v2567
        %v2582 = vadd.f32 %v2560, %v2567
        %v2583 = vadd.f32 %v2561, %v2567
        %v2584 = vadd.f32 %v2562, %v2567
        %v2585 = vmax.f32 %v2569, 0.0
        %v2586 = vmax.f32 %v2570, 0.0
        %v2587 = vmax.f32 %v2571, 0.0
        %v2588 = vmax.f32 %v2572, 0.0
        %v2589 = vmax.f32 %v2573, 0.0
        %v2590 = vmax.f32 %v2574, 0.0
        %v2591 = vmax.f32 %v2575, 0.0
        %v2592 = vmax.f32 %v2576, 0.0
        %v2593 = vmax.f32 %v2577, 0.0
        %v2594 = vmax.f32 %v2578, 0.0
        %v2595 = vmax.f32 %v2579, 0.0
        %v2596 = vmax.f32 %v2580, 0.0
        %v2597 = vmax.f32 %v2581, 0.0
        %v2598 = vmax.f32 %v2582, 0.0
        %v2599 = vmax.f32 %v2583, 0.0
        %v2600 = vmax.f32 %v2584, 0.0
        %v2601 = vadd.f32 %v2585, %v2586
        %v2602 = vadd.f32 %v2601, %v2587
        %v2603 = vadd.f32 %v2602, %v2588
        %v2604 = vadd.f32 %v2603, %v2589
        %v2605 = vadd.f32 %v2604, %v2590
        %v2606 = vadd.f32 %v2605, %v2591
        %v2607 = vadd.f32 %v2606, %v2592
        %v2608 = vadd.f32 %v2607, %v2593
        %v2609 = vadd.f32 %v2608, %v2594
        %v2610 = vadd.f32 %v2609, %v2595
        %v2611 = vadd.f32 %v2610, %v2596
        %v2612 = vadd.f32 %v2611, %v2597
        %v2613 = vadd.f32 %v2612, %v2598
        %v2614 = vadd.f32 %v2613, %v2599
        %v2615 = vadd.f32 %v2614, %v2600
        %v2616 = vrot.slane %v2615, 4
        %v2617 = vadd.f32 %v2615, %v2616
        %v2618 = vrot.slane %v2617, 2
        %v2619 = vadd.f32 %v2617, %v2618
        %v2620 = vrot.slane %v2619, 1
        %v2621 = vadd.f32 %v2619, %v2620
        %v2622 = vadd.f32 %v2621, 0.0
        %2623 = vst [vmem:[%s298] sm:$0xff] %v2585
        %2624 = vst [vmem:[%s298 + $0x8] sm:$0xff] %v2586
        %2625 = vst [vmem:[%s298 + $0x10] sm:$0xff] %v2587
        %2626 = vst [vmem:[%s298 + $0x18] sm:$0xff] %v2588
        %2627 = vst [vmem:[%s298 + $0x20] sm:$0xff] %v2589
        %2628 = vst [vmem:[%s298 + $0x28] sm:$0xff] %v2590
        %2629 = vst [vmem:[%s298 + $0x30] sm:$0xff] %v2591
        %2630 = vst [vmem:[%s298 + $0x38] sm:$0xff] %v2592
        %2631 = vst [vmem:[%s298 + $0x40] sm:$0xff] %v2593
        %2632 = vst [vmem:[%s298 + $0x48] sm:$0xff] %v2594
        %2633 = vst [vmem:[%s298 + $0x50] sm:$0xff] %v2595
        %2634 = vst [vmem:[%s298 + $0x58] sm:$0xff] %v2596
        %2635 = vst [vmem:[%s298 + $0x60] sm:$0xff] %v2597
        %2636 = vst [vmem:[%s298 + $0x68] sm:$0xff] %v2598
        %2637 = vst [vmem:[%s298 + $0x70] sm:$0xff] %v2599
        %2638 = vst [vmem:[%s298 + $0x78] sm:$0xff] %v2600
        %s2639 = scalar_lea.vmem [#allocation2], 128
        %v2640 = vld [vmem:[%s2639] sm:$0xff]
        %v2641 = vld [vmem:[%s2639 + $0x8] sm:$0xff]
        %v2642 = vld [vmem:[%s2639 + $0x10] sm:$0xff]
        %v2643 = vld [vmem:[%s2639 + $0x18] sm:$0xff]
        %v2644 = vld [vmem:[%s2639 + $0x20] sm:$0xff]
        %v2645 = vld [vmem:[%s2639 + $0x28] sm:$0xff]
        %v2646 = vld [vmem:[%s2639 + $0x30] sm:$0xff]
        %v2647 = vld [vmem:[%s2639 + $0x38] sm:$0xff]
        %v2648 = vld [vmem:[%s2639 + $0x40] sm:$0xff]
        %v2649 = vld [vmem:[%s2639 + $0x48] sm:$0xff]
        %v2650 = vld [vmem:[%s2639 + $0x50] sm:$0xff]
        %v2651 = vld [vmem:[%s2639 + $0x58] sm:$0xff]
        %v2652 = vld [vmem:[%s2639 + $0x60] sm:$0xff]
        %v2653 = vld [vmem:[%s2639 + $0x68] sm:$0xff]
        %v2654 = vld [vmem:[%s2639 + $0x70] sm:$0xff]
        %v2655 = vld [vmem:[%s2639 + $0x78] sm:$0xff]
        %v2656 = vld [vmem:[%s1] sm:$0xff]
        %s2657 = scalar_lea.vmem [#allocation2], 416
        %v2658 = vld [vmem:[%s2657] sm:$0xff]
        %v2659 = vld [vmem:[%s2657 + $0x8] sm:$0xff]
        %v2660 = vld [vmem:[%s2657 + $0x10] sm:$0xff]
        %v2661 = vld [vmem:[%s2657 + $0x18] sm:$0xff]
        %v2662 = vld [vmem:[%s2657 + $0x20] sm:$0xff]
        %v2663 = vld [vmem:[%s2657 + $0x28] sm:$0xff]
        %v2664 = vld [vmem:[%s2657 + $0x30] sm:$0xff]
        %v2665 = vld [vmem:[%s2657 + $0x38] sm:$0xff]
        %v2666 = vld [vmem:[%s2657 + $0x40] sm:$0xff]
        %v2667 = vld [vmem:[%s2657 + $0x48] sm:$0xff]
        %v2668 = vld [vmem:[%s2657 + $0x50] sm:$0xff]
        %v2669 = vld [vmem:[%s2657 + $0x58] sm:$0xff]
        %v2670 = vld [vmem:[%s2657 + $0x60] sm:$0xff]
        %v2671 = vld [vmem:[%s2657 + $0x68] sm:$0xff]
        %v2672 = vld [vmem:[%s2657 + $0x70] sm:$0xff]
        %v2673 = vld [vmem:[%s2657 + $0x78] sm:$0xff]
        %v2674 = vld [vmem:[%s558] sm:$0xff]
        %v2676 = vsel %vm340, %v2658, 0
        %v2679 = vsel %vm340, %v2659, 0
        %v2682 = vsel %vm340, %v2660, 0
        %v2685 = vsel %vm340, %v2661, 0
        %v2688 = vsel %vm340, %v2662, 0
        %v2691 = vsel %vm340, %v2663, 0
        %v2694 = vsel %vm340, %v2664, 0
        %v2697 = vsel %vm340, %v2665, 0
        %v2700 = vsel %vm340, %v2666, 0
        %v2703 = vsel %vm340, %v2667, 0
        %v2706 = vsel %vm340, %v2668, 0
        %v2709 = vsel %vm340, %v2669, 0
        %v2712 = vsel %vm340, %v2670, 0
        %v2715 = vsel %vm340, %v2671, 0
        %v2718 = vsel %vm340, %v2672, 0
        %v2721 = vsel %vm340, %v2673, 0
        %2723 = vmatprep.subr.mxu0 0.0
        %2724 = vmatpush1.msra.mxu0 %v2674
        %2725 = vmatprep.subr.mxu0 0.0
        %2726 = vmatpush1.msra.mxu0 0.0
        %2727 = vmatprep.subr.mxu0 0.0
        %2728 = vmatpush1.msra.mxu0 0.0
        %2729 = vmatprep.subr.mxu0 0.0
        %2730 = vmatpush1.msra.mxu0 0.0
        %2731 = vmatprep.subr.mxu0 0.0
        %2732 = vmatpush1.msra.mxu0 0.0
        %2733 = vmatprep.subr.mxu0 0.0
        %2734 = vmatpush1.msra.mxu0 0.0
        %2735 = vmatprep.subr.mxu0 0.0
        %2736 = vmatpush1.msra.mxu0 0.0
        %2737 = vmatprep.subr.mxu0 0.0
        %2738 = vmatpush1.msra.mxu0 0.0
        %2739 = vmatprep.subr.mxu0 0.0
        %2740 = vmatpush1.msra.mxu0 0.0
        %2741 = vmatprep.subr.mxu0 0.0
        %2742 = vmatpush1.msra.mxu0 0.0
        %2743 = vmatprep.subr.mxu0 0.0
        %2744 = vmatpush1.msra.mxu0 0.0
        %2745 = vmatprep.subr.mxu0 0.0
        %2746 = vmatpush1.msra.mxu0 0.0
        %2747 = vmatprep.subr.mxu0 0.0
        %2748 = vmatpush1.msra.mxu0 0.0
        %2749 = vmatprep.subr.mxu0 0.0
        %2750 = vmatpush1.msra.mxu0 0.0
        %2751 = vmatprep.subr.mxu0 0.0
        %2752 = vmatpush1.msra.mxu0 0.0
        %2753 = vmatprep.subr.mxu0 0.0
        %2754 = vmatpush1.msra.mxu0 0.0
        %2755 = vmatprep.subr.mxu0 0.0
        %2756 = vmatpush1.msra.mxu0 0.0
        %2757 = vmatprep.subr.mxu0 0.0
        %2758 = vmatpush1.msra.mxu0 0.0
        %2759 = vmatprep.subr.mxu0 0.0
        %2760 = vmatpush1.msra.mxu0 0.0
        %2761 = vmatprep.subr.mxu0 0.0
        %2762 = vmatpush1.msra.mxu0 0.0
        %2763 = vmatprep.subr.mxu0 0.0
        %2764 = vmatpush1.msra.mxu0 0.0
        %2765 = vmatprep.subr.mxu0 0.0
        %2766 = vmatpush1.msra.mxu0 0.0
        %2767 = vmatprep.subr.mxu0 0.0
        %2768 = vmatpush1.msra.mxu0 0.0
        %2769 = vmatprep.subr.mxu0 0.0
        %2770 = vmatpush1.msra.mxu0 0.0
        %2771 = vmatprep.subr.mxu0 0.0
        %2772 = vmatpush1.msra.mxu0 0.0
        %2773 = vmatprep.subr.mxu0 0.0
        %2774 = vmatpush1.msra.mxu0 0.0
        %2775 = vmatprep.subr.mxu0 0.0
        %2776 = vmatpush1.msra.mxu0 0.0
        %2777 = vmatprep.subr.mxu0 0.0
        %2778 = vmatpush1.msra.mxu0 0.0
        %2779 = vmatprep.subr.mxu0 0.0
        %2780 = vmatpush1.msra.mxu0 0.0
        %2781 = vmatprep.subr.mxu0 0.0
        %2782 = vmatpush1.msra.mxu0 0.0
        %2783 = vmatprep.subr.mxu0 0.0
        %2784 = vmatpush1.msra.mxu0 0.0
        %2785 = vmatprep.subr.mxu0 0.0
        %2786 = vmatpush1.msra.mxu0 0.0
        %2787 = vmatprep.mubr.f32.mxu0 0.0
        %2788 = vmatmul.mubr.f32.gmra.mrb[0].mxu0 %v2676
        %v2789 = vpop.f32.mrb[0].mxu0
        %v2790 = vadd.f32 0.0, %v2789
        %v2791 = vpop.f32.mrb[0].mxu0
        %2792 = vmatprep.mubr.f32.mxu0 0.0
        %2793 = vmatmul.mubr.f32.gmra.mrb[0].mxu0 %v2679
        %v2794 = vpop.f32.mrb[0].mxu0
        %v2795 = vadd.f32 0.0, %v2794
        %v2796 = vpop.f32.mrb[0].mxu0
        %2797 = vmatprep.mubr.f32.mxu0 0.0
        %2798 = vmatmul.mubr.f32.gmra.mrb[0].mxu0 %v2682
        %v2799 = vpop.f32.mrb[0].mxu0
        %v2800 = vadd.f32 0.0, %v2799
        %v2801 = vpop.f32.mrb[0].mxu0
        %2802 = vmatprep.mubr.f32.mxu0 0.0
        %2803 = vmatmul.mubr.f32.gmra.mrb[0].mxu0 %v2685
        %v2804 = vpop.f32.mrb[0].mxu0
        %v2805 = vadd.f32 0.0, %v2804
        %v2806 = vpop.f32.mrb[0].mxu0
        %2807 = vmatprep.mubr.f32.mxu0 0.0
        %2808 = vmatmul.mubr.f32.gmra.mrb[0].mxu0 %v2688
        %v2809 = vpop.f32.mrb[0].mxu0
        %v2810 = vadd.f32 0.0, %v2809
        %v2811 = vpop.f32.mrb[0].mxu0
        %2812 = vmatprep.mubr.f32.mxu0 0.0
        %2813 = vmatmul.mubr.f32.gmra.mrb[0].mxu0 %v2691
        %v2814 = vpop.f32.mrb[0].mxu0
        %v2815 = vadd.f32 0.0, %v2814
        %v2816 = vpop.f32.mrb[0].mxu0
        %2817 = vmatprep.mubr.f32.mxu0 0.0
        %2818 = vmatmul.mubr.f32.gmra.mrb[0].mxu0 %v2694
        %v2819 = vpop.f32.mrb[0].mxu0
        %v2820 = vadd.f32 0.0, %v2819
        %v2821 = vpop.f32.mrb[0].mxu0
        %2822 = vmatprep.mubr.f32.mxu0 0.0
        %2823 = vmatmul.mubr.f32.gmra.mrb[0].mxu0 %v2697
        %v2824 = vpop.f32.mrb[0].mxu0
        %v2825 = vadd.f32 0.0, %v2824
        %v2826 = vpop.f32.mrb[0].mxu0
        %2827 = vmatprep.mubr.f32.mxu0 0.0
        %2828 = vmatmul.mubr.f32.gmra.mrb[0].mxu0 %v2700
        %v2829 = vpop.f32.mrb[0].mxu0
        %v2830 = vadd.f32 0.0, %v2829
        %v2831 = vpop.f32.mrb[0].mxu0
        %2832 = vmatprep.mubr.f32.mxu0 0.0
        %2833 = vmatmul.mubr.f32.gmra.mrb[0].mxu0 %v2703
        %v2834 = vpop.f32.mrb[0].mxu0
        %v2835 = vadd.f32 0.0, %v2834
        %v2836 = vpop.f32.mrb[0].mxu0
        %2837 = vmatprep.mubr.f32.mxu0 0.0
        %2838 = vmatmul.mubr.f32.gmra.mrb[0].mxu0 %v2706
        %v2839 = vpop.f32.mrb[0].mxu0
        %v2840 = vadd.f32 0.0, %v2839
        %v2841 = vpop.f32.mrb[0].mxu0
        %2842 = vmatprep.mubr.f32.mxu0 0.0
        %2843 = vmatmul.mubr.f32.gmra.mrb[0].mxu0 %v2709
        %v2844 = vpop.f32.mrb[0].mxu0
        %v2845 = vadd.f32 0.0, %v2844
        %v2846 = vpop.f32.mrb[0].mxu0
        %2847 = vmatprep.mubr.f32.mxu0 0.0
        %2848 = vmatmul.mubr.f32.gmra.mrb[0].mxu0 %v2712
        %v2849 = vpop.f32.mrb[0].mxu0
        %v2850 = vadd.f32 0.0, %v2849
        %v2851 = vpop.f32.mrb[0].mxu0
        %2852 = vmatprep.mubr.f32.mxu0 0.0
        %2853 = vmatmul.mubr.f32.gmra.mrb[0].mxu0 %v2715
        %v2854 = vpop.f32.mrb[0].mxu0
        %v2855 = vadd.f32 0.0, %v2854
        %v2856 = vpop.f32.mrb[0].mxu0
        %2857 = vmatprep.mubr.f32.mxu0 0.0
        %2858 = vmatmul.mubr.f32.gmra.mrb[0].mxu0 %v2718
        %v2859 = vpop.f32.mrb[0].mxu0
        %v2860 = vadd.f32 0.0, %v2859
        %v2861 = vpop.f32.mrb[0].mxu0
        %2862 = vmatprep.mubr.f32.mxu0 0.0
        %2863 = vmatmul.mubr.f32.gmra.mrb[0].mxu0 %v2721
        %v2864 = vpop.f32.mrb[0].mxu0
        %v2865 = vadd.f32 0.0, %v2864
        %v2866 = vpop.f32.mrb[0].mxu0
        %2867 = vdwg.mxu0
        %v2869 = vsel %vm340, %v2640, 0
        %v2872 = vsel %vm340, %v2641, 0
        %v2875 = vsel %vm340, %v2642, 0
        %v2878 = vsel %vm340, %v2643, 0
        %v2881 = vsel %vm340, %v2644, 0
        %v2884 = vsel %vm340, %v2645, 0
        %v2887 = vsel %vm340, %v2646, 0
        %v2890 = vsel %vm340, %v2647, 0
        %v2893 = vsel %vm340, %v2648, 0
        %v2896 = vsel %vm340, %v2649, 0
        %v2899 = vsel %vm340, %v2650, 0
        %v2902 = vsel %vm340, %v2651, 0
        %v2905 = vsel %vm340, %v2652, 0
        %v2908 = vsel %vm340, %v2653, 0
        %v2911 = vsel %vm340, %v2654, 0
        %v2914 = vsel %vm340, %v2655, 0
        %2916 = vmatprep.subr.mxu0 0.0
        %2917 = vmatpush1.msra.mxu0 %v2656
        %2918 = vmatprep.subr.mxu0 0.0
        %2919 = vmatpush1.msra.mxu0 0.0
        %2920 = vmatprep.subr.mxu0 0.0
        %2921 = vmatpush1.msra.mxu0 0.0
        %2922 = vmatprep.subr.mxu0 0.0
        %2923 = vmatpush1.msra.mxu0 0.0
        %2924 = vmatprep.subr.mxu0 0.0
        %2925 = vmatpush1.msra.mxu0 0.0
        %2926 = vmatprep.subr.mxu0 0.0
        %2927 = vmatpush1.msra.mxu0 0.0
        %2928 = vmatprep.subr.mxu0 0.0
        %2929 = vmatpush1.msra.mxu0 0.0
        %2930 = vmatprep.subr.mxu0 0.0
        %2931 = vmatpush1.msra.mxu0 0.0
        %2932 = vmatprep.subr.mxu0 0.0
        %2933 = vmatpush1.msra.mxu0 0.0
        %2934 = vmatprep.subr.mxu0 0.0
        %2935 = vmatpush1.msra.mxu0 0.0
        %2936 = vmatprep.subr.mxu0 0.0
        %2937 = vmatpush1.msra.mxu0 0.0
        %2938 = vmatprep.subr.mxu0 0.0
        %2939 = vmatpush1.msra.mxu0 0.0
        %2940 = vmatprep.subr.mxu0 0.0
        %2941 = vmatpush1.msra.mxu0 0.0
        %2942 = vmatprep.subr.mxu0 0.0
        %2943 = vmatpush1.msra.mxu0 0.0
        %2944 = vmatprep.subr.mxu0 0.0
        %2945 = vmatpush1.msra.mxu0 0.0
        %2946 = vmatprep.subr.mxu0 0.0
        %2947 = vmatpush1.msra.mxu0 0.0
        %2948 = vmatprep.subr.mxu0 0.0
        %2949 = vmatpush1.msra.mxu0 0.0
        %2950 = vmatprep.subr.mxu0 0.0
        %2951 = vmatpush1.msra.mxu0 0.0
        %2952 = vmatprep.subr.mxu0 0.0
        %2953 = vmatpush1.msra.mxu0 0.0
        %2954 = vmatprep.subr.mxu0 0.0
        %2955 = vmatpush1.msra.mxu0 0.0
        %2956 = vmatprep.subr.mxu0 0.0
        %2957 = vmatpush1.msra.mxu0 0.0
        %2958 = vmatprep.subr.mxu0 0.0
        %2959 = vmatpush1.msra.mxu0 0.0
        %2960 = vmatprep.subr.mxu0 0.0
        %2961 = vmatpush1.msra.mxu0 0.0
        %2962 = vmatprep.subr.mxu0 0.0
        %2963 = vmatpush1.msra.mxu0 0.0
        %2964 = vmatprep.subr.mxu0 0.0
        %2965 = vmatpush1.msra.mxu0 0.0
        %2966 = vmatprep.subr.mxu0 0.0
        %2967 = vmatpush1.msra.mxu0 0.0
        %2968 = vmatprep.subr.mxu0 0.0
        %2969 = vmatpush1.msra.mxu0 0.0
        %2970 = vmatprep.subr.mxu0 0.0
        %2971 = vmatpush1.msra.mxu0 0.0
        %2972 = vmatprep.subr.mxu0 0.0
        %2973 = vmatpush1.msra.mxu0 0.0
        %2974 = vmatprep.subr.mxu0 0.0
        %2975 = vmatpush1.msra.mxu0 0.0
        %2976 = vmatprep.subr.mxu0 0.0
        %2977 = vmatpush1.msra.mxu0 0.0
        %2978 = vmatprep.subr.mxu0 0.0
        %2979 = vmatpush1.msra.mxu0 0.0
        %2980 = vmatprep.mubr.f32.mxu0 0.0
        %2981 = vmatmul.mubr.f32.gmra.mrb[0].mxu0 %v2869
        %v2982 = vpop.f32.mrb[0].mxu0
        %v2983 = vadd.f32 %v2790, %v2982
        %v2984 = vpop.f32.mrb[0].mxu0
        %2985 = vmatprep.mubr.f32.mxu0 0.0
        %2986 = vmatmul.mubr.f32.gmra.mrb[0].mxu0 %v2872
        %v2987 = vpop.f32.mrb[0].mxu0
        %v2988 = vadd.f32 %v2795, %v2987
        %v2989 = vpop.f32.mrb[0].mxu0
        %2990 = vmatprep.mubr.f32.mxu0 0.0
        %2991 = vmatmul.mubr.f32.gmra.mrb[0].mxu0 %v2875
        %v2992 = vpop.f32.mrb[0].mxu0
        %v2993 = vadd.f32 %v2800, %v2992
        %v2994 = vpop.f32.mrb[0].mxu0
        %2995 = vmatprep.mubr.f32.mxu0 0.0
        %2996 = vmatmul.mubr.f32.gmra.mrb[0].mxu0 %v2878
        %v2997 = vpop.f32.mrb[0].mxu0
        %v2998 = vadd.f32 %v2805, %v2997
        %v2999 = vpop.f32.mrb[0].mxu0
        %3000 = vmatprep.mubr.f32.mxu0 0.0
        %3001 = vmatmul.mubr.f32.gmra.mrb[0].mxu0 %v2881
        %v3002 = vpop.f32.mrb[0].mxu0
        %v3003 = vadd.f32 %v2810, %v3002
        %v3004 = vpop.f32.mrb[0].mxu0
        %3005 = vmatprep.mubr.f32.mxu0 0.0
        %3006 = vmatmul.mubr.f32.gmra.mrb[0].mxu0 %v2884
        %v3007 = vpop.f32.mrb[0].mxu0
        %v3008 = vadd.f32 %v2815, %v3007
        %v3009 = vpop.f32.mrb[0].mxu0
        %3010 = vmatprep.mubr.f32.mxu0 0.0
        %3011 = vmatmul.mubr.f32.gmra.mrb[0].mxu0 %v2887
        %v3012 = vpop.f32.mrb[0].mxu0
        %v3013 = vadd.f32 %v2820, %v3012
        %v3014 = vpop.f32.mrb[0].mxu0
        %3015 = vmatprep.mubr.f32.mxu0 0.0
        %3016 = vmatmul.mubr.f32.gmra.mrb[0].mxu0 %v2890
        %v3017 = vpop.f32.mrb[0].mxu0
        %v3018 = vadd.f32 %v2825, %v3017
        %v3019 = vpop.f32.mrb[0].mxu0
        %3020 = vmatprep.mubr.f32.mxu0 0.0
        %3021 = vmatmul.mubr.f32.gmra.mrb[0].mxu0 %v2893
        %v3022 = vpop.f32.mrb[0].mxu0
        %v3023 = vadd.f32 %v2830, %v3022
        %v3024 = vpop.f32.mrb[0].mxu0
        %3025 = vmatprep.mubr.f32.mxu0 0.0
        %3026 = vmatmul.mubr.f32.gmra.mrb[0].mxu0 %v2896
        %v3027 = vpop.f32.mrb[0].mxu0
        %v3028 = vadd.f32 %v2835, %v3027
        %v3029 = vpop.f32.mrb[0].mxu0
        %3030 = vmatprep.mubr.f32.mxu0 0.0
        %3031 = vmatmul.mubr.f32.gmra.mrb[0].mxu0 %v2899
        %v3032 = vpop.f32.mrb[0].mxu0
        %v3033 = vadd.f32 %v2840, %v3032
        %v3034 = vpop.f32.mrb[0].mxu0
        %3035 = vmatprep.mubr.f32.mxu0 0.0
        %3036 = vmatmul.mubr.f32.gmra.mrb[0].mxu0 %v2902
        %v3037 = vpop.f32.mrb[0].mxu0
        %v3038 = vadd.f32 %v2845, %v3037
        %v3039 = vpop.f32.mrb[0].mxu0
        %3040 = vmatprep.mubr.f32.mxu0 0.0
        %3041 = vmatmul.mubr.f32.gmra.mrb[0].mxu0 %v2905
        %v3042 = vpop.f32.mrb[0].mxu0
        %v3043 = vadd.f32 %v2850, %v3042
        %v3044 = vpop.f32.mrb[0].mxu0
        %3045 = vmatprep.mubr.f32.mxu0 0.0
        %3046 = vmatmul.mubr.f32.gmra.mrb[0].mxu0 %v2908
        %v3047 = vpop.f32.mrb[0].mxu0
        %v3048 = vadd.f32 %v2855, %v3047
        %v3049 = vpop.f32.mrb[0].mxu0
        %3050 = vmatprep.mubr.f32.mxu0 0.0
        %3051 = vmatmul.mubr.f32.gmra.mrb[0].mxu0 %v2911
        %v3052 = vpop.f32.mrb[0].mxu0
        %v3053 = vadd.f32 %v2860, %v3052
        %v3054 = vpop.f32.mrb[0].mxu0
        %3055 = vmatprep.mubr.f32.mxu0 0.0
        %3056 = vmatmul.mubr.f32.gmra.mrb[0].mxu0 %v2914
        %v3057 = vpop.f32.mrb[0].mxu0
        %v3058 = vadd.f32 %v2865, %v3057
        %v3059 = vpop.f32.mrb[0].mxu0
        %3060 = vdwg.mxu0
        %s3061 = scalar_lea.vmem [#allocation2], 704
        %v3062 = vld [vmem:[%s3061] sm:$0xff]
        %v3063 = vld [vmem:[%s3061 + $0x8] sm:$0xff]
        %v3064 = vld [vmem:[%s3061 + $0x10] sm:$0xff]
        %v3065 = vld [vmem:[%s3061 + $0x18] sm:$0xff]
        %v3066 = vld [vmem:[%s3061 + $0x20] sm:$0xff]
        %v3067 = vld [vmem:[%s3061 + $0x28] sm:$0xff]
        %v3068 = vld [vmem:[%s3061 + $0x30] sm:$0xff]
        %v3069 = vld [vmem:[%s3061 + $0x38] sm:$0xff]
        %v3070 = vld [vmem:[%s3061 + $0x40] sm:$0xff]
        %v3071 = vld [vmem:[%s3061 + $0x48] sm:$0xff]
        %v3072 = vld [vmem:[%s3061 + $0x50] sm:$0xff]
        %v3073 = vld [vmem:[%s3061 + $0x58] sm:$0xff]
        %v3074 = vld [vmem:[%s3061 + $0x60] sm:$0xff]
        %v3075 = vld [vmem:[%s3061 + $0x68] sm:$0xff]
        %v3076 = vld [vmem:[%s3061 + $0x70] sm:$0xff]
        %v3077 = vld [vmem:[%s3061 + $0x78] sm:$0xff]
        %v3078 = vld [vmem:[%s962] sm:$0xff]
        %v3080 = vsel %vm340, %v3062, 0
        %v3083 = vsel %vm340, %v3063, 0
        %v3086 = vsel %vm340, %v3064, 0
        %v3089 = vsel %vm340, %v3065, 0
        %v3092 = vsel %vm340, %v3066, 0
        %v3095 = vsel %vm340, %v3067, 0
        %v3098 = vsel %vm340, %v3068, 0
        %v3101 = vsel %vm340, %v3069, 0
        %v3104 = vsel %vm340, %v3070, 0
        %v3107 = vsel %vm340, %v3071, 0
        %v3110 = vsel %vm340, %v3072, 0
        %v3113 = vsel %vm340, %v3073, 0
        %v3116 = vsel %vm340, %v3074, 0
        %v3119 = vsel %vm340, %v3075, 0
        %v3122 = vsel %vm340, %v3076, 0
        %v3125 = vsel %vm340, %v3077, 0
        %3127 = vmatprep.subr.mxu0 0.0
        %3128 = vmatpush1.msra.mxu0 %v3078
        %3129 = vmatprep.subr.mxu0 0.0
        %3130 = vmatpush1.msra.mxu0 0.0
        %3131 = vmatprep.subr.mxu0 0.0
        %3132 = vmatpush1.msra.mxu0 0.0
        %3133 = vmatprep.subr.mxu0 0.0
        %3134 = vmatpush1.msra.mxu0 0.0
        %3135 = vmatprep.subr.mxu0 0.0
        %3136 = vmatpush1.msra.mxu0 0.0
        %3137 = vmatprep.subr.mxu0 0.0
        %3138 = vmatpush1.msra.mxu0 0.0
        %3139 = vmatprep.subr.mxu0 0.0
        %3140 = vmatpush1.msra.mxu0 0.0
        %3141 = vmatprep.subr.mxu0 0.0
        %3142 = vmatpush1.msra.mxu0 0.0
        %3143 = vmatprep.subr.mxu0 0.0
        %3144 = vmatpush1.msra.mxu0 0.0
        %3145 = vmatprep.subr.mxu0 0.0
        %3146 = vmatpush1.msra.mxu0 0.0
        %3147 = vmatprep.subr.mxu0 0.0
        %3148 = vmatpush1.msra.mxu0 0.0
        %3149 = vmatprep.subr.mxu0 0.0
        %3150 = vmatpush1.msra.mxu0 0.0
        %3151 = vmatprep.subr.mxu0 0.0
        %3152 = vmatpush1.msra.mxu0 0.0
        %3153 = vmatprep.subr.mxu0 0.0
        %3154 = vmatpush1.msra.mxu0 0.0
        %3155 = vmatprep.subr.mxu0 0.0
        %3156 = vmatpush1.msra.mxu0 0.0
        %3157 = vmatprep.subr.mxu0 0.0
        %3158 = vmatpush1.msra.mxu0 0.0
        %3159 = vmatprep.subr.mxu0 0.0
        %3160 = vmatpush1.msra.mxu0 0.0
        %3161 = vmatprep.subr.mxu0 0.0
        %3162 = vmatpush1.msra.mxu0 0.0
        %3163 = vmatprep.subr.mxu0 0.0
        %3164 = vmatpush1.msra.mxu0 0.0
        %3165 = vmatprep.subr.mxu0 0.0
        %3166 = vmatpush1.msra.mxu0 0.0
        %3167 = vmatprep.subr.mxu0 0.0
        %3168 = vmatpush1.msra.mxu0 0.0
        %3169 = vmatprep.subr.mxu0 0.0
        %3170 = vmatpush1.msra.mxu0 0.0
        %3171 = vmatprep.subr.mxu0 0.0
        %3172 = vmatpush1.msra.mxu0 0.0
        %3173 = vmatprep.subr.mxu0 0.0
        %3174 = vmatpush1.msra.mxu0 0.0
        %3175 = vmatprep.subr.mxu0 0.0
        %3176 = vmatpush1.msra.mxu0 0.0
        %3177 = vmatprep.subr.mxu0 0.0
        %3178 = vmatpush1.msra.mxu0 0.0
        %3179 = vmatprep.subr.mxu0 0.0
        %3180 = vmatpush1.msra.mxu0 0.0
        %3181 = vmatprep.subr.mxu0 0.0
        %3182 = vmatpush1.msra.mxu0 0.0
        %3183 = vmatprep.subr.mxu0 0.0
        %3184 = vmatpush1.msra.mxu0 0.0
        %3185 = vmatprep.subr.mxu0 0.0
        %3186 = vmatpush1.msra.mxu0 0.0
        %3187 = vmatprep.subr.mxu0 0.0
        %3188 = vmatpush1.msra.mxu0 0.0
        %3189 = vmatprep.subr.mxu0 0.0
        %3190 = vmatpush1.msra.mxu0 0.0
        %3191 = vmatprep.mubr.f32.mxu0 0.0
        %3192 = vmatmul.mubr.f32.gmra.mrb[0].mxu0 %v3080
        %v3193 = vpop.f32.mrb[0].mxu0
        %v3194 = vadd.f32 0.0, %v3193
        %v3195 = vpop.f32.mrb[0].mxu0
        %3196 = vmatprep.mubr.f32.mxu0 0.0
        %3197 = vmatmul.mubr.f32.gmra.mrb[0].mxu0 %v3083
        %v3198 = vpop.f32.mrb[0].mxu0
        %v3199 = vadd.f32 0.0, %v3198
        %v3200 = vpop.f32.mrb[0].mxu0
        %3201 = vmatprep.mubr.f32.mxu0 0.0
        %3202 = vmatmul.mubr.f32.gmra.mrb[0].mxu0 %v3086
        %v3203 = vpop.f32.mrb[0].mxu0
        %v3204 = vadd.f32 0.0, %v3203
        %v3205 = vpop.f32.mrb[0].mxu0
        %3206 = vmatprep.mubr.f32.mxu0 0.0
        %3207 = vmatmul.mubr.f32.gmra.mrb[0].mxu0 %v3089
        %v3208 = vpop.f32.mrb[0].mxu0
        %v3209 = vadd.f32 0.0, %v3208
        %v3210 = vpop.f32.mrb[0].mxu0
        %3211 = vmatprep.mubr.f32.mxu0 0.0
        %3212 = vmatmul.mubr.f32.gmra.mrb[0].mxu0 %v3092
        %v3213 = vpop.f32.mrb[0].mxu0
        %v3214 = vadd.f32 0.0, %v3213
        %v3215 = vpop.f32.mrb[0].mxu0
        %3216 = vmatprep.mubr.f32.mxu0 0.0
        %3217 = vmatmul.mubr.f32.gmra.mrb[0].mxu0 %v3095
        %v3218 = vpop.f32.mrb[0].mxu0
        %v3219 = vadd.f32 0.0, %v3218
        %v3220 = vpop.f32.mrb[0].mxu0
        %3221 = vmatprep.mubr.f32.mxu0 0.0
        %3222 = vmatmul.mubr.f32.gmra.mrb[0].mxu0 %v3098
        %v3223 = vpop.f32.mrb[0].mxu0
        %v3224 = vadd.f32 0.0, %v3223
        %v3225 = vpop.f32.mrb[0].mxu0
        %3226 = vmatprep.mubr.f32.mxu0 0.0
        %3227 = vmatmul.mubr.f32.gmra.mrb[0].mxu0 %v3101
        %v3228 = vpop.f32.mrb[0].mxu0
        %v3229 = vadd.f32 0.0, %v3228
        %v3230 = vpop.f32.mrb[0].mxu0
        %3231 = vmatprep.mubr.f32.mxu0 0.0
        %3232 = vmatmul.mubr.f32.gmra.mrb[0].mxu0 %v3104
        %v3233 = vpop.f32.mrb[0].mxu0
        %v3234 = vadd.f32 0.0, %v3233
        %v3235 = vpop.f32.mrb[0].mxu0
        %3236 = vmatprep.mubr.f32.mxu0 0.0
        %3237 = vmatmul.mubr.f32.gmra.mrb[0].mxu0 %v3107
        %v3238 = vpop.f32.mrb[0].mxu0
        %v3239 = vadd.f32 0.0, %v3238
        %v3240 = vpop.f32.mrb[0].mxu0
        %3241 = vmatprep.mubr.f32.mxu0 0.0
        %3242 = vmatmul.mubr.f32.gmra.mrb[0].mxu0 %v3110
        %v3243 = vpop.f32.mrb[0].mxu0
        %v3244 = vadd.f32 0.0, %v3243
        %v3245 = vpop.f32.mrb[0].mxu0
        %3246 = vmatprep.mubr.f32.mxu0 0.0
        %3247 = vmatmul.mubr.f32.gmra.mrb[0].mxu0 %v3113
        %v3248 = vpop.f32.mrb[0].mxu0
        %v3249 = vadd.f32 0.0, %v3248
        %v3250 = vpop.f32.mrb[0].mxu0
        %3251 = vmatprep.mubr.f32.mxu0 0.0
        %3252 = vmatmul.mubr.f32.gmra.mrb[0].mxu0 %v3116
        %v3253 = vpop.f32.mrb[0].mxu0
        %v3254 = vadd.f32 0.0, %v3253
        %v3255 = vpop.f32.mrb[0].mxu0
        %3256 = vmatprep.mubr.f32.mxu0 0.0
        %3257 = vmatmul.mubr.f32.gmra.mrb[0].mxu0 %v3119
        %v3258 = vpop.f32.mrb[0].mxu0
        %v3259 = vadd.f32 0.0, %v3258
        %v3260 = vpop.f32.mrb[0].mxu0
        %3261 = vmatprep.mubr.f32.mxu0 0.0
        %3262 = vmatmul.mubr.f32.gmra.mrb[0].mxu0 %v3122
        %v3263 = vpop.f32.mrb[0].mxu0
        %v3264 = vadd.f32 0.0, %v3263
        %v3265 = vpop.f32.mrb[0].mxu0
        %3266 = vmatprep.mubr.f32.mxu0 0.0
        %3267 = vmatmul.mubr.f32.gmra.mrb[0].mxu0 %v3125
        %v3268 = vpop.f32.mrb[0].mxu0
        %v3269 = vadd.f32 0.0, %v3268
        %v3270 = vpop.f32.mrb[0].mxu0
        %3271 = vdwg.mxu0
        %v3272 = vadd.f32 %v2983, %v3194
        %v3273 = vadd.f32 %v2988, %v3199
        %v3274 = vadd.f32 %v2993, %v3204
        %v3275 = vadd.f32 %v2998, %v3209
        %v3276 = vadd.f32 %v3003, %v3214
        %v3277 = vadd.f32 %v3008, %v3219
        %v3278 = vadd.f32 %v3013, %v3224
        %v3279 = vadd.f32 %v3018, %v3229
        %v3280 = vadd.f32 %v3023, %v3234
        %v3281 = vadd.f32 %v3028, %v3239
        %v3282 = vadd.f32 %v3033, %v3244
        %v3283 = vadd.f32 %v3038, %v3249
        %v3284 = vadd.f32 %v3043, %v3254
        %v3285 = vadd.f32 %v3048, %v3259
        %v3286 = vadd.f32 %v3053, %v3264
        %v3287 = vadd.f32 %v3058, %v3269
        %s3288 = scalar_lea.vmem [#allocation2], 144
        %v3289 = vld [vmem:[%s3288] sm:$0xff]
        %v3290 = vld [vmem:[%s3288 + $0x8] sm:$0xff]
        %v3291 = vld [vmem:[%s3288 + $0x10] sm:$0xff]
        %v3292 = vld [vmem:[%s3288 + $0x18] sm:$0xff]
        %v3293 = vld [vmem:[%s3288 + $0x20] sm:$0xff]
        %v3294 = vld [vmem:[%s3288 + $0x28] sm:$0xff]
        %v3295 = vld [vmem:[%s3288 + $0x30] sm:$0xff]
        %v3296 = vld [vmem:[%s3288 + $0x38] sm:$0xff]
        %v3297 = vld [vmem:[%s3288 + $0x40] sm:$0xff]
        %v3298 = vld [vmem:[%s3288 + $0x48] sm:$0xff]
        %v3299 = vld [vmem:[%s3288 + $0x50] sm:$0xff]
        %v3300 = vld [vmem:[%s3288 + $0x58] sm:$0xff]
        %v3301 = vld [vmem:[%s3288 + $0x60] sm:$0xff]
        %v3302 = vld [vmem:[%s3288 + $0x68] sm:$0xff]
        %v3303 = vld [vmem:[%s3288 + $0x70] sm:$0xff]
        %v3304 = vld [vmem:[%s3288 + $0x78] sm:$0xff]
        %v3305 = vld [vmem:[%s1190] sm:$0xff]
        %v3307 = vsel %vm340, %v3289, 0
        %v3310 = vsel %vm340, %v3290, 0
        %v3313 = vsel %vm340, %v3291, 0
        %v3316 = vsel %vm340, %v3292, 0
        %v3319 = vsel %vm340, %v3293, 0
        %v3322 = vsel %vm340, %v3294, 0
        %v3325 = vsel %vm340, %v3295, 0
        %v3328 = vsel %vm340, %v3296, 0
        %v3331 = vsel %vm340, %v3297, 0
        %v3334 = vsel %vm340, %v3298, 0
        %v3337 = vsel %vm340, %v3299, 0
        %v3340 = vsel %vm340, %v3300, 0
        %v3343 = vsel %vm340, %v3301, 0
        %v3346 = vsel %vm340, %v3302, 0
        %v3349 = vsel %vm340, %v3303, 0
        %v3352 = vsel %vm340, %v3304, 0
        %3354 = vmatprep.subr.mxu0 0.0
        %3355 = vmatpush1.msra.mxu0 %v3305
        %3356 = vmatprep.subr.mxu0 0.0
        %3357 = vmatpush1.msra.mxu0 0.0
        %3358 = vmatprep.subr.mxu0 0.0
        %3359 = vmatpush1.msra.mxu0 0.0
        %3360 = vmatprep.subr.mxu0 0.0
        %3361 = vmatpush1.msra.mxu0 0.0
        %3362 = vmatprep.subr.mxu0 0.0
        %3363 = vmatpush1.msra.mxu0 0.0
        %3364 = vmatprep.subr.mxu0 0.0
        %3365 = vmatpush1.msra.mxu0 0.0
        %3366 = vmatprep.subr.mxu0 0.0
        %3367 = vmatpush1.msra.mxu0 0.0
        %3368 = vmatprep.subr.mxu0 0.0
        %3369 = vmatpush1.msra.mxu0 0.0
        %3370 = vmatprep.subr.mxu0 0.0
        %3371 = vmatpush1.msra.mxu0 0.0
        %3372 = vmatprep.subr.mxu0 0.0
        %3373 = vmatpush1.msra.mxu0 0.0
        %3374 = vmatprep.subr.mxu0 0.0
        %3375 = vmatpush1.msra.mxu0 0.0
        %3376 = vmatprep.subr.mxu0 0.0
        %3377 = vmatpush1.msra.mxu0 0.0
        %3378 = vmatprep.subr.mxu0 0.0
        %3379 = vmatpush1.msra.mxu0 0.0
        %3380 = vmatprep.subr.mxu0 0.0
        %3381 = vmatpush1.msra.mxu0 0.0
        %3382 = vmatprep.subr.mxu0 0.0
        %3383 = vmatpush1.msra.mxu0 0.0
        %3384 = vmatprep.subr.mxu0 0.0
        %3385 = vmatpush1.msra.mxu0 0.0
        %3386 = vmatprep.subr.mxu0 0.0
        %3387 = vmatpush1.msra.mxu0 0.0
        %3388 = vmatprep.subr.mxu0 0.0
        %3389 = vmatpush1.msra.mxu0 0.0
        %3390 = vmatprep.subr.mxu0 0.0
        %3391 = vmatpush1.msra.mxu0 0.0
        %3392 = vmatprep.subr.mxu0 0.0
        %3393 = vmatpush1.msra.mxu0 0.0
        %3394 = vmatprep.subr.mxu0 0.0
        %3395 = vmatpush1.msra.mxu0 0.0
        %3396 = vmatprep.subr.mxu0 0.0
        %3397 = vmatpush1.msra.mxu0 0.0
        %3398 = vmatprep.subr.mxu0 0.0
        %3399 = vmatpush1.msra.mxu0 0.0
        %3400 = vmatprep.subr.mxu0 0.0
        %3401 = vmatpush1.msra.mxu0 0.0
        %3402 = vmatprep.subr.mxu0 0.0
        %3403 = vmatpush1.msra.mxu0 0.0
        %3404 = vmatprep.subr.mxu0 0.0
        %3405 = vmatpush1.msra.mxu0 0.0
        %3406 = vmatprep.subr.mxu0 0.0
        %3407 = vmatpush1.msra.mxu0 0.0
        %3408 = vmatprep.subr.mxu0 0.0
        %3409 = vmatpush1.msra.mxu0 0.0
        %3410 = vmatprep.subr.mxu0 0.0
        %3411 = vmatpush1.msra.mxu0 0.0
        %3412 = vmatprep.subr.mxu0 0.0
        %3413 = vmatpush1.msra.mxu0 0.0
        %3414 = vmatprep.subr.mxu0 0.0
        %3415 = vmatpush1.msra.mxu0 0.0
        %3416 = vmatprep.subr.mxu0 0.0
        %3417 = vmatpush1.msra.mxu0 0.0
        %3418 = vmatprep.mubr.f32.mxu0 0.0
        %3419 = vmatmul.mubr.f32.gmra.mrb[0].mxu0 %v3307
        %v3420 = vpop.f32.mrb[0].mxu0
        %v3421 = vadd.f32 0.0, %v3420
        %v3422 = vpop.f32.mrb[0].mxu0
        %3423 = vmatprep.mubr.f32.mxu0 0.0
        %3424 = vmatmul.mubr.f32.gmra.mrb[0].mxu0 %v3310
        %v3425 = vpop.f32.mrb[0].mxu0
        %v3426 = vadd.f32 0.0, %v3425
        %v3427 = vpop.f32.mrb[0].mxu0
        %3428 = vmatprep.mubr.f32.mxu0 0.0
        %3429 = vmatmul.mubr.f32.gmra.mrb[0].mxu0 %v3313
        %v3430 = vpop.f32.mrb[0].mxu0
        %v3431 = vadd.f32 0.0, %v3430
        %v3432 = vpop.f32.mrb[0].mxu0
        %3433 = vmatprep.mubr.f32.mxu0 0.0
        %3434 = vmatmul.mubr.f32.gmra.mrb[0].mxu0 %v3316
        %v3435 = vpop.f32.mrb[0].mxu0
        %v3436 = vadd.f32 0.0, %v3435
        %v3437 = vpop.f32.mrb[0].mxu0
        %3438 = vmatprep.mubr.f32.mxu0 0.0
        %3439 = vmatmul.mubr.f32.gmra.mrb[0].mxu0 %v3319
        %v3440 = vpop.f32.mrb[0].mxu0
        %v3441 = vadd.f32 0.0, %v3440
        %v3442 = vpop.f32.mrb[0].mxu0
        %3443 = vmatprep.mubr.f32.mxu0 0.0
        %3444 = vmatmul.mubr.f32.gmra.mrb[0].mxu0 %v3322
        %v3445 = vpop.f32.mrb[0].mxu0
        %v3446 = vadd.f32 0.0, %v3445
        %v3447 = vpop.f32.mrb[0].mxu0
        %3448 = vmatprep.mubr.f32.mxu0 0.0
        %3449 = vmatmul.mubr.f32.gmra.mrb[0].mxu0 %v3325
        %v3450 = vpop.f32.mrb[0].mxu0
        %v3451 = vadd.f32 0.0, %v3450
        %v3452 = vpop.f32.mrb[0].mxu0
        %3453 = vmatprep.mubr.f32.mxu0 0.0
        %3454 = vmatmul.mubr.f32.gmra.mrb[0].mxu0 %v3328
        %v3455 = vpop.f32.mrb[0].mxu0
        %v3456 = vadd.f32 0.0, %v3455
        %v3457 = vpop.f32.mrb[0].mxu0
        %3458 = vmatprep.mubr.f32.mxu0 0.0
        %3459 = vmatmul.mubr.f32.gmra.mrb[0].mxu0 %v3331
        %v3460 = vpop.f32.mrb[0].mxu0
        %v3461 = vadd.f32 0.0, %v3460
        %v3462 = vpop.f32.mrb[0].mxu0
        %3463 = vmatprep.mubr.f32.mxu0 0.0
        %3464 = vmatmul.mubr.f32.gmra.mrb[0].mxu0 %v3334
        %v3465 = vpop.f32.mrb[0].mxu0
        %v3466 = vadd.f32 0.0, %v3465
        %v3467 = vpop.f32.mrb[0].mxu0
        %3468 = vmatprep.mubr.f32.mxu0 0.0
        %3469 = vmatmul.mubr.f32.gmra.mrb[0].mxu0 %v3337
        %v3470 = vpop.f32.mrb[0].mxu0
        %v3471 = vadd.f32 0.0, %v3470
        %v3472 = vpop.f32.mrb[0].mxu0
        %3473 = vmatprep.mubr.f32.mxu0 0.0
        %3474 = vmatmul.mubr.f32.gmra.mrb[0].mxu0 %v3340
        %v3475 = vpop.f32.mrb[0].mxu0
        %v3476 = vadd.f32 0.0, %v3475
        %v3477 = vpop.f32.mrb[0].mxu0
        %3478 = vmatprep.mubr.f32.mxu0 0.0
        %3479 = vmatmul.mubr.f32.gmra.mrb[0].mxu0 %v3343
        %v3480 = vpop.f32.mrb[0].mxu0
        %v3481 = vadd.f32 0.0, %v3480
        %v3482 = vpop.f32.mrb[0].mxu0
        %3483 = vmatprep.mubr.f32.mxu0 0.0
        %3484 = vmatmul.mubr.f32.gmra.mrb[0].mxu0 %v3346
        %v3485 = vpop.f32.mrb[0].mxu0
        %v3486 = vadd.f32 0.0, %v3485
        %v3487 = vpop.f32.mrb[0].mxu0
        %3488 = vmatprep.mubr.f32.mxu0 0.0
        %3489 = vmatmul.mubr.f32.gmra.mrb[0].mxu0 %v3349
        %v3490 = vpop.f32.mrb[0].mxu0
        %v3491 = vadd.f32 0.0, %v3490
        %v3492 = vpop.f32.mrb[0].mxu0
        %3493 = vmatprep.mubr.f32.mxu0 0.0
        %3494 = vmatmul.mubr.f32.gmra.mrb[0].mxu0 %v3352
        %v3495 = vpop.f32.mrb[0].mxu0
        %v3496 = vadd.f32 0.0, %v3495
        %v3497 = vpop.f32.mrb[0].mxu0
        %3498 = vdwg.mxu0
        %v3499 = vadd.f32 %v3272, %v3421
        %v3500 = vadd.f32 %v3273, %v3426
        %v3501 = vadd.f32 %v3274, %v3431
        %v3502 = vadd.f32 %v3275, %v3436
        %v3503 = vadd.f32 %v3276, %v3441
        %v3504 = vadd.f32 %v3277, %v3446
        %v3505 = vadd.f32 %v3278, %v3451
        %v3506 = vadd.f32 %v3279, %v3456
        %v3507 = vadd.f32 %v3280, %v3461
        %v3508 = vadd.f32 %v3281, %v3466
        %v3509 = vadd.f32 %v3282, %v3471
        %v3510 = vadd.f32 %v3283, %v3476
        %v3511 = vadd.f32 %v3284, %v3481
        %v3512 = vadd.f32 %v3285, %v3486
        %v3513 = vadd.f32 %v3286, %v3491
        %v3514 = vadd.f32 %v3287, %v3496
        %s3515 = scalar_lea.vmem [#allocation2], 432
        %v3516 = vld [vmem:[%s3515] sm:$0xff]
        %v3517 = vld [vmem:[%s3515 + $0x8] sm:$0xff]
        %v3518 = vld [vmem:[%s3515 + $0x10] sm:$0xff]
        %v3519 = vld [vmem:[%s3515 + $0x18] sm:$0xff]
        %v3520 = vld [vmem:[%s3515 + $0x20] sm:$0xff]
        %v3521 = vld [vmem:[%s3515 + $0x28] sm:$0xff]
        %v3522 = vld [vmem:[%s3515 + $0x30] sm:$0xff]
        %v3523 = vld [vmem:[%s3515 + $0x38] sm:$0xff]
        %v3524 = vld [vmem:[%s3515 + $0x40] sm:$0xff]
        %v3525 = vld [vmem:[%s3515 + $0x48] sm:$0xff]
        %v3526 = vld [vmem:[%s3515 + $0x50] sm:$0xff]
        %v3527 = vld [vmem:[%s3515 + $0x58] sm:$0xff]
        %v3528 = vld [vmem:[%s3515 + $0x60] sm:$0xff]
        %v3529 = vld [vmem:[%s3515 + $0x68] sm:$0xff]
        %v3530 = vld [vmem:[%s3515 + $0x70] sm:$0xff]
        %v3531 = vld [vmem:[%s3515 + $0x78] sm:$0xff]
        %v3532 = vld [vmem:[%s1418] sm:$0xff]
        %v3534 = vsel %vm340, %v3516, 0
        %v3537 = vsel %vm340, %v3517, 0
        %v3540 = vsel %vm340, %v3518, 0
        %v3543 = vsel %vm340, %v3519, 0
        %v3546 = vsel %vm340, %v3520, 0
        %v3549 = vsel %vm340, %v3521, 0
        %v3552 = vsel %vm340, %v3522, 0
        %v3555 = vsel %vm340, %v3523, 0
        %v3558 = vsel %vm340, %v3524, 0
        %v3561 = vsel %vm340, %v3525, 0
        %v3564 = vsel %vm340, %v3526, 0
        %v3567 = vsel %vm340, %v3527, 0
        %v3570 = vsel %vm340, %v3528, 0
        %v3573 = vsel %vm340, %v3529, 0
        %v3576 = vsel %vm340, %v3530, 0
        %v3579 = vsel %vm340, %v3531, 0
        %3581 = vmatprep.subr.mxu0 0.0
        %3582 = vmatpush1.msra.mxu0 %v3532
        %3583 = vmatprep.subr.mxu0 0.0
        %3584 = vmatpush1.msra.mxu0 0.0
        %3585 = vmatprep.subr.mxu0 0.0
        %3586 = vmatpush1.msra.mxu0 0.0
        %3587 = vmatprep.subr.mxu0 0.0
        %3588 = vmatpush1.msra.mxu0 0.0
        %3589 = vmatprep.subr.mxu0 0.0
        %3590 = vmatpush1.msra.mxu0 0.0
        %3591 = vmatprep.subr.mxu0 0.0
        %3592 = vmatpush1.msra.mxu0 0.0
        %3593 = vmatprep.subr.mxu0 0.0
        %3594 = vmatpush1.msra.mxu0 0.0
        %3595 = vmatprep.subr.mxu0 0.0
        %3596 = vmatpush1.msra.mxu0 0.0
        %3597 = vmatprep.subr.mxu0 0.0
        %3598 = vmatpush1.msra.mxu0 0.0
        %3599 = vmatprep.subr.mxu0 0.0
        %3600 = vmatpush1.msra.mxu0 0.0
        %3601 = vmatprep.subr.mxu0 0.0
        %3602 = vmatpush1.msra.mxu0 0.0
        %3603 = vmatprep.subr.mxu0 0.0
        %3604 = vmatpush1.msra.mxu0 0.0
        %3605 = vmatprep.subr.mxu0 0.0
        %3606 = vmatpush1.msra.mxu0 0.0
        %3607 = vmatprep.subr.mxu0 0.0
        %3608 = vmatpush1.msra.mxu0 0.0
        %3609 = vmatprep.subr.mxu0 0.0
        %3610 = vmatpush1.msra.mxu0 0.0
        %3611 = vmatprep.subr.mxu0 0.0
        %3612 = vmatpush1.msra.mxu0 0.0
        %3613 = vmatprep.subr.mxu0 0.0
        %3614 = vmatpush1.msra.mxu0 0.0
        %3615 = vmatprep.subr.mxu0 0.0
        %3616 = vmatpush1.msra.mxu0 0.0
        %3617 = vmatprep.subr.mxu0 0.0
        %3618 = vmatpush1.msra.mxu0 0.0
        %3619 = vmatprep.subr.mxu0 0.0
        %3620 = vmatpush1.msra.mxu0 0.0
        %3621 = vmatprep.subr.mxu0 0.0
        %3622 = vmatpush1.msra.mxu0 0.0
        %3623 = vmatprep.subr.mxu0 0.0
        %3624 = vmatpush1.msra.mxu0 0.0
        %3625 = vmatprep.subr.mxu0 0.0
        %3626 = vmatpush1.msra.mxu0 0.0
        %3627 = vmatprep.subr.mxu0 0.0
        %3628 = vmatpush1.msra.mxu0 0.0
        %3629 = vmatprep.subr.mxu0 0.0
        %3630 = vmatpush1.msra.mxu0 0.0
        %3631 = vmatprep.subr.mxu0 0.0
        %3632 = vmatpush1.msra.mxu0 0.0
        %3633 = vmatprep.subr.mxu0 0.0
        %3634 = vmatpush1.msra.mxu0 0.0
        %3635 = vmatprep.subr.mxu0 0.0
        %3636 = vmatpush1.msra.mxu0 0.0
        %3637 = vmatprep.subr.mxu0 0.0
        %3638 = vmatpush1.msra.mxu0 0.0
        %3639 = vmatprep.subr.mxu0 0.0
        %3640 = vmatpush1.msra.mxu0 0.0
        %3641 = vmatprep.subr.mxu0 0.0
        %3642 = vmatpush1.msra.mxu0 0.0
        %3643 = vmatprep.subr.mxu0 0.0
        %3644 = vmatpush1.msra.mxu0 0.0
        %3645 = vmatprep.mubr.f32.mxu0 0.0
        %3646 = vmatmul.mubr.f32.gmra.mrb[0].mxu0 %v3534
        %v3647 = vpop.f32.mrb[0].mxu0
        %v3648 = vadd.f32 0.0, %v3647
        %v3649 = vpop.f32.mrb[0].mxu0
        %3650 = vmatprep.mubr.f32.mxu0 0.0
        %3651 = vmatmul.mubr.f32.gmra.mrb[0].mxu0 %v3537
        %v3652 = vpop.f32.mrb[0].mxu0
        %v3653 = vadd.f32 0.0, %v3652
        %v3654 = vpop.f32.mrb[0].mxu0
        %3655 = vmatprep.mubr.f32.mxu0 0.0
        %3656 = vmatmul.mubr.f32.gmra.mrb[0].mxu0 %v3540
        %v3657 = vpop.f32.mrb[0].mxu0
        %v3658 = vadd.f32 0.0, %v3657
        %v3659 = vpop.f32.mrb[0].mxu0
        %3660 = vmatprep.mubr.f32.mxu0 0.0
        %3661 = vmatmul.mubr.f32.gmra.mrb[0].mxu0 %v3543
        %v3662 = vpop.f32.mrb[0].mxu0
        %v3663 = vadd.f32 0.0, %v3662
        %v3664 = vpop.f32.mrb[0].mxu0
        %3665 = vmatprep.mubr.f32.mxu0 0.0
        %3666 = vmatmul.mubr.f32.gmra.mrb[0].mxu0 %v3546
        %v3667 = vpop.f32.mrb[0].mxu0
        %v3668 = vadd.f32 0.0, %v3667
        %v3669 = vpop.f32.mrb[0].mxu0
        %3670 = vmatprep.mubr.f32.mxu0 0.0
        %3671 = vmatmul.mubr.f32.gmra.mrb[0].mxu0 %v3549
        %v3672 = vpop.f32.mrb[0].mxu0
        %v3673 = vadd.f32 0.0, %v3672
        %v3674 = vpop.f32.mrb[0].mxu0
        %3675 = vmatprep.mubr.f32.mxu0 0.0
        %3676 = vmatmul.mubr.f32.gmra.mrb[0].mxu0 %v3552
        %v3677 = vpop.f32.mrb[0].mxu0
        %v3678 = vadd.f32 0.0, %v3677
        %v3679 = vpop.f32.mrb[0].mxu0
        %3680 = vmatprep.mubr.f32.mxu0 0.0
        %3681 = vmatmul.mubr.f32.gmra.mrb[0].mxu0 %v3555
        %v3682 = vpop.f32.mrb[0].mxu0
        %v3683 = vadd.f32 0.0, %v3682
        %v3684 = vpop.f32.mrb[0].mxu0
        %3685 = vmatprep.mubr.f32.mxu0 0.0
        %3686 = vmatmul.mubr.f32.gmra.mrb[0].mxu0 %v3558
        %v3687 = vpop.f32.mrb[0].mxu0
        %v3688 = vadd.f32 0.0, %v3687
        %v3689 = vpop.f32.mrb[0].mxu0
        %3690 = vmatprep.mubr.f32.mxu0 0.0
        %3691 = vmatmul.mubr.f32.gmra.mrb[0].mxu0 %v3561
        %v3692 = vpop.f32.mrb[0].mxu0
        %v3693 = vadd.f32 0.0, %v3692
        %v3694 = vpop.f32.mrb[0].mxu0
        %3695 = vmatprep.mubr.f32.mxu0 0.0
        %3696 = vmatmul.mubr.f32.gmra.mrb[0].mxu0 %v3564
        %v3697 = vpop.f32.mrb[0].mxu0
        %v3698 = vadd.f32 0.0, %v3697
        %v3699 = vpop.f32.mrb[0].mxu0
        %3700 = vmatprep.mubr.f32.mxu0 0.0
        %3701 = vmatmul.mubr.f32.gmra.mrb[0].mxu0 %v3567
        %v3702 = vpop.f32.mrb[0].mxu0
        %v3703 = vadd.f32 0.0, %v3702
        %v3704 = vpop.f32.mrb[0].mxu0
        %3705 = vmatprep.mubr.f32.mxu0 0.0
        %3706 = vmatmul.mubr.f32.gmra.mrb[0].mxu0 %v3570
        %v3707 = vpop.f32.mrb[0].mxu0
        %v3708 = vadd.f32 0.0, %v3707
        %v3709 = vpop.f32.mrb[0].mxu0
        %3710 = vmatprep.mubr.f32.mxu0 0.0
        %3711 = vmatmul.mubr.f32.gmra.mrb[0].mxu0 %v3573
        %v3712 = vpop.f32.mrb[0].mxu0
        %v3713 = vadd.f32 0.0, %v3712
        %v3714 = vpop.f32.mrb[0].mxu0
        %3715 = vmatprep.mubr.f32.mxu0 0.0
        %3716 = vmatmul.mubr.f32.gmra.mrb[0].mxu0 %v3576
        %v3717 = vpop.f32.mrb[0].mxu0
        %v3718 = vadd.f32 0.0, %v3717
        %v3719 = vpop.f32.mrb[0].mxu0
        %3720 = vmatprep.mubr.f32.mxu0 0.0
        %3721 = vmatmul.mubr.f32.gmra.mrb[0].mxu0 %v3579
        %v3722 = vpop.f32.mrb[0].mxu0
        %v3723 = vadd.f32 0.0, %v3722
        %v3724 = vpop.f32.mrb[0].mxu0
        %3725 = vdwg.mxu0
        %v3726 = vadd.f32 %v3499, %v3648
        %v3727 = vadd.f32 %v3500, %v3653
        %v3728 = vadd.f32 %v3501, %v3658
        %v3729 = vadd.f32 %v3502, %v3663
        %v3730 = vadd.f32 %v3503, %v3668
        %v3731 = vadd.f32 %v3504, %v3673
        %v3732 = vadd.f32 %v3505, %v3678
        %v3733 = vadd.f32 %v3506, %v3683
        %v3734 = vadd.f32 %v3507, %v3688
        %v3735 = vadd.f32 %v3508, %v3693
        %v3736 = vadd.f32 %v3509, %v3698
        %v3737 = vadd.f32 %v3510, %v3703
        %v3738 = vadd.f32 %v3511, %v3708
        %v3739 = vadd.f32 %v3512, %v3713
        %v3740 = vadd.f32 %v3513, %v3718
        %v3741 = vadd.f32 %v3514, %v3723
        %s3742 = scalar_lea.vmem [#allocation2], 720
        %v3743 = vld [vmem:[%s3742] sm:$0xff]
        %v3744 = vld [vmem:[%s3742 + $0x8] sm:$0xff]
        %v3745 = vld [vmem:[%s3742 + $0x10] sm:$0xff]
        %v3746 = vld [vmem:[%s3742 + $0x18] sm:$0xff]
        %v3747 = vld [vmem:[%s3742 + $0x20] sm:$0xff]
        %v3748 = vld [vmem:[%s3742 + $0x28] sm:$0xff]
        %v3749 = vld [vmem:[%s3742 + $0x30] sm:$0xff]
        %v3750 = vld [vmem:[%s3742 + $0x38] sm:$0xff]
        %v3751 = vld [vmem:[%s3742 + $0x40] sm:$0xff]
        %v3752 = vld [vmem:[%s3742 + $0x48] sm:$0xff]
        %v3753 = vld [vmem:[%s3742 + $0x50] sm:$0xff]
        %v3754 = vld [vmem:[%s3742 + $0x58] sm:$0xff]
        %v3755 = vld [vmem:[%s3742 + $0x60] sm:$0xff]
        %v3756 = vld [vmem:[%s3742 + $0x68] sm:$0xff]
        %v3757 = vld [vmem:[%s3742 + $0x70] sm:$0xff]
        %v3758 = vld [vmem:[%s3742 + $0x78] sm:$0xff]
        %v3759 = vld [vmem:[%s1646] sm:$0xff]
        %v3761 = vsel %vm340, %v3743, 0
        %v3764 = vsel %vm340, %v3744, 0
        %v3767 = vsel %vm340, %v3745, 0
        %v3770 = vsel %vm340, %v3746, 0
        %v3773 = vsel %vm340, %v3747, 0
        %v3776 = vsel %vm340, %v3748, 0
        %v3779 = vsel %vm340, %v3749, 0
        %v3782 = vsel %vm340, %v3750, 0
        %v3785 = vsel %vm340, %v3751, 0
        %v3788 = vsel %vm340, %v3752, 0
        %v3791 = vsel %vm340, %v3753, 0
        %v3794 = vsel %vm340, %v3754, 0
        %v3797 = vsel %vm340, %v3755, 0
        %v3800 = vsel %vm340, %v3756, 0
        %v3803 = vsel %vm340, %v3757, 0
        %v3806 = vsel %vm340, %v3758, 0
        %3808 = vmatprep.subr.mxu0 0.0
        %3809 = vmatpush1.msra.mxu0 %v3759
        %3810 = vmatprep.subr.mxu0 0.0
        %3811 = vmatpush1.msra.mxu0 0.0
        %3812 = vmatprep.subr.mxu0 0.0
        %3813 = vmatpush1.msra.mxu0 0.0
        %3814 = vmatprep.subr.mxu0 0.0
        %3815 = vmatpush1.msra.mxu0 0.0
        %3816 = vmatprep.subr.mxu0 0.0
        %3817 = vmatpush1.msra.mxu0 0.0
        %3818 = vmatprep.subr.mxu0 0.0
        %3819 = vmatpush1.msra.mxu0 0.0
        %3820 = vmatprep.subr.mxu0 0.0
        %3821 = vmatpush1.msra.mxu0 0.0
        %3822 = vmatprep.subr.mxu0 0.0
        %3823 = vmatpush1.msra.mxu0 0.0
        %3824 = vmatprep.subr.mxu0 0.0
        %3825 = vmatpush1.msra.mxu0 0.0
        %3826 = vmatprep.subr.mxu0 0.0
        %3827 = vmatpush1.msra.mxu0 0.0
        %3828 = vmatprep.subr.mxu0 0.0
        %3829 = vmatpush1.msra.mxu0 0.0
        %3830 = vmatprep.subr.mxu0 0.0
        %3831 = vmatpush1.msra.mxu0 0.0
        %3832 = vmatprep.subr.mxu0 0.0
        %3833 = vmatpush1.msra.mxu0 0.0
        %3834 = vmatprep.subr.mxu0 0.0
        %3835 = vmatpush1.msra.mxu0 0.0
        %3836 = vmatprep.subr.mxu0 0.0
        %3837 = vmatpush1.msra.mxu0 0.0
        %3838 = vmatprep.subr.mxu0 0.0
        %3839 = vmatpush1.msra.mxu0 0.0
        %3840 = vmatprep.subr.mxu0 0.0
        %3841 = vmatpush1.msra.mxu0 0.0
        %3842 = vmatprep.subr.mxu0 0.0
        %3843 = vmatpush1.msra.mxu0 0.0
        %3844 = vmatprep.subr.mxu0 0.0
        %3845 = vmatpush1.msra.mxu0 0.0
        %3846 = vmatprep.subr.mxu0 0.0
        %3847 = vmatpush1.msra.mxu0 0.0
        %3848 = vmatprep.subr.mxu0 0.0
        %3849 = vmatpush1.msra.mxu0 0.0
        %3850 = vmatprep.subr.mxu0 0.0
        %3851 = vmatpush1.msra.mxu0 0.0
        %3852 = vmatprep.subr.mxu0 0.0
        %3853 = vmatpush1.msra.mxu0 0.0
        %3854 = vmatprep.subr.mxu0 0.0
        %3855 = vmatpush1.msra.mxu0 0.0
        %3856 = vmatprep.subr.mxu0 0.0
        %3857 = vmatpush1.msra.mxu0 0.0
        %3858 = vmatprep.subr.mxu0 0.0
        %3859 = vmatpush1.msra.mxu0 0.0
        %3860 = vmatprep.subr.mxu0 0.0
        %3861 = vmatpush1.msra.mxu0 0.0
        %3862 = vmatprep.subr.mxu0 0.0
        %3863 = vmatpush1.msra.mxu0 0.0
        %3864 = vmatprep.subr.mxu0 0.0
        %3865 = vmatpush1.msra.mxu0 0.0
        %3866 = vmatprep.subr.mxu0 0.0
        %3867 = vmatpush1.msra.mxu0 0.0
        %3868 = vmatprep.subr.mxu0 0.0
        %3869 = vmatpush1.msra.mxu0 0.0
        %3870 = vmatprep.subr.mxu0 0.0
        %3871 = vmatpush1.msra.mxu0 0.0
        %3872 = vmatprep.mubr.f32.mxu0 0.0
        %3873 = vmatmul.mubr.f32.gmra.mrb[0].mxu0 %v3761
        %v3874 = vpop.f32.mrb[0].mxu0
        %v3875 = vadd.f32 0.0, %v3874
        %v3876 = vpop.f32.mrb[0].mxu0
        %3877 = vmatprep.mubr.f32.mxu0 0.0
        %3878 = vmatmul.mubr.f32.gmra.mrb[0].mxu0 %v3764
        %v3879 = vpop.f32.mrb[0].mxu0
        %v3880 = vadd.f32 0.0, %v3879
        %v3881 = vpop.f32.mrb[0].mxu0
        %3882 = vmatprep.mubr.f32.mxu0 0.0
        %3883 = vmatmul.mubr.f32.gmra.mrb[0].mxu0 %v3767
        %v3884 = vpop.f32.mrb[0].mxu0
        %v3885 = vadd.f32 0.0, %v3884
        %v3886 = vpop.f32.mrb[0].mxu0
        %3887 = vmatprep.mubr.f32.mxu0 0.0
        %3888 = vmatmul.mubr.f32.gmra.mrb[0].mxu0 %v3770
        %v3889 = vpop.f32.mrb[0].mxu0
        %v3890 = vadd.f32 0.0, %v3889
        %v3891 = vpop.f32.mrb[0].mxu0
        %3892 = vmatprep.mubr.f32.mxu0 0.0
        %3893 = vmatmul.mubr.f32.gmra.mrb[0].mxu0 %v3773
        %v3894 = vpop.f32.mrb[0].mxu0
        %v3895 = vadd.f32 0.0, %v3894
        %v3896 = vpop.f32.mrb[0].mxu0
        %3897 = vmatprep.mubr.f32.mxu0 0.0
        %3898 = vmatmul.mubr.f32.gmra.mrb[0].mxu0 %v3776
        %v3899 = vpop.f32.mrb[0].mxu0
        %v3900 = vadd.f32 0.0, %v3899
        %v3901 = vpop.f32.mrb[0].mxu0
        %3902 = vmatprep.mubr.f32.mxu0 0.0
        %3903 = vmatmul.mubr.f32.gmra.mrb[0].mxu0 %v3779
        %v3904 = vpop.f32.mrb[0].mxu0
        %v3905 = vadd.f32 0.0, %v3904
        %v3906 = vpop.f32.mrb[0].mxu0
        %3907 = vmatprep.mubr.f32.mxu0 0.0
        %3908 = vmatmul.mubr.f32.gmra.mrb[0].mxu0 %v3782
        %v3909 = vpop.f32.mrb[0].mxu0
        %v3910 = vadd.f32 0.0, %v3909
        %v3911 = vpop.f32.mrb[0].mxu0
        %3912 = vmatprep.mubr.f32.mxu0 0.0
        %3913 = vmatmul.mubr.f32.gmra.mrb[0].mxu0 %v3785
        %v3914 = vpop.f32.mrb[0].mxu0
        %v3915 = vadd.f32 0.0, %v3914
        %v3916 = vpop.f32.mrb[0].mxu0
        %3917 = vmatprep.mubr.f32.mxu0 0.0
        %3918 = vmatmul.mubr.f32.gmra.mrb[0].mxu0 %v3788
        %v3919 = vpop.f32.mrb[0].mxu0
        %v3920 = vadd.f32 0.0, %v3919
        %v3921 = vpop.f32.mrb[0].mxu0
        %3922 = vmatprep.mubr.f32.mxu0 0.0
        %3923 = vmatmul.mubr.f32.gmra.mrb[0].mxu0 %v3791
        %v3924 = vpop.f32.mrb[0].mxu0
        %v3925 = vadd.f32 0.0, %v3924
        %v3926 = vpop.f32.mrb[0].mxu0
        %3927 = vmatprep.mubr.f32.mxu0 0.0
        %3928 = vmatmul.mubr.f32.gmra.mrb[0].mxu0 %v3794
        %v3929 = vpop.f32.mrb[0].mxu0
        %v3930 = vadd.f32 0.0, %v3929
        %v3931 = vpop.f32.mrb[0].mxu0
        %3932 = vmatprep.mubr.f32.mxu0 0.0
        %3933 = vmatmul.mubr.f32.gmra.mrb[0].mxu0 %v3797
        %v3934 = vpop.f32.mrb[0].mxu0
        %v3935 = vadd.f32 0.0, %v3934
        %v3936 = vpop.f32.mrb[0].mxu0
        %3937 = vmatprep.mubr.f32.mxu0 0.0
        %3938 = vmatmul.mubr.f32.gmra.mrb[0].mxu0 %v3800
        %v3939 = vpop.f32.mrb[0].mxu0
        %v3940 = vadd.f32 0.0, %v3939
        %v3941 = vpop.f32.mrb[0].mxu0
        %3942 = vmatprep.mubr.f32.mxu0 0.0
        %3943 = vmatmul.mubr.f32.gmra.mrb[0].mxu0 %v3803
        %v3944 = vpop.f32.mrb[0].mxu0
        %v3945 = vadd.f32 0.0, %v3944
        %v3946 = vpop.f32.mrb[0].mxu0
        %3947 = vmatprep.mubr.f32.mxu0 0.0
        %3948 = vmatmul.mubr.f32.gmra.mrb[0].mxu0 %v3806
        %v3949 = vpop.f32.mrb[0].mxu0
        %v3950 = vadd.f32 0.0, %v3949
        %v3951 = vpop.f32.mrb[0].mxu0
        %3952 = vdwg.mxu0
        %v3953 = vadd.f32 %v3726, %v3875
        %v3954 = vadd.f32 %v3727, %v3880
        %v3955 = vadd.f32 %v3728, %v3885
        %v3956 = vadd.f32 %v3729, %v3890
        %v3957 = vadd.f32 %v3730, %v3895
        %v3958 = vadd.f32 %v3731, %v3900
        %v3959 = vadd.f32 %v3732, %v3905
        %v3960 = vadd.f32 %v3733, %v3910
        %v3961 = vadd.f32 %v3734, %v3915
        %v3962 = vadd.f32 %v3735, %v3920
        %v3963 = vadd.f32 %v3736, %v3925
        %v3964 = vadd.f32 %v3737, %v3930
        %v3965 = vadd.f32 %v3738, %v3935
        %v3966 = vadd.f32 %v3739, %v3940
        %v3967 = vadd.f32 %v3740, %v3945
        %v3968 = vadd.f32 %v3741, %v3950
        %s3969 = scalar_lea.vmem [#allocation2], 160
        %v3970 = vld [vmem:[%s3969] sm:$0xff]
        %v3971 = vld [vmem:[%s3969 + $0x8] sm:$0xff]
        %v3972 = vld [vmem:[%s3969 + $0x10] sm:$0xff]
        %v3973 = vld [vmem:[%s3969 + $0x18] sm:$0xff]
        %v3974 = vld [vmem:[%s3969 + $0x20] sm:$0xff]
        %v3975 = vld [vmem:[%s3969 + $0x28] sm:$0xff]
        %v3976 = vld [vmem:[%s3969 + $0x30] sm:$0xff]
        %v3977 = vld [vmem:[%s3969 + $0x38] sm:$0xff]
        %v3978 = vld [vmem:[%s3969 + $0x40] sm:$0xff]
        %v3979 = vld [vmem:[%s3969 + $0x48] sm:$0xff]
        %v3980 = vld [vmem:[%s3969 + $0x50] sm:$0xff]
        %v3981 = vld [vmem:[%s3969 + $0x58] sm:$0xff]
        %v3982 = vld [vmem:[%s3969 + $0x60] sm:$0xff]
        %v3983 = vld [vmem:[%s3969 + $0x68] sm:$0xff]
        %v3984 = vld [vmem:[%s3969 + $0x70] sm:$0xff]
        %v3985 = vld [vmem:[%s3969 + $0x78] sm:$0xff]
        %v3986 = vld [vmem:[%s1874] sm:$0xff]
        %v3988 = vsel %vm340, %v3970, 0
        %v3991 = vsel %vm340, %v3971, 0
        %v3994 = vsel %vm340, %v3972, 0
        %v3997 = vsel %vm340, %v3973, 0
        %v4000 = vsel %vm340, %v3974, 0
        %v4003 = vsel %vm340, %v3975, 0
        %v4006 = vsel %vm340, %v3976, 0
        %v4009 = vsel %vm340, %v3977, 0
        %v4012 = vsel %vm340, %v3978, 0
        %v4015 = vsel %vm340, %v3979, 0
        %v4018 = vsel %vm340, %v3980, 0
        %v4021 = vsel %vm340, %v3981, 0
        %v4024 = vsel %vm340, %v3982, 0
        %v4027 = vsel %vm340, %v3983, 0
        %v4030 = vsel %vm340, %v3984, 0
        %v4033 = vsel %vm340, %v3985, 0
        %4035 = vmatprep.subr.mxu0 0.0
        %4036 = vmatpush1.msra.mxu0 %v3986
        %4037 = vmatprep.subr.mxu0 0.0
        %4038 = vmatpush1.msra.mxu0 0.0
        %4039 = vmatprep.subr.mxu0 0.0
        %4040 = vmatpush1.msra.mxu0 0.0
        %4041 = vmatprep.subr.mxu0 0.0
        %4042 = vmatpush1.msra.mxu0 0.0
        %4043 = vmatprep.subr.mxu0 0.0
        %4044 = vmatpush1.msra.mxu0 0.0
        %4045 = vmatprep.subr.mxu0 0.0
        %4046 = vmatpush1.msra.mxu0 0.0
        %4047 = vmatprep.subr.mxu0 0.0
        %4048 = vmatpush1.msra.mxu0 0.0
        %4049 = vmatprep.subr.mxu0 0.0
        %4050 = vmatpush1.msra.mxu0 0.0
        %4051 = vmatprep.subr.mxu0 0.0
        %4052 = vmatpush1.msra.mxu0 0.0
        %4053 = vmatprep.subr.mxu0 0.0
        %4054 = vmatpush1.msra.mxu0 0.0
        %4055 = vmatprep.subr.mxu0 0.0
        %4056 = vmatpush1.msra.mxu0 0.0
        %4057 = vmatprep.subr.mxu0 0.0
        %4058 = vmatpush1.msra.mxu0 0.0
        %4059 = vmatprep.subr.mxu0 0.0
        %4060 = vmatpush1.msra.mxu0 0.0
        %4061 = vmatprep.subr.mxu0 0.0
        %4062 = vmatpush1.msra.mxu0 0.0
        %4063 = vmatprep.subr.mxu0 0.0
        %4064 = vmatpush1.msra.mxu0 0.0
        %4065 = vmatprep.subr.mxu0 0.0
        %4066 = vmatpush1.msra.mxu0 0.0
        %4067 = vmatprep.subr.mxu0 0.0
        %4068 = vmatpush1.msra.mxu0 0.0
        %4069 = vmatprep.subr.mxu0 0.0
        %4070 = vmatpush1.msra.mxu0 0.0
        %4071 = vmatprep.subr.mxu0 0.0
        %4072 = vmatpush1.msra.mxu0 0.0
        %4073 = vmatprep.subr.mxu0 0.0
        %4074 = vmatpush1.msra.mxu0 0.0
        %4075 = vmatprep.subr.mxu0 0.0
        %4076 = vmatpush1.msra.mxu0 0.0
        %4077 = vmatprep.subr.mxu0 0.0
        %4078 = vmatpush1.msra.mxu0 0.0
        %4079 = vmatprep.subr.mxu0 0.0
        %4080 = vmatpush1.msra.mxu0 0.0
        %4081 = vmatprep.subr.mxu0 0.0
        %4082 = vmatpush1.msra.mxu0 0.0
        %4083 = vmatprep.subr.mxu0 0.0
        %4084 = vmatpush1.msra.mxu0 0.0
        %4085 = vmatprep.subr.mxu0 0.0
        %4086 = vmatpush1.msra.mxu0 0.0
        %4087 = vmatprep.subr.mxu0 0.0
        %4088 = vmatpush1.msra.mxu0 0.0
        %4089 = vmatprep.subr.mxu0 0.0
        %4090 = vmatpush1.msra.mxu0 0.0
        %4091 = vmatprep.subr.mxu0 0.0
        %4092 = vmatpush1.msra.mxu0 0.0
        %4093 = vmatprep.subr.mxu0 0.0
        %4094 = vmatpush1.msra.mxu0 0.0
        %4095 = vmatprep.subr.mxu0 0.0
        %4096 = vmatpush1.msra.mxu0 0.0
        %4097 = vmatprep.subr.mxu0 0.0
        %4098 = vmatpush1.msra.mxu0 0.0
        %4099 = vmatprep.mubr.f32.mxu0 0.0
        %4100 = vmatmul.mubr.f32.gmra.mrb[0].mxu0 %v3988
        %v4101 = vpop.f32.mrb[0].mxu0
        %v4102 = vadd.f32 0.0, %v4101
        %v4103 = vpop.f32.mrb[0].mxu0
        %4104 = vmatprep.mubr.f32.mxu0 0.0
        %4105 = vmatmul.mubr.f32.gmra.mrb[0].mxu0 %v3991
        %v4106 = vpop.f32.mrb[0].mxu0
        %v4107 = vadd.f32 0.0, %v4106
        %v4108 = vpop.f32.mrb[0].mxu0
        %4109 = vmatprep.mubr.f32.mxu0 0.0
        %4110 = vmatmul.mubr.f32.gmra.mrb[0].mxu0 %v3994
        %v4111 = vpop.f32.mrb[0].mxu0
        %v4112 = vadd.f32 0.0, %v4111
        %v4113 = vpop.f32.mrb[0].mxu0
        %4114 = vmatprep.mubr.f32.mxu0 0.0
        %4115 = vmatmul.mubr.f32.gmra.mrb[0].mxu0 %v3997
        %v4116 = vpop.f32.mrb[0].mxu0
        %v4117 = vadd.f32 0.0, %v4116
        %v4118 = vpop.f32.mrb[0].mxu0
        %4119 = vmatprep.mubr.f32.mxu0 0.0
        %4120 = vmatmul.mubr.f32.gmra.mrb[0].mxu0 %v4000
        %v4121 = vpop.f32.mrb[0].mxu0
        %v4122 = vadd.f32 0.0, %v4121
        %v4123 = vpop.f32.mrb[0].mxu0
        %4124 = vmatprep.mubr.f32.mxu0 0.0
        %4125 = vmatmul.mubr.f32.gmra.mrb[0].mxu0 %v4003
        %v4126 = vpop.f32.mrb[0].mxu0
        %v4127 = vadd.f32 0.0, %v4126
        %v4128 = vpop.f32.mrb[0].mxu0
        %4129 = vmatprep.mubr.f32.mxu0 0.0
        %4130 = vmatmul.mubr.f32.gmra.mrb[0].mxu0 %v4006
        %v4131 = vpop.f32.mrb[0].mxu0
        %v4132 = vadd.f32 0.0, %v4131
        %v4133 = vpop.f32.mrb[0].mxu0
        %4134 = vmatprep.mubr.f32.mxu0 0.0
        %4135 = vmatmul.mubr.f32.gmra.mrb[0].mxu0 %v4009
        %v4136 = vpop.f32.mrb[0].mxu0
        %v4137 = vadd.f32 0.0, %v4136
        %v4138 = vpop.f32.mrb[0].mxu0
        %4139 = vmatprep.mubr.f32.mxu0 0.0
        %4140 = vmatmul.mubr.f32.gmra.mrb[0].mxu0 %v4012
        %v4141 = vpop.f32.mrb[0].mxu0
        %v4142 = vadd.f32 0.0, %v4141
        %v4143 = vpop.f32.mrb[0].mxu0
        %4144 = vmatprep.mubr.f32.mxu0 0.0
        %4145 = vmatmul.mubr.f32.gmra.mrb[0].mxu0 %v4015
        %v4146 = vpop.f32.mrb[0].mxu0
        %v4147 = vadd.f32 0.0, %v4146
        %v4148 = vpop.f32.mrb[0].mxu0
        %4149 = vmatprep.mubr.f32.mxu0 0.0
        %4150 = vmatmul.mubr.f32.gmra.mrb[0].mxu0 %v4018
        %v4151 = vpop.f32.mrb[0].mxu0
        %v4152 = vadd.f32 0.0, %v4151
        %v4153 = vpop.f32.mrb[0].mxu0
        %4154 = vmatprep.mubr.f32.mxu0 0.0
        %4155 = vmatmul.mubr.f32.gmra.mrb[0].mxu0 %v4021
        %v4156 = vpop.f32.mrb[0].mxu0
        %v4157 = vadd.f32 0.0, %v4156
        %v4158 = vpop.f32.mrb[0].mxu0
        %4159 = vmatprep.mubr.f32.mxu0 0.0
        %4160 = vmatmul.mubr.f32.gmra.mrb[0].mxu0 %v4024
        %v4161 = vpop.f32.mrb[0].mxu0
        %v4162 = vadd.f32 0.0, %v4161
        %v4163 = vpop.f32.mrb[0].mxu0
        %4164 = vmatprep.mubr.f32.mxu0 0.0
        %4165 = vmatmul.mubr.f32.gmra.mrb[0].mxu0 %v4027
        %v4166 = vpop.f32.mrb[0].mxu0
        %v4167 = vadd.f32 0.0, %v4166
        %v4168 = vpop.f32.mrb[0].mxu0
        %4169 = vmatprep.mubr.f32.mxu0 0.0
        %4170 = vmatmul.mubr.f32.gmra.mrb[0].mxu0 %v4030
        %v4171 = vpop.f32.mrb[0].mxu0
        %v4172 = vadd.f32 0.0, %v4171
        %v4173 = vpop.f32.mrb[0].mxu0
        %4174 = vmatprep.mubr.f32.mxu0 0.0
        %4175 = vmatmul.mubr.f32.gmra.mrb[0].mxu0 %v4033
        %v4176 = vpop.f32.mrb[0].mxu0
        %v4177 = vadd.f32 0.0, %v4176
        %v4178 = vpop.f32.mrb[0].mxu0
        %4179 = vdwg.mxu0
        %v4180 = vadd.f32 %v3953, %v4102
        %v4181 = vadd.f32 %v3954, %v4107
        %v4182 = vadd.f32 %v3955, %v4112
        %v4183 = vadd.f32 %v3956, %v4117
        %v4184 = vadd.f32 %v3957, %v4122
        %v4185 = vadd.f32 %v3958, %v4127
        %v4186 = vadd.f32 %v3959, %v4132
        %v4187 = vadd.f32 %v3960, %v4137
        %v4188 = vadd.f32 %v3961, %v4142
        %v4189 = vadd.f32 %v3962, %v4147
        %v4190 = vadd.f32 %v3963, %v4152
        %v4191 = vadd.f32 %v3964, %v4157
        %v4192 = vadd.f32 %v3965, %v4162
        %v4193 = vadd.f32 %v3966, %v4167
        %v4194 = vadd.f32 %v3967, %v4172
        %v4195 = vadd.f32 %v3968, %v4177
        %s4196 = scalar_lea.vmem [#allocation2], 448
        %v4197 = vld [vmem:[%s4196] sm:$0xff]
        %v4198 = vld [vmem:[%s4196 + $0x8] sm:$0xff]
        %v4199 = vld [vmem:[%s4196 + $0x10] sm:$0xff]
        %v4200 = vld [vmem:[%s4196 + $0x18] sm:$0xff]
        %v4201 = vld [vmem:[%s4196 + $0x20] sm:$0xff]
        %v4202 = vld [vmem:[%s4196 + $0x28] sm:$0xff]
        %v4203 = vld [vmem:[%s4196 + $0x30] sm:$0xff]
        %v4204 = vld [vmem:[%s4196 + $0x38] sm:$0xff]
        %v4205 = vld [vmem:[%s4196 + $0x40] sm:$0xff]
        %v4206 = vld [vmem:[%s4196 + $0x48] sm:$0xff]
        %v4207 = vld [vmem:[%s4196 + $0x50] sm:$0xff]
        %v4208 = vld [vmem:[%s4196 + $0x58] sm:$0xff]
        %v4209 = vld [vmem:[%s4196 + $0x60] sm:$0xff]
        %v4210 = vld [vmem:[%s4196 + $0x68] sm:$0xff]
        %v4211 = vld [vmem:[%s4196 + $0x70] sm:$0xff]
        %v4212 = vld [vmem:[%s4196 + $0x78] sm:$0xff]
        %v4213 = vld [vmem:[%s2102] sm:$0xff]
        %v4215 = vsel %vm340, %v4197, 0
        %v4218 = vsel %vm340, %v4198, 0
        %v4221 = vsel %vm340, %v4199, 0
        %v4224 = vsel %vm340, %v4200, 0
        %v4227 = vsel %vm340, %v4201, 0
        %v4230 = vsel %vm340, %v4202, 0
        %v4233 = vsel %vm340, %v4203, 0
        %v4236 = vsel %vm340, %v4204, 0
        %v4239 = vsel %vm340, %v4205, 0
        %v4242 = vsel %vm340, %v4206, 0
        %v4245 = vsel %vm340, %v4207, 0
        %v4248 = vsel %vm340, %v4208, 0
        %v4251 = vsel %vm340, %v4209, 0
        %v4254 = vsel %vm340, %v4210, 0
        %v4257 = vsel %vm340, %v4211, 0
        %v4260 = vsel %vm340, %v4212, 0
        %4262 = vmatprep.subr.mxu0 0.0
        %4263 = vmatpush1.msra.mxu0 %v4213
        %4264 = vmatprep.subr.mxu0 0.0
        %4265 = vmatpush1.msra.mxu0 0.0
        %4266 = vmatprep.subr.mxu0 0.0
        %4267 = vmatpush1.msra.mxu0 0.0
        %4268 = vmatprep.subr.mxu0 0.0
        %4269 = vmatpush1.msra.mxu0 0.0
        %4270 = vmatprep.subr.mxu0 0.0
        %4271 = vmatpush1.msra.mxu0 0.0
        %4272 = vmatprep.subr.mxu0 0.0
        %4273 = vmatpush1.msra.mxu0 0.0
        %4274 = vmatprep.subr.mxu0 0.0
        %4275 = vmatpush1.msra.mxu0 0.0
        %4276 = vmatprep.subr.mxu0 0.0
        %4277 = vmatpush1.msra.mxu0 0.0
        %4278 = vmatprep.subr.mxu0 0.0
        %4279 = vmatpush1.msra.mxu0 0.0
        %4280 = vmatprep.subr.mxu0 0.0
        %4281 = vmatpush1.msra.mxu0 0.0
        %4282 = vmatprep.subr.mxu0 0.0
        %4283 = vmatpush1.msra.mxu0 0.0
        %4284 = vmatprep.subr.mxu0 0.0
        %4285 = vmatpush1.msra.mxu0 0.0
        %4286 = vmatprep.subr.mxu0 0.0
        %4287 = vmatpush1.msra.mxu0 0.0
        %4288 = vmatprep.subr.mxu0 0.0
        %4289 = vmatpush1.msra.mxu0 0.0
        %4290 = vmatprep.subr.mxu0 0.0
        %4291 = vmatpush1.msra.mxu0 0.0
        %4292 = vmatprep.subr.mxu0 0.0
        %4293 = vmatpush1.msra.mxu0 0.0
        %4294 = vmatprep.subr.mxu0 0.0
        %4295 = vmatpush1.msra.mxu0 0.0
        %4296 = vmatprep.subr.mxu0 0.0
        %4297 = vmatpush1.msra.mxu0 0.0
        %4298 = vmatprep.subr.mxu0 0.0
        %4299 = vmatpush1.msra.mxu0 0.0
        %4300 = vmatprep.subr.mxu0 0.0
        %4301 = vmatpush1.msra.mxu0 0.0
        %4302 = vmatprep.subr.mxu0 0.0
        %4303 = vmatpush1.msra.mxu0 0.0
        %4304 = vmatprep.subr.mxu0 0.0
        %4305 = vmatpush1.msra.mxu0 0.0
        %4306 = vmatprep.subr.mxu0 0.0
        %4307 = vmatpush1.msra.mxu0 0.0
        %4308 = vmatprep.subr.mxu0 0.0
        %4309 = vmatpush1.msra.mxu0 0.0
        %4310 = vmatprep.subr.mxu0 0.0
        %4311 = vmatpush1.msra.mxu0 0.0
        %4312 = vmatprep.subr.mxu0 0.0
        %4313 = vmatpush1.msra.mxu0 0.0
        %4314 = vmatprep.subr.mxu0 0.0
        %4315 = vmatpush1.msra.mxu0 0.0
        %4316 = vmatprep.subr.mxu0 0.0
        %4317 = vmatpush1.msra.mxu0 0.0
        %4318 = vmatprep.subr.mxu0 0.0
        %4319 = vmatpush1.msra.mxu0 0.0
        %4320 = vmatprep.subr.mxu0 0.0
        %4321 = vmatpush1.msra.mxu0 0.0
        %4322 = vmatprep.subr.mxu0 0.0
        %4323 = vmatpush1.msra.mxu0 0.0
        %4324 = vmatprep.subr.mxu0 0.0
        %4325 = vmatpush1.msra.mxu0 0.0
        %4326 = vmatprep.mubr.f32.mxu0 0.0
        %4327 = vmatmul.mubr.f32.gmra.mrb[0].mxu0 %v4215
        %v4328 = vpop.f32.mrb[0].mxu0
        %v4329 = vadd.f32 0.0, %v4328
        %v4330 = vpop.f32.mrb[0].mxu0
        %4331 = vmatprep.mubr.f32.mxu0 0.0
        %4332 = vmatmul.mubr.f32.gmra.mrb[0].mxu0 %v4218
        %v4333 = vpop.f32.mrb[0].mxu0
        %v4334 = vadd.f32 0.0, %v4333
        %v4335 = vpop.f32.mrb[0].mxu0
        %4336 = vmatprep.mubr.f32.mxu0 0.0
        %4337 = vmatmul.mubr.f32.gmra.mrb[0].mxu0 %v4221
        %v4338 = vpop.f32.mrb[0].mxu0
        %v4339 = vadd.f32 0.0, %v4338
        %v4340 = vpop.f32.mrb[0].mxu0
        %4341 = vmatprep.mubr.f32.mxu0 0.0
        %4342 = vmatmul.mubr.f32.gmra.mrb[0].mxu0 %v4224
        %v4343 = vpop.f32.mrb[0].mxu0
        %v4344 = vadd.f32 0.0, %v4343
        %v4345 = vpop.f32.mrb[0].mxu0
        %4346 = vmatprep.mubr.f32.mxu0 0.0
        %4347 = vmatmul.mubr.f32.gmra.mrb[0].mxu0 %v4227
        %v4348 = vpop.f32.mrb[0].mxu0
        %v4349 = vadd.f32 0.0, %v4348
        %v4350 = vpop.f32.mrb[0].mxu0
        %4351 = vmatprep.mubr.f32.mxu0 0.0
        %4352 = vmatmul.mubr.f32.gmra.mrb[0].mxu0 %v4230
        %v4353 = vpop.f32.mrb[0].mxu0
        %v4354 = vadd.f32 0.0, %v4353
        %v4355 = vpop.f32.mrb[0].mxu0
        %4356 = vmatprep.mubr.f32.mxu0 0.0
        %4357 = vmatmul.mubr.f32.gmra.mrb[0].mxu0 %v4233
        %v4358 = vpop.f32.mrb[0].mxu0
        %v4359 = vadd.f32 0.0, %v4358
        %v4360 = vpop.f32.mrb[0].mxu0
        %4361 = vmatprep.mubr.f32.mxu0 0.0
        %4362 = vmatmul.mubr.f32.gmra.mrb[0].mxu0 %v4236
        %v4363 = vpop.f32.mrb[0].mxu0
        %v4364 = vadd.f32 0.0, %v4363
        %v4365 = vpop.f32.mrb[0].mxu0
        %4366 = vmatprep.mubr.f32.mxu0 0.0
        %4367 = vmatmul.mubr.f32.gmra.mrb[0].mxu0 %v4239
        %v4368 = vpop.f32.mrb[0].mxu0
        %v4369 = vadd.f32 0.0, %v4368
        %v4370 = vpop.f32.mrb[0].mxu0
        %4371 = vmatprep.mubr.f32.mxu0 0.0
        %4372 = vmatmul.mubr.f32.gmra.mrb[0].mxu0 %v4242
        %v4373 = vpop.f32.mrb[0].mxu0
        %v4374 = vadd.f32 0.0, %v4373
        %v4375 = vpop.f32.mrb[0].mxu0
        %4376 = vmatprep.mubr.f32.mxu0 0.0
        %4377 = vmatmul.mubr.f32.gmra.mrb[0].mxu0 %v4245
        %v4378 = vpop.f32.mrb[0].mxu0
        %v4379 = vadd.f32 0.0, %v4378
        %v4380 = vpop.f32.mrb[0].mxu0
        %4381 = vmatprep.mubr.f32.mxu0 0.0
        %4382 = vmatmul.mubr.f32.gmra.mrb[0].mxu0 %v4248
        %v4383 = vpop.f32.mrb[0].mxu0
        %v4384 = vadd.f32 0.0, %v4383
        %v4385 = vpop.f32.mrb[0].mxu0
        %4386 = vmatprep.mubr.f32.mxu0 0.0
        %4387 = vmatmul.mubr.f32.gmra.mrb[0].mxu0 %v4251
        %v4388 = vpop.f32.mrb[0].mxu0
        %v4389 = vadd.f32 0.0, %v4388
        %v4390 = vpop.f32.mrb[0].mxu0
        %4391 = vmatprep.mubr.f32.mxu0 0.0
        %4392 = vmatmul.mubr.f32.gmra.mrb[0].mxu0 %v4254
        %v4393 = vpop.f32.mrb[0].mxu0
        %v4394 = vadd.f32 0.0, %v4393
        %v4395 = vpop.f32.mrb[0].mxu0
        %4396 = vmatprep.mubr.f32.mxu0 0.0
        %4397 = vmatmul.mubr.f32.gmra.mrb[0].mxu0 %v4257
        %v4398 = vpop.f32.mrb[0].mxu0
        %v4399 = vadd.f32 0.0, %v4398
        %v4400 = vpop.f32.mrb[0].mxu0
        %4401 = vmatprep.mubr.f32.mxu0 0.0
        %4402 = vmatmul.mubr.f32.gmra.mrb[0].mxu0 %v4260
        %v4403 = vpop.f32.mrb[0].mxu0
        %v4404 = vadd.f32 0.0, %v4403
        %v4405 = vpop.f32.mrb[0].mxu0
        %4406 = vdwg.mxu0
        %v4407 = vadd.f32 %v4180, %v4329
        %v4408 = vadd.f32 %v4181, %v4334
        %v4409 = vadd.f32 %v4182, %v4339
        %v4410 = vadd.f32 %v4183, %v4344
        %v4411 = vadd.f32 %v4184, %v4349
        %v4412 = vadd.f32 %v4185, %v4354
        %v4413 = vadd.f32 %v4186, %v4359
        %v4414 = vadd.f32 %v4187, %v4364
        %v4415 = vadd.f32 %v4188, %v4369
        %v4416 = vadd.f32 %v4189, %v4374
        %v4417 = vadd.f32 %v4190, %v4379
        %v4418 = vadd.f32 %v4191, %v4384
        %v4419 = vadd.f32 %v4192, %v4389
        %v4420 = vadd.f32 %v4193, %v4394
        %v4421 = vadd.f32 %v4194, %v4399
        %v4422 = vadd.f32 %v4195, %v4404
        %s4423 = scalar_lea.vmem [#allocation2], 736
        %v4424 = vld [vmem:[%s4423] sm:$0xff]
        %v4425 = vld [vmem:[%s4423 + $0x8] sm:$0xff]
        %v4426 = vld [vmem:[%s4423 + $0x10] sm:$0xff]
        %v4427 = vld [vmem:[%s4423 + $0x18] sm:$0xff]
        %v4428 = vld [vmem:[%s4423 + $0x20] sm:$0xff]
        %v4429 = vld [vmem:[%s4423 + $0x28] sm:$0xff]
        %v4430 = vld [vmem:[%s4423 + $0x30] sm:$0xff]
        %v4431 = vld [vmem:[%s4423 + $0x38] sm:$0xff]
        %v4432 = vld [vmem:[%s4423 + $0x40] sm:$0xff]
        %v4433 = vld [vmem:[%s4423 + $0x48] sm:$0xff]
        %v4434 = vld [vmem:[%s4423 + $0x50] sm:$0xff]
        %v4435 = vld [vmem:[%s4423 + $0x58] sm:$0xff]
        %v4436 = vld [vmem:[%s4423 + $0x60] sm:$0xff]
        %v4437 = vld [vmem:[%s4423 + $0x68] sm:$0xff]
        %v4438 = vld [vmem:[%s4423 + $0x70] sm:$0xff]
        %v4439 = vld [vmem:[%s4423 + $0x78] sm:$0xff]
        %v4440 = vld [vmem:[%s2330] sm:$0xff]
        %v4442 = vsel %vm340, %v4424, 0
        %v4445 = vsel %vm340, %v4425, 0
        %v4448 = vsel %vm340, %v4426, 0
        %v4451 = vsel %vm340, %v4427, 0
        %v4454 = vsel %vm340, %v4428, 0
        %v4457 = vsel %vm340, %v4429, 0
        %v4460 = vsel %vm340, %v4430, 0
        %v4463 = vsel %vm340, %v4431, 0
        %v4466 = vsel %vm340, %v4432, 0
        %v4469 = vsel %vm340, %v4433, 0
        %v4472 = vsel %vm340, %v4434, 0
        %v4475 = vsel %vm340, %v4435, 0
        %v4478 = vsel %vm340, %v4436, 0
        %v4481 = vsel %vm340, %v4437, 0
        %v4484 = vsel %vm340, %v4438, 0
        %v4487 = vsel %vm340, %v4439, 0
        %4489 = vmatprep.subr.mxu0 0.0
        %4490 = vmatpush1.msra.mxu0 %v4440
        %4491 = vmatprep.subr.mxu0 0.0
        %4492 = vmatpush1.msra.mxu0 0.0
        %4493 = vmatprep.subr.mxu0 0.0
        %4494 = vmatpush1.msra.mxu0 0.0
        %4495 = vmatprep.subr.mxu0 0.0
        %4496 = vmatpush1.msra.mxu0 0.0
        %4497 = vmatprep.subr.mxu0 0.0
        %4498 = vmatpush1.msra.mxu0 0.0
        %4499 = vmatprep.subr.mxu0 0.0
        %4500 = vmatpush1.msra.mxu0 0.0
        %4501 = vmatprep.subr.mxu0 0.0
        %4502 = vmatpush1.msra.mxu0 0.0
        %4503 = vmatprep.subr.mxu0 0.0
        %4504 = vmatpush1.msra.mxu0 0.0
        %4505 = vmatprep.subr.mxu0 0.0
        %4506 = vmatpush1.msra.mxu0 0.0
        %4507 = vmatprep.subr.mxu0 0.0
        %4508 = vmatpush1.msra.mxu0 0.0
        %4509 = vmatprep.subr.mxu0 0.0
        %4510 = vmatpush1.msra.mxu0 0.0
        %4511 = vmatprep.subr.mxu0 0.0
        %4512 = vmatpush1.msra.mxu0 0.0
        %4513 = vmatprep.subr.mxu0 0.0
        %4514 = vmatpush1.msra.mxu0 0.0
        %4515 = vmatprep.subr.mxu0 0.0
        %4516 = vmatpush1.msra.mxu0 0.0
        %4517 = vmatprep.subr.mxu0 0.0
        %4518 = vmatpush1.msra.mxu0 0.0
        %4519 = vmatprep.subr.mxu0 0.0
        %4520 = vmatpush1.msra.mxu0 0.0
        %4521 = vmatprep.subr.mxu0 0.0
        %4522 = vmatpush1.msra.mxu0 0.0
        %4523 = vmatprep.subr.mxu0 0.0
        %4524 = vmatpush1.msra.mxu0 0.0
        %4525 = vmatprep.subr.mxu0 0.0
        %4526 = vmatpush1.msra.mxu0 0.0
        %4527 = vmatprep.subr.mxu0 0.0
        %4528 = vmatpush1.msra.mxu0 0.0
        %4529 = vmatprep.subr.mxu0 0.0
        %4530 = vmatpush1.msra.mxu0 0.0
        %4531 = vmatprep.subr.mxu0 0.0
        %4532 = vmatpush1.msra.mxu0 0.0
        %4533 = vmatprep.subr.mxu0 0.0
        %4534 = vmatpush1.msra.mxu0 0.0
        %4535 = vmatprep.subr.mxu0 0.0
        %4536 = vmatpush1.msra.mxu0 0.0
        %4537 = vmatprep.subr.mxu0 0.0
        %4538 = vmatpush1.msra.mxu0 0.0
        %4539 = vmatprep.subr.mxu0 0.0
        %4540 = vmatpush1.msra.mxu0 0.0
        %4541 = vmatprep.subr.mxu0 0.0
        %4542 = vmatpush1.msra.mxu0 0.0
        %4543 = vmatprep.subr.mxu0 0.0
        %4544 = vmatpush1.msra.mxu0 0.0
        %4545 = vmatprep.subr.mxu0 0.0
        %4546 = vmatpush1.msra.mxu0 0.0
        %4547 = vmatprep.subr.mxu0 0.0
        %4548 = vmatpush1.msra.mxu0 0.0
        %4549 = vmatprep.subr.mxu0 0.0
        %4550 = vmatpush1.msra.mxu0 0.0
        %4551 = vmatprep.subr.mxu0 0.0
        %4552 = vmatpush1.msra.mxu0 0.0
        %4553 = vmatprep.mubr.f32.mxu0 0.0
        %4554 = vmatmul.mubr.f32.gmra.mrb[0].mxu0 %v4442
        %v4555 = vpop.f32.mrb[0].mxu0
        %v4556 = vadd.f32 0.0, %v4555
        %v4557 = vpop.f32.mrb[0].mxu0
        %4558 = vmatprep.mubr.f32.mxu0 0.0
        %4559 = vmatmul.mubr.f32.gmra.mrb[0].mxu0 %v4445
        %v4560 = vpop.f32.mrb[0].mxu0
        %v4561 = vadd.f32 0.0, %v4560
        %v4562 = vpop.f32.mrb[0].mxu0
        %4563 = vmatprep.mubr.f32.mxu0 0.0
        %4564 = vmatmul.mubr.f32.gmra.mrb[0].mxu0 %v4448
        %v4565 = vpop.f32.mrb[0].mxu0
        %v4566 = vadd.f32 0.0, %v4565
        %v4567 = vpop.f32.mrb[0].mxu0
        %4568 = vmatprep.mubr.f32.mxu0 0.0
        %4569 = vmatmul.mubr.f32.gmra.mrb[0].mxu0 %v4451
        %v4570 = vpop.f32.mrb[0].mxu0
        %v4571 = vadd.f32 0.0, %v4570
        %v4572 = vpop.f32.mrb[0].mxu0
        %4573 = vmatprep.mubr.f32.mxu0 0.0
        %4574 = vmatmul.mubr.f32.gmra.mrb[0].mxu0 %v4454
        %v4575 = vpop.f32.mrb[0].mxu0
        %v4576 = vadd.f32 0.0, %v4575
        %v4577 = vpop.f32.mrb[0].mxu0
        %4578 = vmatprep.mubr.f32.mxu0 0.0
        %4579 = vmatmul.mubr.f32.gmra.mrb[0].mxu0 %v4457
        %v4580 = vpop.f32.mrb[0].mxu0
        %v4581 = vadd.f32 0.0, %v4580
        %v4582 = vpop.f32.mrb[0].mxu0
        %4583 = vmatprep.mubr.f32.mxu0 0.0
        %4584 = vmatmul.mubr.f32.gmra.mrb[0].mxu0 %v4460
        %v4585 = vpop.f32.mrb[0].mxu0
        %v4586 = vadd.f32 0.0, %v4585
        %v4587 = vpop.f32.mrb[0].mxu0
        %4588 = vmatprep.mubr.f32.mxu0 0.0
        %4589 = vmatmul.mubr.f32.gmra.mrb[0].mxu0 %v4463
        %v4590 = vpop.f32.mrb[0].mxu0
        %v4591 = vadd.f32 0.0, %v4590
        %v4592 = vpop.f32.mrb[0].mxu0
        %4593 = vmatprep.mubr.f32.mxu0 0.0
        %4594 = vmatmul.mubr.f32.gmra.mrb[0].mxu0 %v4466
        %v4595 = vpop.f32.mrb[0].mxu0
        %v4596 = vadd.f32 0.0, %v4595
        %v4597 = vpop.f32.mrb[0].mxu0
        %4598 = vmatprep.mubr.f32.mxu0 0.0
        %4599 = vmatmul.mubr.f32.gmra.mrb[0].mxu0 %v4469
        %v4600 = vpop.f32.mrb[0].mxu0
        %v4601 = vadd.f32 0.0, %v4600
        %v4602 = vpop.f32.mrb[0].mxu0
        %4603 = vmatprep.mubr.f32.mxu0 0.0
        %4604 = vmatmul.mubr.f32.gmra.mrb[0].mxu0 %v4472
        %v4605 = vpop.f32.mrb[0].mxu0
        %v4606 = vadd.f32 0.0, %v4605
        %v4607 = vpop.f32.mrb[0].mxu0
        %4608 = vmatprep.mubr.f32.mxu0 0.0
        %4609 = vmatmul.mubr.f32.gmra.mrb[0].mxu0 %v4475
        %v4610 = vpop.f32.mrb[0].mxu0
        %v4611 = vadd.f32 0.0, %v4610
        %v4612 = vpop.f32.mrb[0].mxu0
        %4613 = vmatprep.mubr.f32.mxu0 0.0
        %4614 = vmatmul.mubr.f32.gmra.mrb[0].mxu0 %v4478
        %v4615 = vpop.f32.mrb[0].mxu0
        %v4616 = vadd.f32 0.0, %v4615
        %v4617 = vpop.f32.mrb[0].mxu0
        %4618 = vmatprep.mubr.f32.mxu0 0.0
        %4619 = vmatmul.mubr.f32.gmra.mrb[0].mxu0 %v4481
        %v4620 = vpop.f32.mrb[0].mxu0
        %v4621 = vadd.f32 0.0, %v4620
        %v4622 = vpop.f32.mrb[0].mxu0
        %4623 = vmatprep.mubr.f32.mxu0 0.0
        %4624 = vmatmul.mubr.f32.gmra.mrb[0].mxu0 %v4484
        %v4625 = vpop.f32.mrb[0].mxu0
        %v4626 = vadd.f32 0.0, %v4625
        %v4627 = vpop.f32.mrb[0].mxu0
        %4628 = vmatprep.mubr.f32.mxu0 0.0
        %4629 = vmatmul.mubr.f32.gmra.mrb[0].mxu0 %v4487
        %v4630 = vpop.f32.mrb[0].mxu0
        %v4631 = vadd.f32 0.0, %v4630
        %v4632 = vpop.f32.mrb[0].mxu0
        %4633 = vdwg.mxu0
        %v4634 = vadd.f32 %v4407, %v4556
        %v4635 = vadd.f32 %v4408, %v4561
        %v4636 = vadd.f32 %v4409, %v4566
        %v4637 = vadd.f32 %v4410, %v4571
        %v4638 = vadd.f32 %v4411, %v4576
        %v4639 = vadd.f32 %v4412, %v4581
        %v4640 = vadd.f32 %v4413, %v4586
        %v4641 = vadd.f32 %v4414, %v4591
        %v4642 = vadd.f32 %v4415, %v4596
        %v4643 = vadd.f32 %v4416, %v4601
        %v4644 = vadd.f32 %v4417, %v4606
        %v4645 = vadd.f32 %v4418, %v4611
        %v4646 = vadd.f32 %v4419, %v4616
        %v4647 = vadd.f32 %v4420, %v4621
        %v4648 = vadd.f32 %v4421, %v4626
        %v4649 = vadd.f32 %v4422, %v4631
        %v4650 = vmul.f32 %v4634, %v2545
        %v4651 = vmul.f32 %v4635, %v2545
        %v4652 = vmul.f32 %v4636, %v2545
        %v4653 = vmul.f32 %v4637, %v2545
        %v4654 = vmul.f32 %v4638, %v2545
        %v4655 = vmul.f32 %v4639, %v2545
        %v4656 = vmul.f32 %v4640, %v2545
        %v4657 = vmul.f32 %v4641, %v2545
        %v4658 = vmul.f32 %v4642, %v2545
        %v4659 = vmul.f32 %v4643, %v2545
        %v4660 = vmul.f32 %v4644, %v2545
        %v4661 = vmul.f32 %v4645, %v2545
        %v4662 = vmul.f32 %v4646, %v2545
        %v4663 = vmul.f32 %v4647, %v2545
        %v4664 = vmul.f32 %v4648, %v2545
        %v4665 = vmul.f32 %v4649, %v2545
        %v4666 = vadd.f32 %v4650, %v2567
        %v4667 = vadd.f32 %v4651, %v2567
        %v4668 = vadd.f32 %v4652, %v2567
        %v4669 = vadd.f32 %v4653, %v2567
        %v4670 = vadd.f32 %v4654, %v2567
        %v4671 = vadd.f32 %v4655, %v2567
        %v4672 = vadd.f32 %v4656, %v2567
        %v4673 = vadd.f32 %v4657, %v2567
        %v4674 = vadd.f32 %v4658, %v2567
        %v4675 = vadd.f32 %v4659, %v2567
        %v4676 = vadd.f32 %v4660, %v2567
        %v4677 = vadd.f32 %v4661, %v2567
        %v4678 = vadd.f32 %v4662, %v2567
        %v4679 = vadd.f32 %v4663, %v2567
        %v4680 = vadd.f32 %v4664, %v2567
        %v4681 = vadd.f32 %v4665, %v2567
        %v4682 = vmax.f32 %v4666, 0.0
        %v4683 = vmax.f32 %v4667, 0.0
        %v4684 = vmax.f32 %v4668, 0.0
        %v4685 = vmax.f32 %v4669, 0.0
        %v4686 = vmax.f32 %v4670, 0.0
        %v4687 = vmax.f32 %v4671, 0.0
        %v4688 = vmax.f32 %v4672, 0.0
        %v4689 = vmax.f32 %v4673, 0.0
        %v4690 = vmax.f32 %v4674, 0.0
        %v4691 = vmax.f32 %v4675, 0.0
        %v4692 = vmax.f32 %v4676, 0.0
        %v4693 = vmax.f32 %v4677, 0.0
        %v4694 = vmax.f32 %v4678, 0.0
        %v4695 = vmax.f32 %v4679, 0.0
        %v4696 = vmax.f32 %v4680, 0.0
        %v4697 = vmax.f32 %v4681, 0.0
        %v4698 = vadd.f32 %v4682, %v4683
        %v4699 = vadd.f32 %v4698, %v4684
        %v4700 = vadd.f32 %v4699, %v4685
        %v4701 = vadd.f32 %v4700, %v4686
        %v4702 = vadd.f32 %v4701, %v4687
        %v4703 = vadd.f32 %v4702, %v4688
        %v4704 = vadd.f32 %v4703, %v4689
        %v4705 = vadd.f32 %v4704, %v4690
        %v4706 = vadd.f32 %v4705, %v4691
        %v4707 = vadd.f32 %v4706, %v4692
        %v4708 = vadd.f32 %v4707, %v4693
        %v4709 = vadd.f32 %v4708, %v4694
        %v4710 = vadd.f32 %v4709, %v4695
        %v4711 = vadd.f32 %v4710, %v4696
        %v4712 = vadd.f32 %v4711, %v4697
        %v4713 = vrot.slane %v4712, 4
        %v4714 = vadd.f32 %v4712, %v4713
        %v4715 = vrot.slane %v4714, 2
        %v4716 = vadd.f32 %v4714, %v4715
        %v4717 = vrot.slane %v4716, 1
        %v4718 = vadd.f32 %v4716, %v4717
        %v4719 = vadd.f32 %v2622, %v4718
        %s4720 = scalar_lea.vmem %s298, 128 [#allocation3]
        %4721 = vst [vmem:[%s4720] sm:$0xff] %v4682
        %4722 = vst [vmem:[%s4720 + $0x8] sm:$0xff] %v4683
        %4723 = vst [vmem:[%s4720 + $0x10] sm:$0xff] %v4684
        %4724 = vst [vmem:[%s4720 + $0x18] sm:$0xff] %v4685
        %4725 = vst [vmem:[%s4720 + $0x20] sm:$0xff] %v4686
        %4726 = vst [vmem:[%s4720 + $0x28] sm:$0xff] %v4687
        %4727 = vst [vmem:[%s4720 + $0x30] sm:$0xff] %v4688
        %4728 = vst [vmem:[%s4720 + $0x38] sm:$0xff] %v4689
        %4729 = vst [vmem:[%s4720 + $0x40] sm:$0xff] %v4690
        %4730 = vst [vmem:[%s4720 + $0x48] sm:$0xff] %v4691
        %4731 = vst [vmem:[%s4720 + $0x50] sm:$0xff] %v4692
        %4732 = vst [vmem:[%s4720 + $0x58] sm:$0xff] %v4693
        %4733 = vst [vmem:[%s4720 + $0x60] sm:$0xff] %v4694
        %4734 = vst [vmem:[%s4720 + $0x68] sm:$0xff] %v4695
        %4735 = vst [vmem:[%s4720 + $0x70] sm:$0xff] %v4696
        %4736 = vst [vmem:[%s4720 + $0x78] sm:$0xff] %v4697
        %v4737 = vmul.f32 %v4719, 0.00390625
        %v4738 = vld [vmem:[%s4] sm:$0xff]
        %v4739 = vld [vmem:[%s4 + $0x8] sm:$0xff]
        %v4740 = vld [vmem:[%s4 + $0x10] sm:$0xff]
        %v4741 = vld [vmem:[%s4 + $0x18] sm:$0xff]
        %v4742 = vld [vmem:[%s4 + $0x20] sm:$0xff]
        %v4743 = vld [vmem:[%s4 + $0x28] sm:$0xff]
        %v4744 = vld [vmem:[%s4 + $0x30] sm:$0xff]
        %v4745 = vld [vmem:[%s4 + $0x38] sm:$0xff]
        %v4746 = vld [vmem:[%s4 + $0x40] sm:$0xff]
        %v4747 = vld [vmem:[%s4 + $0x48] sm:$0xff]
        %v4748 = vld [vmem:[%s4 + $0x50] sm:$0xff]
        %v4749 = vld [vmem:[%s4 + $0x58] sm:$0xff]
        %v4750 = vld [vmem:[%s4 + $0x60] sm:$0xff]
        %v4751 = vld [vmem:[%s4 + $0x68] sm:$0xff]
        %v4752 = vld [vmem:[%s4 + $0x70] sm:$0xff]
        %v4753 = vld [vmem:[%s4 + $0x78] sm:$0xff]
        %v4754 = vld [vmem:[%s5] sm:$0x1]
        %4755 = vmatprep.subr.mxu0 0.0
        %4756 = vmatpush1.msra.mxu0 %v4738
        %4757 = vmatprep.subr.mxu0 0.0
        %4758 = vmatpush1.msra.mxu0 %v4739
        %4759 = vmatprep.subr.mxu0 0.0
        %4760 = vmatpush1.msra.mxu0 %v4740
        %4761 = vmatprep.subr.mxu0 0.0
        %4762 = vmatpush1.msra.mxu0 %v4741
        %4763 = vmatprep.subr.mxu0 0.0
        %4764 = vmatpush1.msra.mxu0 %v4742
        %4765 = vmatprep.subr.mxu0 0.0
        %4766 = vmatpush1.msra.mxu0 %v4743
        %4767 = vmatprep.subr.mxu0 0.0
        %4768 = vmatpush1.msra.mxu0 %v4744
        %4769 = vmatprep.subr.mxu0 0.0
        %4770 = vmatpush1.msra.mxu0 %v4745
        %4771 = vmatprep.subr.mxu0 0.0
        %4772 = vmatpush1.msra.mxu0 %v4746
        %4773 = vmatprep.subr.mxu0 0.0
        %4774 = vmatpush1.msra.mxu0 %v4747
        %4775 = vmatprep.subr.mxu0 0.0
        %4776 = vmatpush1.msra.mxu0 %v4748
        %4777 = vmatprep.subr.mxu0 0.0
        %4778 = vmatpush1.msra.mxu0 %v4749
        %4779 = vmatprep.subr.mxu0 0.0
        %4780 = vmatpush1.msra.mxu0 %v4750
        %4781 = vmatprep.subr.mxu0 0.0
        %4782 = vmatpush1.msra.mxu0 %v4751
        %4783 = vmatprep.subr.mxu0 0.0
        %4784 = vmatpush1.msra.mxu0 %v4752
        %4785 = vmatprep.subr.mxu0 0.0
        %4786 = vmatpush1.msra.mxu0 %v4753
        %4787 = vmatprep.subr.mxu0 0.0
        %4788 = vmatpush1.msra.mxu0 0.0
        %4789 = vmatprep.subr.mxu0 0.0
        %4790 = vmatpush1.msra.mxu0 0.0
        %4791 = vmatprep.subr.mxu0 0.0
        %4792 = vmatpush1.msra.mxu0 0.0
        %4793 = vmatprep.subr.mxu0 0.0
        %4794 = vmatpush1.msra.mxu0 0.0
        %4795 = vmatprep.subr.mxu0 0.0
        %4796 = vmatpush1.msra.mxu0 0.0
        %4797 = vmatprep.subr.mxu0 0.0
        %4798 = vmatpush1.msra.mxu0 0.0
        %4799 = vmatprep.subr.mxu0 0.0
        %4800 = vmatpush1.msra.mxu0 0.0
        %4801 = vmatprep.subr.mxu0 0.0
        %4802 = vmatpush1.msra.mxu0 0.0
        %4803 = vmatprep.subr.mxu0 0.0
        %4804 = vmatpush1.msra.mxu0 0.0
        %4805 = vmatprep.subr.mxu0 0.0
        %4806 = vmatpush1.msra.mxu0 0.0
        %4807 = vmatprep.subr.mxu0 0.0
        %4808 = vmatpush1.msra.mxu0 0.0
        %4809 = vmatprep.subr.mxu0 0.0
        %4810 = vmatpush1.msra.mxu0 0.0
        %4811 = vmatprep.subr.mxu0 0.0
        %4812 = vmatpush1.msra.mxu0 0.0
        %4813 = vmatprep.subr.mxu0 0.0
        %4814 = vmatpush1.msra.mxu0 0.0
        %4815 = vmatprep.subr.mxu0 0.0
        %4816 = vmatpush1.msra.mxu0 0.0
        %4817 = vmatprep.subr.mxu0 0.0
        %4818 = vmatpush1.msra.mxu0 0.0
        %4819 = vmatprep.mubr.f32.mxu0 0.0
        %4820 = vmatmul.mubr.f32.gmra.mrb[0].mxu0 %v4737
        %v4821 = vpop.f32.mrb[0].mxu0
        %v4822 = vadd.f32 %v4754, %v4821
        %v4823 = vpop.f32.mrb[0].mxu0
        %4824 = vdwg.mxu0
        %v4825 = vld [vmem:[%s6] sm:$0xff]
        %v4826 = vld [vmem:[%s6 + $0x8] sm:$0xff]
        %v4827 = vld [vmem:[%s6 + $0x10] sm:$0xff]
        %v4828 = vld [vmem:[%s6 + $0x18] sm:$0xff]
        %v4829 = vld [vmem:[%s6 + $0x20] sm:$0xff]
        %v4830 = vld [vmem:[%s6 + $0x28] sm:$0xff]
        %v4831 = vld [vmem:[%s6 + $0x30] sm:$0xff]
        %v4832 = vld [vmem:[%s6 + $0x38] sm:$0xff]
        %v4833 = vld [vmem:[%s6 + $0x40] sm:$0xff]
        %v4834 = vld [vmem:[%s6 + $0x48] sm:$0xff]
        %v4835 = vld [vmem:[%s6 + $0x50] sm:$0xff]
        %v4836 = vld [vmem:[%s6 + $0x58] sm:$0xff]
        %v4837 = vld [vmem:[%s6 + $0x60] sm:$0xff]
        %v4838 = vld [vmem:[%s6 + $0x68] sm:$0xff]
        %v4839 = vld [vmem:[%s6 + $0x70] sm:$0xff]
        %v4840 = vld [vmem:[%s6 + $0x78] sm:$0xff]
        %v4841 = vld [vmem:[%s7] sm:$0x1]
        %4842 = vmatprep.subr.mxu0 0.0
        %4843 = vmatpush1.msra.mxu0 %v4825
        %4844 = vmatprep.subr.mxu0 0.0
        %4845 = vmatpush1.msra.mxu0 %v4826
        %4846 = vmatprep.subr.mxu0 0.0
        %4847 = vmatpush1.msra.mxu0 %v4827
        %4848 = vmatprep.subr.mxu0 0.0
        %4849 = vmatpush1.msra.mxu0 %v4828
        %4850 = vmatprep.subr.mxu0 0.0
        %4851 = vmatpush1.msra.mxu0 %v4829
        %4852 = vmatprep.subr.mxu0 0.0
        %4853 = vmatpush1.msra.mxu0 %v4830
        %4854 = vmatprep.subr.mxu0 0.0
        %4855 = vmatpush1.msra.mxu0 %v4831
        %4856 = vmatprep.subr.mxu0 0.0
        %4857 = vmatpush1.msra.mxu0 %v4832
        %4858 = vmatprep.subr.mxu0 0.0
        %4859 = vmatpush1.msra.mxu0 %v4833
        %4860 = vmatprep.subr.mxu0 0.0
        %4861 = vmatpush1.msra.mxu0 %v4834
        %4862 = vmatprep.subr.mxu0 0.0
        %4863 = vmatpush1.msra.mxu0 %v4835
        %4864 = vmatprep.subr.mxu0 0.0
        %4865 = vmatpush1.msra.mxu0 %v4836
        %4866 = vmatprep.subr.mxu0 0.0
        %4867 = vmatpush1.msra.mxu0 %v4837
        %4868 = vmatprep.subr.mxu0 0.0
        %4869 = vmatpush1.msra.mxu0 %v4838
        %4870 = vmatprep.subr.mxu0 0.0
        %4871 = vmatpush1.msra.mxu0 %v4839
        %4872 = vmatprep.subr.mxu0 0.0
        %4873 = vmatpush1.msra.mxu0 %v4840
        %4874 = vmatprep.subr.mxu0 0.0
        %4875 = vmatpush1.msra.mxu0 0.0
        %4876 = vmatprep.subr.mxu0 0.0
        %4877 = vmatpush1.msra.mxu0 0.0
        %4878 = vmatprep.subr.mxu0 0.0
        %4879 = vmatpush1.msra.mxu0 0.0
        %4880 = vmatprep.subr.mxu0 0.0
        %4881 = vmatpush1.msra.mxu0 0.0
        %4882 = vmatprep.subr.mxu0 0.0
        %4883 = vmatpush1.msra.mxu0 0.0
        %4884 = vmatprep.subr.mxu0 0.0
        %4885 = vmatpush1.msra.mxu0 0.0
        %4886 = vmatprep.subr.mxu0 0.0
        %4887 = vmatpush1.msra.mxu0 0.0
        %4888 = vmatprep.subr.mxu0 0.0
        %4889 = vmatpush1.msra.mxu0 0.0
        %4890 = vmatprep.subr.mxu0 0.0
        %4891 = vmatpush1.msra.mxu0 0.0
        %4892 = vmatprep.subr.mxu0 0.0
        %4893 = vmatpush1.msra.mxu0 0.0
        %4894 = vmatprep.subr.mxu0 0.0
        %4895 = vmatpush1.msra.mxu0 0.0
        %4896 = vmatprep.subr.mxu0 0.0
        %4897 = vmatpush1.msra.mxu0 0.0
        %4898 = vmatprep.subr.mxu0 0.0
        %4899 = vmatpush1.msra.mxu0 0.0
        %4900 = vmatprep.subr.mxu0 0.0
        %4901 = vmatpush1.msra.mxu0 0.0
        %4902 = vmatprep.subr.mxu0 0.0
        %4903 = vmatpush1.msra.mxu0 0.0
        %4904 = vmatprep.subr.mxu0 0.0
        %4905 = vmatpush1.msra.mxu0 0.0
        %4906 = vmatprep.mubr.f32.mxu0 0.0
        %4907 = vmatmul.mubr.f32.gmra.mrb[0].mxu0 %v4822
        %v4908 = vpop.f32.mrb[0].mxu0
        %v4909 = vadd.f32 %v4841, %v4908
        %v4910 = vpop.f32.mrb[0].mxu0
        %4911 = vdwg.mxu0
        %v4912 = vxor.u32 %v4909, 2147483648
        %v4913 = vmul.f32 %v4912, 1.442695
        %v4914 = vpow.pop %v4913
        %v4915 = vadd.f32 %v4914, 1.0
        %v4916 = vrcp.pop %v4915
        %v4917 = vmul.f32 1.0, %v4916
        %v4918 = vld [vmem:[%s298] sm:$0xff]
        %v4919 = vld [vmem:[%s298 + $0x8] sm:$0xff]
        %v4920 = vld [vmem:[%s298 + $0x10] sm:$0xff]
        %v4921 = vld [vmem:[%s298 + $0x18] sm:$0xff]
        %v4922 = vld [vmem:[%s298 + $0x20] sm:$0xff]
        %v4923 = vld [vmem:[%s298 + $0x28] sm:$0xff]
        %v4924 = vld [vmem:[%s298 + $0x30] sm:$0xff]
        %v4925 = vld [vmem:[%s298 + $0x38] sm:$0xff]
        %v4926 = vld [vmem:[%s298 + $0x40] sm:$0xff]
        %v4927 = vld [vmem:[%s298 + $0x48] sm:$0xff]
        %v4928 = vld [vmem:[%s298 + $0x50] sm:$0xff]
        %v4929 = vld [vmem:[%s298 + $0x58] sm:$0xff]
        %v4930 = vld [vmem:[%s298 + $0x60] sm:$0xff]
        %v4931 = vld [vmem:[%s298 + $0x68] sm:$0xff]
        %v4932 = vld [vmem:[%s298 + $0x70] sm:$0xff]
        %v4933 = vld [vmem:[%s298 + $0x78] sm:$0xff]
        %v4934 = vld [vmem:[%s298 + $0x80] sm:$0xff]
        %v4935 = vld [vmem:[%s298 + $0x88] sm:$0xff]
        %v4936 = vld [vmem:[%s298 + $0x90] sm:$0xff]
        %v4937 = vld [vmem:[%s298 + $0x98] sm:$0xff]
        %v4938 = vld [vmem:[%s298 + $0xa0] sm:$0xff]
        %v4939 = vld [vmem:[%s298 + $0xa8] sm:$0xff]
        %v4940 = vld [vmem:[%s298 + $0xb0] sm:$0xff]
        %v4941 = vld [vmem:[%s298 + $0xb8] sm:$0xff]
        %v4942 = vld [vmem:[%s298 + $0xc0] sm:$0xff]
        %v4943 = vld [vmem:[%s298 + $0xc8] sm:$0xff]
        %v4944 = vld [vmem:[%s298 + $0xd0] sm:$0xff]
        %v4945 = vld [vmem:[%s298 + $0xd8] sm:$0xff]
        %v4946 = vld [vmem:[%s298 + $0xe0] sm:$0xff]
        %v4947 = vld [vmem:[%s298 + $0xe8] sm:$0xff]
        %v4948 = vld [vmem:[%s298 + $0xf0] sm:$0xff]
        %v4949 = vld [vmem:[%s298 + $0xf8] sm:$0xff]
        %v4950 = vadd.f32 %v4917, 1.0
        %v4951 = vlaneseq
        %v4952 = vshrl.u32 %v4951, 7
        %v4953 = vsub.s32 0, %v4952
        %v4954 = vrot.slane %v4950, %v4953
        %v4955 = vmul.f32 %v4918, %v4954
        %v4956 = vmul.f32 %v4919, %v4954
        %v4957 = vmul.f32 %v4920, %v4954
        %v4958 = vmul.f32 %v4921, %v4954
        %v4959 = vmul.f32 %v4922, %v4954
        %v4960 = vmul.f32 %v4923, %v4954
        %v4961 = vmul.f32 %v4924, %v4954
        %v4962 = vmul.f32 %v4925, %v4954
        %v4963 = vmul.f32 %v4926, %v4954
        %v4964 = vmul.f32 %v4927, %v4954
        %v4965 = vmul.f32 %v4928, %v4954
        %v4966 = vmul.f32 %v4929, %v4954
        %v4967 = vmul.f32 %v4930, %v4954
        %v4968 = vmul.f32 %v4931, %v4954
        %v4969 = vmul.f32 %v4932, %v4954
        %v4970 = vmul.f32 %v4933, %v4954
        %v4971 = vmul.f32 %v4934, %v4954
        %v4972 = vmul.f32 %v4935, %v4954
        %v4973 = vmul.f32 %v4936, %v4954
        %v4974 = vmul.f32 %v4937, %v4954
        %v4975 = vmul.f32 %v4938, %v4954
        %v4976 = vmul.f32 %v4939, %v4954
        %v4977 = vmul.f32 %v4940, %v4954
        %v4978 = vmul.f32 %v4941, %v4954
        %v4979 = vmul.f32 %v4942, %v4954
        %v4980 = vmul.f32 %v4943, %v4954
        %v4981 = vmul.f32 %v4944, %v4954
        %v4982 = vmul.f32 %v4945, %v4954
        %v4983 = vmul.f32 %v4946, %v4954
        %v4984 = vmul.f32 %v4947, %v4954
        %v4985 = vmul.f32 %v4948, %v4954
        %v4986 = vmul.f32 %v4949, %v4954
        %4987 = vst [vmem:[%s298] sm:$0xff] %v4955
        %4988 = vst [vmem:[%s298 + $0x8] sm:$0xff] %v4956
        %4989 = vst [vmem:[%s298 + $0x10] sm:$0xff] %v4957
        %4990 = vst [vmem:[%s298 + $0x18] sm:$0xff] %v4958
        %4991 = vst [vmem:[%s298 + $0x20] sm:$0xff] %v4959
        %4992 = vst [vmem:[%s298 + $0x28] sm:$0xff] %v4960
        %4993 = vst [vmem:[%s298 + $0x30] sm:$0xff] %v4961
        %4994 = vst [vmem:[%s298 + $0x38] sm:$0xff] %v4962
        %4995 = vst [vmem:[%s298 + $0x40] sm:$0xff] %v4963
        %4996 = vst [vmem:[%s298 + $0x48] sm:$0xff] %v4964
        %4997 = vst [vmem:[%s298 + $0x50] sm:$0xff] %v4965
        %4998 = vst [vmem:[%s298 + $0x58] sm:$0xff] %v4966
        %4999 = vst [vmem:[%s298 + $0x60] sm:$0xff] %v4967
        %5000 = vst [vmem:[%s298 + $0x68] sm:$0xff] %v4968
        %5001 = vst [vmem:[%s298 + $0x70] sm:$0xff] %v4969
        %5002 = vst [vmem:[%s298 + $0x78] sm:$0xff] %v4970
        %5003 = vst [vmem:[%s298 + $0x80] sm:$0xff] %v4971
        %5004 = vst [vmem:[%s298 + $0x88] sm:$0xff] %v4972
        %5005 = vst [vmem:[%s298 + $0x90] sm:$0xff] %v4973
        %5006 = vst [vmem:[%s298 + $0x98] sm:$0xff] %v4974
        %5007 = vst [vmem:[%s298 + $0xa0] sm:$0xff] %v4975
        %5008 = vst [vmem:[%s298 + $0xa8] sm:$0xff] %v4976
        %5009 = vst [vmem:[%s298 + $0xb0] sm:$0xff] %v4977
        %5010 = vst [vmem:[%s298 + $0xb8] sm:$0xff] %v4978
        %5011 = vst [vmem:[%s298 + $0xc0] sm:$0xff] %v4979
        %5012 = vst [vmem:[%s298 + $0xc8] sm:$0xff] %v4980
        %5013 = vst [vmem:[%s298 + $0xd0] sm:$0xff] %v4981
        %5014 = vst [vmem:[%s298 + $0xd8] sm:$0xff] %v4982
        %5015 = vst [vmem:[%s298 + $0xe0] sm:$0xff] %v4983
        %5016 = vst [vmem:[%s298 + $0xe8] sm:$0xff] %v4984
        %5017 = vst [vmem:[%s298 + $0xf0] sm:$0xff] %v4985
        %5018 = vst [vmem:[%s298 + $0xf8] sm:$0xff] %v4986
        %s5019 = sand.u32 %s203, 1
        %s5020 = scalar_lea.sflag [#allocation4], %s5019
        %s5021 = sand.u32 %s203, 1
        %s5022 = smul.addr %s5021, 256
        %s5023 = scalar_lea.vmem [#allocation3], %s5022
        // Predicated region
        $region53: #{tpu_custom_call.1} parent=51 // pred_check
          %p5024 = pneg %p213
        $region54: #{tpu_custom_call.1} parent=51 // pred_check_branch
          %5026 = sbr.rel (%p5024) target = $region56
        $region55: #{tpu_custom_call.1} parent=51 // pred_region
          %s5028 = ssub.s32 4096, 4096
          %5029 = vsyncadd %s5020, %s5028
          %s5030 = smul.addr %s22, 32
          %s5031 = smul.addr %s5030, 128
          %s5032 = scalar_lea.hbm %s8, %s5031
          %s5033 = sshll.u32 %s5023, 4
          %s5034 = int_to_ptr.vmem [resolvable:$true] %s5033
          %5039 = dma.vmem_to_hbm [thread:$0]  %s5034, 4096, %s5032, %s5020, 128, 128, 8
        $region56: #{tpu_custom_call.1} parent=51 // pred_fallthru
          _
      $region52: #{tpu_custom_call.1} parent=5 // pred_fallthru
        _
      %p5040 = scmp.le.s32.totalorder 2, %s17
      // Predicated region
      $region57: #{tpu_custom_call.1} parent=5 // pred_check
        %p5041 = pneg %p5040
      $region58: #{tpu_custom_call.1} parent=5 // pred_check_branch
        %5043 = sbr.rel (%p5041) target = $region60
      $region59: #{tpu_custom_call.1} parent=5 // pred_region
        %s5044 = ssub.s32 %s17, 2
        // Predicated region
        $region61: #{tpu_custom_call.1} parent=59 // pred_check
          %p5045 = pneg %p219
        $region62: #{tpu_custom_call.1} parent=59 // pred_check_branch
          %5047 = sbr.rel (%p5045) target = $region64
        $region63: #{tpu_custom_call.1} parent=59 // pred_region
          %s5048 = sand.u32 %s204, 1
          %s5049 = scalar_lea.sflag [#allocation4], %s5048
          %s5050 = sand.u32 %s204, 1
          %s5051 = smul.addr %s5050, 256
          %s5052 = scalar_lea.vmem [#allocation3], %s5051
          %5053 = dma.done %s5049, 4096
        $region64: #{tpu_custom_call.1} parent=59 // pred_fallthru
          _
      $region60: #{tpu_custom_call.1} parent=5 // pred_fallthru
        _
    $region6: #{tpu_custom_call.1} parent=1 // loop_footer
      %s21 = sadd.s32 1, %s17
    $region7: #{tpu_custom_call.1} parent=1 // loop_footer_branch
      %16 = sbr.rel target = $region3
    $region8: #{tpu_custom_call.1} parent=1 // loop_exit
      _
    %5054 = vsyncpa [#allocation4], 1
    %s5055 = scalar_lea.sflag [#allocation4], 1
    %5056 = vsyncpa %s5055, 1

</llo_original>
